<compile_context>
chip_gen: v7x
topology: tpu7x:2x2x1
jax: 0.10.0
libtpu: 0.0.40
codegen_flags: <defaults>
</compile_context>

<pallas_src>
import jax
import jax.numpy as jnp
import numpy as np
from jax.experimental import pallas as pl
from jax.experimental.pallas import tpu as pltpu

LANE = 128       # vreg lane width  -> last block dim should be a multiple
ROW_ALIGN = 16   # multiple of 8 (f32 sublane) and 16 (bf16 sublane packing)


def _round_up(n, m):
    return int(-(-n // m) * m)


def _tpu_generation():
    try:
        kind = jax.devices()[0].device_kind.lower()
    except Exception:
        return "unknown"
    if "v7" in kind:
        return "v7x"
    if "v6" in kind:
        return "v6e"
    if "v5" in kind:
        return "v5e"
    return "unknown"


def mlp_kernel(x_ref, w1_ref, b1_ref, w2_ref, b2_ref, w3_ref, b3_ref,
               wc_ref, bc_ref, out_ref, emb_ref):
    """Fused MLP: three (matmul + bias + tanh) layers and a final classifier."""
    cdt = w1_ref.dtype                      # MXU operand dtype (bf16)
    x = x_ref[...]
    if x.dtype != cdt:                      # no-op when the producer emits bf16
        x = x.astype(cdt)
    h1 = jnp.tanh(
        jnp.dot(x, w1_ref[...], preferred_element_type=jnp.float32) + b1_ref[...])
    h2 = jnp.tanh(
        jnp.dot(h1.astype(cdt), w2_ref[...], preferred_element_type=jnp.float32)
        + b2_ref[...])
    h3 = jnp.tanh(
        jnp.dot(h2.astype(cdt), w3_ref[...], preferred_element_type=jnp.float32)
        + b3_ref[...])
    logits = (jnp.dot(h3.astype(cdt), wc_ref[...],
                      preferred_element_type=jnp.float32) + bc_ref[...])
    emb_ref[...] = h3.astype(emb_ref.dtype)
    out_ref[...] = logits.astype(out_ref.dtype)


def mlp_forward(x, params, *, weight_dtype=jnp.bfloat16, emb_dtype=jnp.bfloat16):
    """Runs the fused MLP Pallas kernel.

    x: (B, in_features), ideally bf16 (producer-emitted) — f32 also accepted.
    params: dict with w1,b1,w2,b2,w3,b3,wc,bc; weights stored (in, out),
            biases (1, out) (i.e. transposed vs. PyTorch).
    Returns (logits (B, num_classes) f32, x3 (B, hidden3) emb_dtype).
    """
    B, in_f = x.shape
    h1d = params["w1"].shape[1]
    h2d = params["w2"].shape[1]
    h3d = params["w3"].shape[1]
    nc = params["wc"].shape[1]

    # Lane-pad every feature dimension to a multiple of 128.
    in_p = _round_up(in_f, LANE)
    h1p = _round_up(h1d, LANE)
    h2p = _round_up(h2d, LANE)
    h3p = _round_up(h3d, LANE)
    ncp = _round_up(nc, LANE)

    def pad2(a, rows, cols, dtype):
        a = jnp.pad(a, ((0, rows - a.shape[0]), (0, cols - a.shape[1])))
        return a.astype(dtype)

    w1 = pad2(params["w1"], in_p, h1p, weight_dtype)
    w2 = pad2(params["w2"], h1p, h2p, weight_dtype)
    w3 = pad2(params["w3"], h2p, h3p, weight_dtype)
    wc = pad2(params["wc"], h3p, ncp, weight_dtype)
    b1 = pad2(params["b1"], 1, h1p, jnp.float32)
    b2 = pad2(params["b2"], 1, h2p, jnp.float32)
    b3 = pad2(params["b3"], 1, h3p, jnp.float32)
    bc = pad2(params["bc"], 1, ncp, jnp.float32)

    # x: feature padding only if in_features is not lane-aligned (never for
    # the default 2048); NO batch padding — the ragged last block is clipped.
    xp = x if in_p == in_f else jnp.pad(x, ((0, 0), (0, in_p - in_f)))

    # Per-generation batch tile / scoped-VMEM limit.
    gen = _tpu_generation()
    if gen == "v6e":
        bm_max, vmem_limit = 1024, 64 * 1024 * 1024
    elif gen == "v7x":
        bm_max, vmem_limit = 512, 48 * 1024 * 1024
    else:  # v5e (16 MiB default scoped VMEM) and unknown: conservative tile.
        bm_max, vmem_limit = 512, 64 * 1024 * 1024

    if gen == "v7x" and B > ROW_ALIGN:
        # Balance the grid across the 2 TensorCores: even number of ~equal
        # steps (avoid 1-step grids and 3-step 2:1 imbalance).
        soft_cap = bm_max + 64
        n_steps = 2 * max(1, -(-B // (2 * soft_cap)))
        bm = _round_up(-(-B // n_steps), ROW_ALIGN)
    elif B <= bm_max:
        bm = max(_round_up(B, ROW_ALIGN), ROW_ALIGN)   # single step (latency)
    else:
        bm = bm_max
    grid = (pl.cdiv(B, bm),)
    rows = grid[0] * bm

    wbytes = jnp.dtype(weight_dtype).itemsize
    xbytes = jnp.dtype(xp.dtype).itemsize
    ebytes = jnp.dtype(emb_dtype).itemsize
    weight_elems = in_p * h1p + h1p * h2p + h2p * h3p + h3p * ncp
    cost = pl.CostEstimate(
        flops=2 * rows * weight_elems,
        transcendentals=rows * (h1p + h2p + h3p),
        bytes_accessed=(xbytes * rows * in_p                 # x
                        + wbytes * weight_elems              # weights
                        + 4 * (h1p + h2p + h3p + ncp)        # biases
                        + 4 * rows * ncp                     # logits
                        + ebytes * rows * h3p),              # embedding
    )

    def wspec(arr):
        # Constant block index -> resident across the whole grid (no re-DMA).
        shape = arr.shape
        return pl.BlockSpec(shape, lambda i, _s=shape: (0,) * len(_s))

    grid_spec = pltpu.PrefetchScalarGridSpec(
        num_scalar_prefetch=0,
        grid=grid,
        in_specs=[
            pl.BlockSpec((bm, in_p), lambda i: (i, 0)),   # x tile
            wspec(w1), wspec(b1),
            wspec(w2), wspec(b2),
            wspec(w3), wspec(b3),
            wspec(wc), wspec(bc),
        ],
        out_specs=[
            pl.BlockSpec((bm, ncp), lambda i: (i, 0)),    # logits tile
            pl.BlockSpec((bm, h3p), lambda i: (i, 0)),    # embedding tile
        ],
    )

    logits, emb = pl.pallas_call(
        mlp_kernel,
        out_shape=(
            jax.ShapeDtypeStruct((B, ncp), jnp.float32),
            jax.ShapeDtypeStruct((B, h3p), emb_dtype),
        ),
        grid_spec=grid_spec,
        compiler_params=pltpu.CompilerParams(
            dimension_semantics=("parallel",),
            vmem_limit_bytes=vmem_limit),
        cost_estimate=cost,
    )(xp, w1, b1, w2, b2, w3, b3, wc, bc)

    # Strip lane (feature) padding only — rows are already exactly B.
    return logits[:, :nc], emb[:, :h3d]


def init_params(key, in_features, layer_sizes, num_classes):
    """Deterministic init mimicking nn.Linear's U(-1/sqrt(fan_in), 1/sqrt(fan_in))."""
    sizes = [in_features] + list(layer_sizes) + [num_classes]
    names = ["1", "2", "3", "c"]
    params = {}
    for n, (fin, fout) in zip(names, zip(sizes[:-1], sizes[1:])):
        key, kw, kb = jax.random.split(key, 3)
        bound = 1.0 / np.sqrt(fin)
        params[f"w{n}"] = jax.random.uniform(
            kw, (fin, fout), jnp.float32, -bound, bound)
        params[f"b{n}"] = jax.random.uniform(
            kb, (1, fout), jnp.float32, -bound, bound)
    return params


def mlp_reference(x, p, compute_dtype=jnp.bfloat16):
    """Pure-JAX reference; compute_dtype emulates the kernel's MXU operand dtype."""
    def lin(a, w, b):
        return jnp.dot(a.astype(compute_dtype), w.astype(compute_dtype),
                       preferred_element_type=jnp.float32) + b
    h1 = jnp.tanh(lin(x, p["w1"], p["b1"]))
    h2 = jnp.tanh(lin(h1, p["w2"], p["b2"]))
    h3 = jnp.tanh(lin(h2, p["w3"], p["b3"]))
    return lin(h3, p["wc"], p["bc"]), h3


if __name__ == "__main__":
    key = jax.random.PRNGKey(0)
    k_param, k_x1, k_x2 = jax.random.split(key, 3)

    in_features = 2048
    layer_sizes = [300, 300, 300]
    num_classes = 10
    params = init_params(k_param, in_features, layer_sizes, num_classes)

    # Case 1: tiny batch (latency regime) -> single (or 2-step on v7x) grid.
    batch = 2
    x = jax.random.normal(k_x1, (batch, in_features), jnp.bfloat16)  # producer emits bf16
    logits, emb = mlp_forward(x, params)
    jax.block_until_ready((logits, emb))

    ref_logits, ref_emb = mlp_reference(x, params, jnp.bfloat16)
    np.testing.assert_allclose(np.asarray(logits), np.asarray(ref_logits),
                               rtol=2e-3, atol=2e-3)
    np.testing.assert_allclose(np.asarray(emb.astype(jnp.float32)),
                               np.asarray(ref_emb),
                               rtol=1e-2, atol=1e-2)   # bf16 emb quantization
    assert logits.shape == (batch, num_classes)
    assert emb.shape == (batch, layer_sizes[2])

    # Case 2: larger, non-aligned batch -> multi-step ragged grid.
    batch2 = 1030
    x2 = jax.random.normal(k_x2, (batch2, in_features), jnp.bfloat16)
    logits2, emb2 = mlp_forward(x2, params)
    jax.block_until_ready((logits2, emb2))
    ref_logits2, ref_emb2 = mlp_reference(x2, params, jnp.bfloat16)
    np.testing.assert_allclose(np.asarray(logits2), np.asarray(ref_logits2),
                               rtol=2e-3, atol=2e-3)
    np.testing.assert_allclose(np.asarray(emb2.astype(jnp.float32)),
                               np.asarray(ref_emb2),
                               rtol=1e-2, atol=1e-2)
    assert logits2.shape == (batch2, num_classes)
    assert emb2.shape == (batch2, layer_sizes[2])

    print("KERNEL_OK")
</pallas_src>

<mosaic_0001>
module attributes {stable_mosaic.version = 11 : i64} {
  func.func @mlp_kernel(%arg0: i32, %arg1: memref<16x2048xbf16, #tpu.memory_space<vmem>>, %arg2: memref<2048x384xbf16, #tpu.memory_space<vmem>>, %arg3: memref<1x384xf32, #tpu.memory_space<vmem>>, %arg4: memref<384x384xbf16, #tpu.memory_space<vmem>>, %arg5: memref<1x384xf32, #tpu.memory_space<vmem>>, %arg6: memref<384x384xbf16, #tpu.memory_space<vmem>>, %arg7: memref<1x384xf32, #tpu.memory_space<vmem>>, %arg8: memref<384x128xbf16, #tpu.memory_space<vmem>>, %arg9: memref<1x128xf32, #tpu.memory_space<vmem>>, %arg10: memref<16x128xf32, #tpu.memory_space<vmem>>, %arg11: memref<16x384xbf16, #tpu.memory_space<vmem>>) attributes {dimension_semantics = [#tpu.dimension_semantics<parallel>], iteration_bounds = array<i64: 1>, scalar_prefetch = 0 : i64, scratch_operands = 0 : i64, tpu.core_type = #tpu.core_type<tc>, window_params = [{transform_indices = @transform_0, window_bounds = array<i64: 16, 2048>}, {pipeline_mode = #tpu.pipeline_mode<synchronous>, transform_indices = @transform_1, window_bounds = array<i64: 2048, 384>}, {pipeline_mode = #tpu.pipeline_mode<synchronous>, transform_indices = @transform_2, window_bounds = array<i64: 1, 384>}, {pipeline_mode = #tpu.pipeline_mode<synchronous>, transform_indices = @transform_3, window_bounds = array<i64: 384, 384>}, {pipeline_mode = #tpu.pipeline_mode<synchronous>, transform_indices = @transform_4, window_bounds = array<i64: 1, 384>}, {pipeline_mode = #tpu.pipeline_mode<synchronous>, transform_indices = @transform_5, window_bounds = array<i64: 384, 384>}, {pipeline_mode = #tpu.pipeline_mode<synchronous>, transform_indices = @transform_6, window_bounds = array<i64: 1, 384>}, {pipeline_mode = #tpu.pipeline_mode<synchronous>, transform_indices = @transform_7, window_bounds = array<i64: 384, 128>}, {pipeline_mode = #tpu.pipeline_mode<synchronous>, transform_indices = @transform_8, window_bounds = array<i64: 1, 128>}, {transform_indices = @transform_9, window_bounds = array<i64: 16, 128>}, {transform_indices = @transform_10, window_bounds = array<i64: 16, 384>}]} {
    %c0 = arith.constant 0 : index
    %c0_0 = arith.constant 0 : index
    %0 = vector.load %arg1[%c0, %c0_0] : memref<16x2048xbf16, #tpu.memory_space<vmem>>, vector<16x2048xbf16>
    %c0_1 = arith.constant 0 : index
    %c0_2 = arith.constant 0 : index
    %1 = vector.load %arg2[%c0_1, %c0_2] : memref<2048x384xbf16, #tpu.memory_space<vmem>>, vector<2048x384xbf16>
    %cst = arith.constant dense<0.000000e+00> : vector<16x384xf32>
    %2 = tpu.matmul %0, %1, %cst {dimension_numbers = #tpu.dot_dimension_numbers<[1], [0], [0], [1], [0, 0, 1, 1], [], []>} : vector<16x2048xbf16>, vector<2048x384xbf16>, vector<16x384xf32> -> vector<16x384xf32>
    %c0_3 = arith.constant 0 : index
    %c0_4 = arith.constant 0 : index
    %3 = vector.load %arg3[%c0_3, %c0_4] : memref<1x384xf32, #tpu.memory_space<vmem>>, vector<1x384xf32>
    %4 = vector.broadcast %3 : vector<1x384xf32> to vector<16x384xf32>
    %5 = arith.addf %2, %4 : vector<16x384xf32>
    %6 = math.tanh %5 : vector<16x384xf32>
    %7 = arith.truncf %6 : vector<16x384xf32> to vector<16x384xbf16>
    %c0_5 = arith.constant 0 : index
    %c0_6 = arith.constant 0 : index
    %8 = vector.load %arg4[%c0_5, %c0_6] : memref<384x384xbf16, #tpu.memory_space<vmem>>, vector<384x384xbf16>
    %cst_7 = arith.constant dense<0.000000e+00> : vector<16x384xf32>
    %9 = tpu.matmul %7, %8, %cst_7 {dimension_numbers = #tpu.dot_dimension_numbers<[1], [0], [0], [1], [0, 0, 1, 1], [], []>} : vector<16x384xbf16>, vector<384x384xbf16>, vector<16x384xf32> -> vector<16x384xf32>
    %c0_8 = arith.constant 0 : index
    %c0_9 = arith.constant 0 : index
    %10 = vector.load %arg5[%c0_8, %c0_9] : memref<1x384xf32, #tpu.memory_space<vmem>>, vector<1x384xf32>
    %11 = vector.broadcast %10 : vector<1x384xf32> to vector<16x384xf32>
    %12 = arith.addf %9, %11 : vector<16x384xf32>
    %13 = math.tanh %12 : vector<16x384xf32>
    %14 = arith.truncf %13 : vector<16x384xf32> to vector<16x384xbf16>
    %c0_10 = arith.constant 0 : index
    %c0_11 = arith.constant 0 : index
    %15 = vector.load %arg6[%c0_10, %c0_11] : memref<384x384xbf16, #tpu.memory_space<vmem>>, vector<384x384xbf16>
    %cst_12 = arith.constant dense<0.000000e+00> : vector<16x384xf32>
    %16 = tpu.matmul %14, %15, %cst_12 {dimension_numbers = #tpu.dot_dimension_numbers<[1], [0], [0], [1], [0, 0, 1, 1], [], []>} : vector<16x384xbf16>, vector<384x384xbf16>, vector<16x384xf32> -> vector<16x384xf32>
    %c0_13 = arith.constant 0 : index
    %c0_14 = arith.constant 0 : index
    %17 = vector.load %arg7[%c0_13, %c0_14] : memref<1x384xf32, #tpu.memory_space<vmem>>, vector<1x384xf32>
    %18 = vector.broadcast %17 : vector<1x384xf32> to vector<16x384xf32>
    %19 = arith.addf %16, %18 : vector<16x384xf32>
    %20 = math.tanh %19 : vector<16x384xf32>
    %21 = arith.truncf %20 : vector<16x384xf32> to vector<16x384xbf16>
    %c0_15 = arith.constant 0 : index
    %c0_16 = arith.constant 0 : index
    %22 = vector.load %arg8[%c0_15, %c0_16] : memref<384x128xbf16, #tpu.memory_space<vmem>>, vector<384x128xbf16>
    %cst_17 = arith.constant dense<0.000000e+00> : vector<16x128xf32>
    %23 = tpu.matmul %21, %22, %cst_17 {dimension_numbers = #tpu.dot_dimension_numbers<[1], [0], [0], [1], [0, 0, 1, 1], [], []>} : vector<16x384xbf16>, vector<384x128xbf16>, vector<16x128xf32> -> vector<16x128xf32>
    %c0_18 = arith.constant 0 : index
    %c0_19 = arith.constant 0 : index
    %24 = vector.load %arg9[%c0_18, %c0_19] : memref<1x128xf32, #tpu.memory_space<vmem>>, vector<1x128xf32>
    %25 = vector.broadcast %24 : vector<1x128xf32> to vector<16x128xf32>
    %26 = arith.addf %23, %25 : vector<16x128xf32>
    %27 = arith.truncf %20 : vector<16x384xf32> to vector<16x384xbf16>
    %c0_20 = arith.constant 0 : index
    %c0_21 = arith.constant 0 : index
    %28 = vector.load %arg11[%c0_20, %c0_21] : memref<16x384xbf16, #tpu.memory_space<vmem>>, vector<16x384xbf16>
    tpu.vector_store %arg11[%c0_20, %c0_21], %27 {strides = array<i32>} : memref<16x384xbf16, #tpu.memory_space<vmem>>, vector<16x384xbf16>,
    %c0_22 = arith.constant 0 : index
    %c0_23 = arith.constant 0 : index
    %29 = vector.load %arg10[%c0_22, %c0_23] : memref<16x128xf32, #tpu.memory_space<vmem>>, vector<16x128xf32>
    tpu.vector_store %arg10[%c0_22, %c0_23], %26 {strides = array<i32>} : memref<16x128xf32, #tpu.memory_space<vmem>>, vector<16x128xf32>,
    return
  }
  func.func @transform_0(%arg0: i32) -> (i32, i32) {
    %c0_i32 = arith.constant 0 : i32
    %c0_i32_0 = arith.constant 0 : i32
    return %arg0, %c0_i32 : i32, i32
  }
  func.func @transform_1(%arg0: i32) -> (i32, i32) {
    %c0_i32 = arith.constant 0 : i32
    %c0_i32_0 = arith.constant 0 : i32
    %c0_i32_1 = arith.constant 0 : i32
    return %c0_i32, %c0_i32_0 : i32, i32
  }
  func.func @transform_2(%arg0: i32) -> (i32, i32) {
    %c0_i32 = arith.constant 0 : i32
    %c0_i32_0 = arith.constant 0 : i32
    %c0_i32_1 = arith.constant 0 : i32
    return %c0_i32, %c0_i32_0 : i32, i32
  }
  func.func @transform_3(%arg0: i32) -> (i32, i32) {
    %c0_i32 = arith.constant 0 : i32
    %c0_i32_0 = arith.constant 0 : i32
    %c0_i32_1 = arith.constant 0 : i32
    return %c0_i32, %c0_i32_0 : i32, i32
  }
  func.func @transform_4(%arg0: i32) -> (i32, i32) {
    %c0_i32 = arith.constant 0 : i32
    %c0_i32_0 = arith.constant 0 : i32
    %c0_i32_1 = arith.constant 0 : i32
    return %c0_i32, %c0_i32_0 : i32, i32
  }
  func.func @transform_5(%arg0: i32) -> (i32, i32) {
    %c0_i32 = arith.constant 0 : i32
    %c0_i32_0 = arith.constant 0 : i32
    %c0_i32_1 = arith.constant 0 : i32
    return %c0_i32, %c0_i32_0 : i32, i32
  }
  func.func @transform_6(%arg0: i32) -> (i32, i32) {
    %c0_i32 = arith.constant 0 : i32
    %c0_i32_0 = arith.constant 0 : i32
    %c0_i32_1 = arith.constant 0 : i32
    return %c0_i32, %c0_i32_0 : i32, i32
  }
  func.func @transform_7(%arg0: i32) -> (i32, i32) {
    %c0_i32 = arith.constant 0 : i32
    %c0_i32_0 = arith.constant 0 : i32
    %c0_i32_1 = arith.constant 0 : i32
    return %c0_i32, %c0_i32_0 : i32, i32
  }
  func.func @transform_8(%arg0: i32) -> (i32, i32) {
    %c0_i32 = arith.constant 0 : i32
    %c0_i32_0 = arith.constant 0 : i32
    %c0_i32_1 = arith.constant 0 : i32
    return %c0_i32, %c0_i32_0 : i32, i32
  }
  func.func @transform_9(%arg0: i32) -> (i32, i32) {
    %c0_i32 = arith.constant 0 : i32
    %c0_i32_0 = arith.constant 0 : i32
    return %arg0, %c0_i32 : i32, i32
  }
  func.func @transform_10(%arg0: i32) -> (i32, i32) {
    %c0_i32 = arith.constant 0 : i32
    %c0_i32_0 = arith.constant 0 : i32
    return %arg0, %c0_i32 : i32, i32
  }
}

</mosaic_0001>

<llo_original>
// kernel: tpu_custom_call.1
$region0: #{tpu_custom_call.1}
  #allocation0 [shape = 'u32[]', space=smem, size = 0x4, offset = 0x4, fixed_abs, tag = 'smem constant byte address 0x4 - core index']
  #allocation1 [shape = 'u32[144,128]{1,0:T(1,128)}', space=vmem, size = 0x12000, scoped, tag = 'internal scratch']
  %s0 = inlined_call_operand.hbm [shape: bf16[2,2048], index: 0, kind: input, shape index: {}]
  %s1 = inlined_call_operand.hbm [shape: bf16[2048,384], index: 1, kind: input, shape index: {}]
  %s2 = inlined_call_operand.hbm [shape: f32[1,384], index: 2, kind: input, shape index: {}]
  %s3 = inlined_call_operand.hbm [shape: bf16[384,384], index: 3, kind: input, shape index: {}]
  %s4 = inlined_call_operand.hbm [shape: f32[1,384], index: 4, kind: input, shape index: {}]
  %s5 = inlined_call_operand.hbm [shape: bf16[384,384], index: 5, kind: input, shape index: {}]
  %s6 = inlined_call_operand.hbm [shape: f32[1,384], index: 6, kind: input, shape index: {}]
  %s7 = inlined_call_operand.hbm [shape: bf16[384,128], index: 7, kind: input, shape index: {}]
  %s8 = inlined_call_operand.hbm [shape: f32[1,128], index: 8, kind: input, shape index: {}]
  %s9 = inlined_call_operand.hbm [shape: f32[2,128], index: 9, kind: output, shape index: {0}]
  %s10 = inlined_call_operand.hbm [shape: bf16[2,384], index: 10, kind: output, shape index: {1}]
  %11 = xla_tuple %s9, %s10
  %s12 = sld [smem:[#allocation0]]
  $region90: #{tpu_custom_call.1} parent=0
    _
  %s14 = ssub.s32 1, %s12
  %s15 = scalar_select 0, %s14, %s12
  $region1: #{tpu_custom_call.1} parent=0
    #allocation2 [shape = 'u8[65536]{0}', space=vmem, size = 0x10000, scoped, tag = 'input window, operand 0, single buffered']
    #allocation3 [shape = 's32[1]{0}', space=sflag, size = 0x4, scoped, tag = 'scoped memory for tpu_custom_call.1']
    #allocation4 [shape = 's32[1]{0}', space=sflag, size = 0x4, scoped, tag = 'scoped memory for tpu_custom_call.1']
    #allocation5 [shape = 'u8[1572864]{0}', space=vmem, size = 0x180000, scoped, tag = 'input window, operand 1, single buffered']
    #allocation6 [shape = 's32[1]{0}', space=sflag, size = 0x4, scoped, tag = 'scoped memory for tpu_custom_call.1']
    #allocation7 [shape = 'u8[1536]{0}', space=vmem, size = 0x800, scoped, tag = 'input window, operand 2, single buffered']
    #allocation8 [shape = 'u8[294912]{0}', space=vmem, size = 0x48000, scoped, tag = 'input window, operand 3, single buffered']
    #allocation9 [shape = 's32[1]{0}', space=sflag, size = 0x4, scoped, tag = 'scoped memory for tpu_custom_call.1']
    #allocation10 [shape = 'u8[1536]{0}', space=vmem, size = 0x800, scoped, tag = 'input window, operand 4, single buffered']
    #allocation11 [shape = 'u8[294912]{0}', space=vmem, size = 0x48000, scoped, tag = 'input window, operand 5, single buffered']
    #allocation12 [shape = 's32[1]{0}', space=sflag, size = 0x4, scoped, tag = 'scoped memory for tpu_custom_call.1']
    #allocation13 [shape = 'u8[1536]{0}', space=vmem, size = 0x800, scoped, tag = 'input window, operand 6, single buffered']
    #allocation14 [shape = 'u8[98304]{0}', space=vmem, size = 0x18000, scoped, tag = 'input window, operand 7, single buffered']
    #allocation15 [shape = 's32[1]{0}', space=sflag, size = 0x4, scoped, tag = 'scoped memory for tpu_custom_call.1']
    #allocation16 [shape = 'u8[512]{0}', space=vmem, size = 0x400, scoped, tag = 'input window, operand 8, single buffered']
    #allocation17 [shape = 'u8[8192]{0}', space=vmem, size = 0x2000, scoped, tag = 'output window, operand 0, single buffered']
    #allocation18 [shape = 'u8[12288]{0}', space=vmem, size = 0x3000, scoped, tag = 'output window, operand 1, single buffered']
    #allocation19 [shape = 's32[1]{0}', space=sflag, size = 0x4, scoped, tag = 'scoped memory for tpu_custom_call.1']
    %16 = vsyncpa [#allocation3], 0
    %17 = vsyncpa [#allocation6], 0
    %18 = vsyncpa [#allocation9], 0
    %19 = vsyncpa [#allocation12], 0
    %20 = vsyncpa [#allocation15], 0
    %21 = vsyncpa [#allocation4], 0
    %22 = vsyncpa [#allocation19], 0
    // Predicated region
    $region2: #{tpu_custom_call.1} parent=1 // pred_check
      _
    $region3: #{tpu_custom_call.1} parent=1 // pred_check_branch
      %24 = sbr.rel (0) target = $region5
    $region4: #{tpu_custom_call.1} parent=1 // pred_region
      %s26 = ssub.s32 2048, 256
      %27 = vsyncadd [#allocation3], %s26
      %s28 = sshll.u32 [#allocation2], 4
      %s29 = int_to_ptr.vmem [resolvable:$true] %s28
      %34 = dma.hbm_to_vmem [thread:$0]  %s0, 256, %s29, [#allocation3], 256, 256, 16
    $region5: #{tpu_custom_call.1} parent=1 // pred_fallthru
      _
    // Predicated region
    $region6: #{tpu_custom_call.1} parent=1 // pred_check
      _
    $region7: #{tpu_custom_call.1} parent=1 // pred_check_branch
      %36 = sbr.rel (0) target = $region9
    $region8: #{tpu_custom_call.1} parent=1 // pred_region
      %s38 = ssub.s32 49152, 49152
      %39 = vsyncadd [#allocation6], %s38
      %s40 = sshll.u32 [#allocation5], 4
      %s41 = int_to_ptr.vmem [resolvable:$true] %s40
      %46 = dma.hbm_to_vmem [thread:$0]  %s1, 49152, %s41, [#allocation6], 192, 192, 12
    $region9: #{tpu_custom_call.1} parent=1 // pred_fallthru
      _
    // Predicated region
    $region10: #{tpu_custom_call.1} parent=1 // pred_check
      _
    $region11: #{tpu_custom_call.1} parent=1 // pred_check_branch
      %48 = sbr.rel (0) target = $region13
    $region12: #{tpu_custom_call.1} parent=1 // pred_region
      %s50 = ssub.s32 48, 48
      %51 = vsyncadd [#allocation6], %s50
      %s53 = sshll.u32 [#allocation7], 4
      %s54 = int_to_ptr.vmem [resolvable:$true] %s53
      %56 = dma.hbm_to_vmem [thread:$0]  %s2, 48, %s54, [#allocation6]
    $region13: #{tpu_custom_call.1} parent=1 // pred_fallthru
      _
    // Predicated region
    $region14: #{tpu_custom_call.1} parent=1 // pred_check
      _
    $region15: #{tpu_custom_call.1} parent=1 // pred_check_branch
      %58 = sbr.rel (0) target = $region17
    $region16: #{tpu_custom_call.1} parent=1 // pred_region
      %s60 = ssub.s32 9216, 9216
      %61 = vsyncadd [#allocation9], %s60
      %s62 = sshll.u32 [#allocation8], 4
      %s63 = int_to_ptr.vmem [resolvable:$true] %s62
      %68 = dma.hbm_to_vmem [thread:$0]  %s3, 9216, %s63, [#allocation9], 192, 192, 12
    $region17: #{tpu_custom_call.1} parent=1 // pred_fallthru
      _
    // Predicated region
    $region18: #{tpu_custom_call.1} parent=1 // pred_check
      _
    $region19: #{tpu_custom_call.1} parent=1 // pred_check_branch
      %70 = sbr.rel (0) target = $region21
    $region20: #{tpu_custom_call.1} parent=1 // pred_region
      %s72 = ssub.s32 48, 48
      %73 = vsyncadd [#allocation9], %s72
      %s75 = sshll.u32 [#allocation10], 4
      %s76 = int_to_ptr.vmem [resolvable:$true] %s75
      %78 = dma.hbm_to_vmem [thread:$0]  %s4, 48, %s76, [#allocation9]
    $region21: #{tpu_custom_call.1} parent=1 // pred_fallthru
      _
    // Predicated region
    $region22: #{tpu_custom_call.1} parent=1 // pred_check
      _
    $region23: #{tpu_custom_call.1} parent=1 // pred_check_branch
      %80 = sbr.rel (0) target = $region25
    $region24: #{tpu_custom_call.1} parent=1 // pred_region
      %s82 = ssub.s32 9216, 9216
      %83 = vsyncadd [#allocation12], %s82
      %s84 = sshll.u32 [#allocation11], 4
      %s85 = int_to_ptr.vmem [resolvable:$true] %s84
      %90 = dma.hbm_to_vmem [thread:$0]  %s5, 9216, %s85, [#allocation12], 192, 192, 12
    $region25: #{tpu_custom_call.1} parent=1 // pred_fallthru
      _
    // Predicated region
    $region26: #{tpu_custom_call.1} parent=1 // pred_check
      _
    $region27: #{tpu_custom_call.1} parent=1 // pred_check_branch
      %92 = sbr.rel (0) target = $region29
    $region28: #{tpu_custom_call.1} parent=1 // pred_region
      %s94 = ssub.s32 48, 48
      %95 = vsyncadd [#allocation12], %s94
      %s97 = sshll.u32 [#allocation13], 4
      %s98 = int_to_ptr.vmem [resolvable:$true] %s97
      %100 = dma.hbm_to_vmem [thread:$0]  %s6, 48, %s98, [#allocation12]
    $region29: #{tpu_custom_call.1} parent=1 // pred_fallthru
      _
    // Predicated region
    $region30: #{tpu_custom_call.1} parent=1 // pred_check
      _
    $region31: #{tpu_custom_call.1} parent=1 // pred_check_branch
      %102 = sbr.rel (0) target = $region33
    $region32: #{tpu_custom_call.1} parent=1 // pred_region
      %s104 = ssub.s32 3072, 3072
      %105 = vsyncadd [#allocation15], %s104
      %s106 = sshll.u32 [#allocation14], 4
      %s107 = int_to_ptr.vmem [resolvable:$true] %s106
      %112 = dma.hbm_to_vmem [thread:$0]  %s7, 3072, %s107, [#allocation15], 64, 64, 4
    $region33: #{tpu_custom_call.1} parent=1 // pred_fallthru
      _
    // Predicated region
    $region34: #{tpu_custom_call.1} parent=1 // pred_check
      _
    $region35: #{tpu_custom_call.1} parent=1 // pred_check_branch
      %114 = sbr.rel (0) target = $region37
    $region36: #{tpu_custom_call.1} parent=1 // pred_region
      %s116 = ssub.s32 16, 16
      %117 = vsyncadd [#allocation15], %s116
      %s119 = sshll.u32 [#allocation16], 4
      %s120 = int_to_ptr.vmem [resolvable:$true] %s119
      %122 = dma.hbm_to_vmem [thread:$0]  %s8, 16, %s120, [#allocation15]
    $region37: #{tpu_custom_call.1} parent=1 // pred_fallthru
      _
    // Predicated region
    $region38: #{tpu_custom_call.1} parent=1 // pred_check
      _
    $region39: #{tpu_custom_call.1} parent=1 // pred_check_branch
      %124 = sbr.rel (0) target = $region41
    $region40: #{tpu_custom_call.1} parent=1 // pred_region
      %125 = dma.done [#allocation3], 2048
    $region41: #{tpu_custom_call.1} parent=1 // pred_fallthru
      _
    // Predicated region
    $region42: #{tpu_custom_call.1} parent=1 // pred_check
      _
    $region43: #{tpu_custom_call.1} parent=1 // pred_check_branch
      %127 = sbr.rel (0) target = $region45
    $region44: #{tpu_custom_call.1} parent=1 // pred_region
      %128 = dma.done [#allocation6], 49152
    $region45: #{tpu_custom_call.1} parent=1 // pred_fallthru
      _
    // Predicated region
    $region46: #{tpu_custom_call.1} parent=1 // pred_check
      _
    $region47: #{tpu_custom_call.1} parent=1 // pred_check_branch
      %130 = sbr.rel (0) target = $region49
    $region48: #{tpu_custom_call.1} parent=1 // pred_region
      %131 = dma.done [#allocation6], 48
    $region49: #{tpu_custom_call.1} parent=1 // pred_fallthru
      _
    // Predicated region
    $region50: #{tpu_custom_call.1} parent=1 // pred_check
      _
    $region51: #{tpu_custom_call.1} parent=1 // pred_check_branch
      %133 = sbr.rel (0) target = $region53
    $region52: #{tpu_custom_call.1} parent=1 // pred_region
      %134 = dma.done [#allocation9], 9216
    $region53: #{tpu_custom_call.1} parent=1 // pred_fallthru
      _
    // Predicated region
    $region54: #{tpu_custom_call.1} parent=1 // pred_check
      _
    $region55: #{tpu_custom_call.1} parent=1 // pred_check_branch
      %136 = sbr.rel (0) target = $region57
    $region56: #{tpu_custom_call.1} parent=1 // pred_region
      %137 = dma.done [#allocation9], 48
    $region57: #{tpu_custom_call.1} parent=1 // pred_fallthru
      _
    // Predicated region
    $region58: #{tpu_custom_call.1} parent=1 // pred_check
      _
    $region59: #{tpu_custom_call.1} parent=1 // pred_check_branch
      %139 = sbr.rel (0) target = $region61
    $region60: #{tpu_custom_call.1} parent=1 // pred_region
      %140 = dma.done [#allocation12], 9216
    $region61: #{tpu_custom_call.1} parent=1 // pred_fallthru
      _
    // Predicated region
    $region62: #{tpu_custom_call.1} parent=1 // pred_check
      _
    $region63: #{tpu_custom_call.1} parent=1 // pred_check_branch
      %142 = sbr.rel (0) target = $region65
    $region64: #{tpu_custom_call.1} parent=1 // pred_region
      %143 = dma.done [#allocation12], 48
    $region65: #{tpu_custom_call.1} parent=1 // pred_fallthru
      _
    // Predicated region
    $region66: #{tpu_custom_call.1} parent=1 // pred_check
      _
    $region67: #{tpu_custom_call.1} parent=1 // pred_check_branch
      %145 = sbr.rel (0) target = $region69
    $region68: #{tpu_custom_call.1} parent=1 // pred_region
      %146 = dma.done [#allocation15], 3072
    $region69: #{tpu_custom_call.1} parent=1 // pred_fallthru
      _
    // Predicated region
    $region70: #{tpu_custom_call.1} parent=1 // pred_check
      _
    $region71: #{tpu_custom_call.1} parent=1 // pred_check_branch
      %148 = sbr.rel (0) target = $region73
    $region72: #{tpu_custom_call.1} parent=1 // pred_region
      %149 = dma.done [#allocation15], 16
    $region73: #{tpu_custom_call.1} parent=1 // pred_fallthru
      _
    %v151 = vld [vmem:[#allocation2] sm:$0xff]
    %v152 = vld [vmem:[#allocation2 + $0x8] sm:$0xff]
    %v153 = vld [vmem:[#allocation2 + $0x10] sm:$0xff]
    %v154 = vld [vmem:[#allocation2 + $0x18] sm:$0xff]
    %v155 = vld [vmem:[#allocation2 + $0x20] sm:$0xff]
    %v156 = vld [vmem:[#allocation2 + $0x28] sm:$0xff]
    %v157 = vld [vmem:[#allocation2 + $0x30] sm:$0xff]
    %v158 = vld [vmem:[#allocation2 + $0x38] sm:$0xff]
    %v159 = vld [vmem:[#allocation2 + $0x40] sm:$0xff]
    %v160 = vld [vmem:[#allocation2 + $0x48] sm:$0xff]
    %v161 = vld [vmem:[#allocation2 + $0x50] sm:$0xff]
    %v162 = vld [vmem:[#allocation2 + $0x58] sm:$0xff]
    %v163 = vld [vmem:[#allocation2 + $0x60] sm:$0xff]
    %v164 = vld [vmem:[#allocation2 + $0x68] sm:$0xff]
    %v165 = vld [vmem:[#allocation2 + $0x70] sm:$0xff]
    %v166 = vld [vmem:[#allocation2 + $0x78] sm:$0xff]
    %v167 = vld [vmem:[#allocation5] sm:$0xff]
    %v168 = vld [vmem:[#allocation5 + $0x8] sm:$0xf]
    %v169 = vld [vmem:[#allocation5 + $0xc] sm:$0xff]
    %v170 = vld [vmem:[#allocation5 + $0x14] sm:$0xf]
    %v171 = vld [vmem:[#allocation5 + $0x18] sm:$0xff]
    %v172 = vld [vmem:[#allocation5 + $0x20] sm:$0xf]
    %v173 = vld [vmem:[#allocation5 + $0x24] sm:$0xff]
    %v174 = vld [vmem:[#allocation5 + $0x2c] sm:$0xf]
    %v175 = vld [vmem:[#allocation5 + $0x30] sm:$0xff]
    %v176 = vld [vmem:[#allocation5 + $0x38] sm:$0xf]
    %v177 = vld [vmem:[#allocation5 + $0x3c] sm:$0xff]
    %v178 = vld [vmem:[#allocation5 + $0x44] sm:$0xf]
    %v179 = vld [vmem:[#allocation5 + $0x48] sm:$0xff]
    %v180 = vld [vmem:[#allocation5 + $0x50] sm:$0xf]
    %v181 = vld [vmem:[#allocation5 + $0x54] sm:$0xff]
    %v182 = vld [vmem:[#allocation5 + $0x5c] sm:$0xf]
    %v183 = vld [vmem:[#allocation5 + $0x60] sm:$0xff]
    %v184 = vld [vmem:[#allocation5 + $0x68] sm:$0xf]
    %v185 = vld [vmem:[#allocation5 + $0x6c] sm:$0xff]
    %v186 = vld [vmem:[#allocation5 + $0x74] sm:$0xf]
    %v187 = vld [vmem:[#allocation5 + $0x78] sm:$0xff]
    %v188 = vld [vmem:[#allocation5 + $0x80] sm:$0xf]
    %v189 = vld [vmem:[#allocation5 + $0x84] sm:$0xff]
    %v190 = vld [vmem:[#allocation5 + $0x8c] sm:$0xf]
    %v191 = vld [vmem:[#allocation5 + $0x90] sm:$0xff]
    %v192 = vld [vmem:[#allocation5 + $0x98] sm:$0xf]
    %v193 = vld [vmem:[#allocation5 + $0x9c] sm:$0xff]
    %v194 = vld [vmem:[#allocation5 + $0xa4] sm:$0xf]
    %v195 = vld [vmem:[#allocation5 + $0xa8] sm:$0xff]
    %v196 = vld [vmem:[#allocation5 + $0xb0] sm:$0xf]
    %v197 = vld [vmem:[#allocation5 + $0xb4] sm:$0xff]
    %v198 = vld [vmem:[#allocation5 + $0xbc] sm:$0xf]
    %v199 = vld [vmem:[#allocation5 + $0xc0] sm:$0xff]
    %v200 = vld [vmem:[#allocation5 + $0xc8] sm:$0xf]
    %v201 = vld [vmem:[#allocation5 + $0xcc] sm:$0xff]
    %v202 = vld [vmem:[#allocation5 + $0xd4] sm:$0xf]
    %v203 = vld [vmem:[#allocation5 + $0xd8] sm:$0xff]
    %v204 = vld [vmem:[#allocation5 + $0xe0] sm:$0xf]
    %v205 = vld [vmem:[#allocation5 + $0xe4] sm:$0xff]
    %v206 = vld [vmem:[#allocation5 + $0xec] sm:$0xf]
    %v207 = vld [vmem:[#allocation5 + $0xf0] sm:$0xff]
    %v208 = vld [vmem:[#allocation5 + $0xf8] sm:$0xf]
    %v209 = vld [vmem:[#allocation5 + $0xfc] sm:$0xff]
    %v210 = vld [vmem:[#allocation5 + $0x104] sm:$0xf]
    %v211 = vld [vmem:[#allocation5 + $0x108] sm:$0xff]
    %v212 = vld [vmem:[#allocation5 + $0x110] sm:$0xf]
    %v213 = vld [vmem:[#allocation5 + $0x114] sm:$0xff]
    %v214 = vld [vmem:[#allocation5 + $0x11c] sm:$0xf]
    %v215 = vld [vmem:[#allocation5 + $0x120] sm:$0xff]
    %v216 = vld [vmem:[#allocation5 + $0x128] sm:$0xf]
    %v217 = vld [vmem:[#allocation5 + $0x12c] sm:$0xff]
    %v218 = vld [vmem:[#allocation5 + $0x134] sm:$0xf]
    %v219 = vld [vmem:[#allocation5 + $0x138] sm:$0xff]
    %v220 = vld [vmem:[#allocation5 + $0x140] sm:$0xf]
    %v221 = vld [vmem:[#allocation5 + $0x144] sm:$0xff]
    %v222 = vld [vmem:[#allocation5 + $0x14c] sm:$0xf]
    %v223 = vld [vmem:[#allocation5 + $0x150] sm:$0xff]
    %v224 = vld [vmem:[#allocation5 + $0x158] sm:$0xf]
    %v225 = vld [vmem:[#allocation5 + $0x15c] sm:$0xff]
    %v226 = vld [vmem:[#allocation5 + $0x164] sm:$0xf]
    %v227 = vld [vmem:[#allocation5 + $0x168] sm:$0xff]
    %v228 = vld [vmem:[#allocation5 + $0x170] sm:$0xf]
    %v229 = vld [vmem:[#allocation5 + $0x174] sm:$0xff]
    %v230 = vld [vmem:[#allocation5 + $0x17c] sm:$0xf]
    %v231 = vld [vmem:[#allocation5 + $0x180] sm:$0xff]
    %v232 = vld [vmem:[#allocation5 + $0x188] sm:$0xf]
    %v233 = vld [vmem:[#allocation5 + $0x18c] sm:$0xff]
    %v234 = vld [vmem:[#allocation5 + $0x194] sm:$0xf]
    %v235 = vld [vmem:[#allocation5 + $0x198] sm:$0xff]
    %v236 = vld [vmem:[#allocation5 + $0x1a0] sm:$0xf]
    %v237 = vld [vmem:[#allocation5 + $0x1a4] sm:$0xff]
    %v238 = vld [vmem:[#allocation5 + $0x1ac] sm:$0xf]
    %v239 = vld [vmem:[#allocation5 + $0x1b0] sm:$0xff]
    %v240 = vld [vmem:[#allocation5 + $0x1b8] sm:$0xf]
    %v241 = vld [vmem:[#allocation5 + $0x1bc] sm:$0xff]
    %v242 = vld [vmem:[#allocation5 + $0x1c4] sm:$0xf]
    %v243 = vld [vmem:[#allocation5 + $0x1c8] sm:$0xff]
    %v244 = vld [vmem:[#allocation5 + $0x1d0] sm:$0xf]
    %v245 = vld [vmem:[#allocation5 + $0x1d4] sm:$0xff]
    %v246 = vld [vmem:[#allocation5 + $0x1dc] sm:$0xf]
    %v247 = vld [vmem:[#allocation5 + $0x1e0] sm:$0xff]
    %v248 = vld [vmem:[#allocation5 + $0x1e8] sm:$0xf]
    %v249 = vld [vmem:[#allocation5 + $0x1ec] sm:$0xff]
    %v250 = vld [vmem:[#allocation5 + $0x1f4] sm:$0xf]
    %v251 = vld [vmem:[#allocation5 + $0x1f8] sm:$0xff]
    %v252 = vld [vmem:[#allocation5 + $0x200] sm:$0xf]
    %v253 = vld [vmem:[#allocation5 + $0x204] sm:$0xff]
    %v254 = vld [vmem:[#allocation5 + $0x20c] sm:$0xf]
    %v255 = vld [vmem:[#allocation5 + $0x210] sm:$0xff]
    %v256 = vld [vmem:[#allocation5 + $0x218] sm:$0xf]
    %v257 = vld [vmem:[#allocation5 + $0x21c] sm:$0xff]
    %v258 = vld [vmem:[#allocation5 + $0x224] sm:$0xf]
    %v259 = vld [vmem:[#allocation5 + $0x228] sm:$0xff]
    %v260 = vld [vmem:[#allocation5 + $0x230] sm:$0xf]
    %v261 = vld [vmem:[#allocation5 + $0x234] sm:$0xff]
    %v262 = vld [vmem:[#allocation5 + $0x23c] sm:$0xf]
    %v263 = vld [vmem:[#allocation5 + $0x240] sm:$0xff]
    %v264 = vld [vmem:[#allocation5 + $0x248] sm:$0xf]
    %v265 = vld [vmem:[#allocation5 + $0x24c] sm:$0xff]
    %v266 = vld [vmem:[#allocation5 + $0x254] sm:$0xf]
    %v267 = vld [vmem:[#allocation5 + $0x258] sm:$0xff]
    %v268 = vld [vmem:[#allocation5 + $0x260] sm:$0xf]
    %v269 = vld [vmem:[#allocation5 + $0x264] sm:$0xff]
    %v270 = vld [vmem:[#allocation5 + $0x26c] sm:$0xf]
    %v271 = vld [vmem:[#allocation5 + $0x270] sm:$0xff]
    %v272 = vld [vmem:[#allocation5 + $0x278] sm:$0xf]
    %v273 = vld [vmem:[#allocation5 + $0x27c] sm:$0xff]
    %v274 = vld [vmem:[#allocation5 + $0x284] sm:$0xf]
    %v275 = vld [vmem:[#allocation5 + $0x288] sm:$0xff]
    %v276 = vld [vmem:[#allocation5 + $0x290] sm:$0xf]
    %v277 = vld [vmem:[#allocation5 + $0x294] sm:$0xff]
    %v278 = vld [vmem:[#allocation5 + $0x29c] sm:$0xf]
    %v279 = vld [vmem:[#allocation5 + $0x2a0] sm:$0xff]
    %v280 = vld [vmem:[#allocation5 + $0x2a8] sm:$0xf]
    %v281 = vld [vmem:[#allocation5 + $0x2ac] sm:$0xff]
    %v282 = vld [vmem:[#allocation5 + $0x2b4] sm:$0xf]
    %v283 = vld [vmem:[#allocation5 + $0x2b8] sm:$0xff]
    %v284 = vld [vmem:[#allocation5 + $0x2c0] sm:$0xf]
    %v285 = vld [vmem:[#allocation5 + $0x2c4] sm:$0xff]
    %v286 = vld [vmem:[#allocation5 + $0x2cc] sm:$0xf]
    %v287 = vld [vmem:[#allocation5 + $0x2d0] sm:$0xff]
    %v288 = vld [vmem:[#allocation5 + $0x2d8] sm:$0xf]
    %v289 = vld [vmem:[#allocation5 + $0x2dc] sm:$0xff]
    %v290 = vld [vmem:[#allocation5 + $0x2e4] sm:$0xf]
    %v291 = vld [vmem:[#allocation5 + $0x2e8] sm:$0xff]
    %v292 = vld [vmem:[#allocation5 + $0x2f0] sm:$0xf]
    %v293 = vld [vmem:[#allocation5 + $0x2f4] sm:$0xff]
    %v294 = vld [vmem:[#allocation5 + $0x2fc] sm:$0xf]
    %v295 = vld [vmem:[#allocation5 + $0x300] sm:$0xff]
    %v296 = vld [vmem:[#allocation5 + $0x308] sm:$0xf]
    %v297 = vld [vmem:[#allocation5 + $0x30c] sm:$0xff]
    %v298 = vld [vmem:[#allocation5 + $0x314] sm:$0xf]
    %v299 = vld [vmem:[#allocation5 + $0x318] sm:$0xff]
    %v300 = vld [vmem:[#allocation5 + $0x320] sm:$0xf]
    %v301 = vld [vmem:[#allocation5 + $0x324] sm:$0xff]
    %v302 = vld [vmem:[#allocation5 + $0x32c] sm:$0xf]
    %v303 = vld [vmem:[#allocation5 + $0x330] sm:$0xff]
    %v304 = vld [vmem:[#allocation5 + $0x338] sm:$0xf]
    %v305 = vld [vmem:[#allocation5 + $0x33c] sm:$0xff]
    %v306 = vld [vmem:[#allocation5 + $0x344] sm:$0xf]
    %v307 = vld [vmem:[#allocation5 + $0x348] sm:$0xff]
    %v308 = vld [vmem:[#allocation5 + $0x350] sm:$0xf]
    %v309 = vld [vmem:[#allocation5 + $0x354] sm:$0xff]
    %v310 = vld [vmem:[#allocation5 + $0x35c] sm:$0xf]
    %v311 = vld [vmem:[#allocation5 + $0x360] sm:$0xff]
    %v312 = vld [vmem:[#allocation5 + $0x368] sm:$0xf]
    %v313 = vld [vmem:[#allocation5 + $0x36c] sm:$0xff]
    %v314 = vld [vmem:[#allocation5 + $0x374] sm:$0xf]
    %v315 = vld [vmem:[#allocation5 + $0x378] sm:$0xff]
    %v316 = vld [vmem:[#allocation5 + $0x380] sm:$0xf]
    %v317 = vld [vmem:[#allocation5 + $0x384] sm:$0xff]
    %v318 = vld [vmem:[#allocation5 + $0x38c] sm:$0xf]
    %v319 = vld [vmem:[#allocation5 + $0x390] sm:$0xff]
    %v320 = vld [vmem:[#allocation5 + $0x398] sm:$0xf]
    %v321 = vld [vmem:[#allocation5 + $0x39c] sm:$0xff]
    %v322 = vld [vmem:[#allocation5 + $0x3a4] sm:$0xf]
    %v323 = vld [vmem:[#allocation5 + $0x3a8] sm:$0xff]
    %v324 = vld [vmem:[#allocation5 + $0x3b0] sm:$0xf]
    %v325 = vld [vmem:[#allocation5 + $0x3b4] sm:$0xff]
    %v326 = vld [vmem:[#allocation5 + $0x3bc] sm:$0xf]
    %v327 = vld [vmem:[#allocation5 + $0x3c0] sm:$0xff]
    %v328 = vld [vmem:[#allocation5 + $0x3c8] sm:$0xf]
    %v329 = vld [vmem:[#allocation5 + $0x3cc] sm:$0xff]
    %v330 = vld [vmem:[#allocation5 + $0x3d4] sm:$0xf]
    %v331 = vld [vmem:[#allocation5 + $0x3d8] sm:$0xff]
    %v332 = vld [vmem:[#allocation5 + $0x3e0] sm:$0xf]
    %v333 = vld [vmem:[#allocation5 + $0x3e4] sm:$0xff]
    %v334 = vld [vmem:[#allocation5 + $0x3ec] sm:$0xf]
    %v335 = vld [vmem:[#allocation5 + $0x3f0] sm:$0xff]
    %v336 = vld [vmem:[#allocation5 + $0x3f8] sm:$0xf]
    %v337 = vld [vmem:[#allocation5 + $0x3fc] sm:$0xff]
    %v338 = vld [vmem:[#allocation5 + $0x404] sm:$0xf]
    %v339 = vld [vmem:[#allocation5 + $0x408] sm:$0xff]
    %v340 = vld [vmem:[#allocation5 + $0x410] sm:$0xf]
    %v341 = vld [vmem:[#allocation5 + $0x414] sm:$0xff]
    %v342 = vld [vmem:[#allocation5 + $0x41c] sm:$0xf]
    %v343 = vld [vmem:[#allocation5 + $0x420] sm:$0xff]
    %v344 = vld [vmem:[#allocation5 + $0x428] sm:$0xf]
    %v345 = vld [vmem:[#allocation5 + $0x42c] sm:$0xff]
    %v346 = vld [vmem:[#allocation5 + $0x434] sm:$0xf]
    %v347 = vld [vmem:[#allocation5 + $0x438] sm:$0xff]
    %v348 = vld [vmem:[#allocation5 + $0x440] sm:$0xf]
    %v349 = vld [vmem:[#allocation5 + $0x444] sm:$0xff]
    %v350 = vld [vmem:[#allocation5 + $0x44c] sm:$0xf]
    %v351 = vld [vmem:[#allocation5 + $0x450] sm:$0xff]
    %v352 = vld [vmem:[#allocation5 + $0x458] sm:$0xf]
    %v353 = vld [vmem:[#allocation5 + $0x45c] sm:$0xff]
    %v354 = vld [vmem:[#allocation5 + $0x464] sm:$0xf]
    %v355 = vld [vmem:[#allocation5 + $0x468] sm:$0xff]
    %v356 = vld [vmem:[#allocation5 + $0x470] sm:$0xf]
    %v357 = vld [vmem:[#allocation5 + $0x474] sm:$0xff]
    %v358 = vld [vmem:[#allocation5 + $0x47c] sm:$0xf]
    %v359 = vld [vmem:[#allocation5 + $0x480] sm:$0xff]
    %v360 = vld [vmem:[#allocation5 + $0x488] sm:$0xf]
    %v361 = vld [vmem:[#allocation5 + $0x48c] sm:$0xff]
    %v362 = vld [vmem:[#allocation5 + $0x494] sm:$0xf]
    %v363 = vld [vmem:[#allocation5 + $0x498] sm:$0xff]
    %v364 = vld [vmem:[#allocation5 + $0x4a0] sm:$0xf]
    %v365 = vld [vmem:[#allocation5 + $0x4a4] sm:$0xff]
    %v366 = vld [vmem:[#allocation5 + $0x4ac] sm:$0xf]
    %v367 = vld [vmem:[#allocation5 + $0x4b0] sm:$0xff]
    %v368 = vld [vmem:[#allocation5 + $0x4b8] sm:$0xf]
    %v369 = vld [vmem:[#allocation5 + $0x4bc] sm:$0xff]
    %v370 = vld [vmem:[#allocation5 + $0x4c4] sm:$0xf]
    %v371 = vld [vmem:[#allocation5 + $0x4c8] sm:$0xff]
    %v372 = vld [vmem:[#allocation5 + $0x4d0] sm:$0xf]
    %v373 = vld [vmem:[#allocation5 + $0x4d4] sm:$0xff]
    %v374 = vld [vmem:[#allocation5 + $0x4dc] sm:$0xf]
    %v375 = vld [vmem:[#allocation5 + $0x4e0] sm:$0xff]
    %v376 = vld [vmem:[#allocation5 + $0x4e8] sm:$0xf]
    %v377 = vld [vmem:[#allocation5 + $0x4ec] sm:$0xff]
    %v378 = vld [vmem:[#allocation5 + $0x4f4] sm:$0xf]
    %v379 = vld [vmem:[#allocation5 + $0x4f8] sm:$0xff]
    %v380 = vld [vmem:[#allocation5 + $0x500] sm:$0xf]
    %v381 = vld [vmem:[#allocation5 + $0x504] sm:$0xff]
    %v382 = vld [vmem:[#allocation5 + $0x50c] sm:$0xf]
    %v383 = vld [vmem:[#allocation5 + $0x510] sm:$0xff]
    %v384 = vld [vmem:[#allocation5 + $0x518] sm:$0xf]
    %v385 = vld [vmem:[#allocation5 + $0x51c] sm:$0xff]
    %v386 = vld [vmem:[#allocation5 + $0x524] sm:$0xf]
    %v387 = vld [vmem:[#allocation5 + $0x528] sm:$0xff]
    %v388 = vld [vmem:[#allocation5 + $0x530] sm:$0xf]
    %v389 = vld [vmem:[#allocation5 + $0x534] sm:$0xff]
    %v390 = vld [vmem:[#allocation5 + $0x53c] sm:$0xf]
    %v391 = vld [vmem:[#allocation5 + $0x540] sm:$0xff]
    %v392 = vld [vmem:[#allocation5 + $0x548] sm:$0xf]
    %v393 = vld [vmem:[#allocation5 + $0x54c] sm:$0xff]
    %v394 = vld [vmem:[#allocation5 + $0x554] sm:$0xf]
    %v395 = vld [vmem:[#allocation5 + $0x558] sm:$0xff]
    %v396 = vld [vmem:[#allocation5 + $0x560] sm:$0xf]
    %v397 = vld [vmem:[#allocation5 + $0x564] sm:$0xff]
    %v398 = vld [vmem:[#allocation5 + $0x56c] sm:$0xf]
    %v399 = vld [vmem:[#allocation5 + $0x570] sm:$0xff]
    %v400 = vld [vmem:[#allocation5 + $0x578] sm:$0xf]
    %v401 = vld [vmem:[#allocation5 + $0x57c] sm:$0xff]
    %v402 = vld [vmem:[#allocation5 + $0x584] sm:$0xf]
    %v403 = vld [vmem:[#allocation5 + $0x588] sm:$0xff]
    %v404 = vld [vmem:[#allocation5 + $0x590] sm:$0xf]
    %v405 = vld [vmem:[#allocation5 + $0x594] sm:$0xff]
    %v406 = vld [vmem:[#allocation5 + $0x59c] sm:$0xf]
    %v407 = vld [vmem:[#allocation5 + $0x5a0] sm:$0xff]
    %v408 = vld [vmem:[#allocation5 + $0x5a8] sm:$0xf]
    %v409 = vld [vmem:[#allocation5 + $0x5ac] sm:$0xff]
    %v410 = vld [vmem:[#allocation5 + $0x5b4] sm:$0xf]
    %v411 = vld [vmem:[#allocation5 + $0x5b8] sm:$0xff]
    %v412 = vld [vmem:[#allocation5 + $0x5c0] sm:$0xf]
    %v413 = vld [vmem:[#allocation5 + $0x5c4] sm:$0xff]
    %v414 = vld [vmem:[#allocation5 + $0x5cc] sm:$0xf]
    %v415 = vld [vmem:[#allocation5 + $0x5d0] sm:$0xff]
    %v416 = vld [vmem:[#allocation5 + $0x5d8] sm:$0xf]
    %v417 = vld [vmem:[#allocation5 + $0x5dc] sm:$0xff]
    %v418 = vld [vmem:[#allocation5 + $0x5e4] sm:$0xf]
    %v419 = vld [vmem:[#allocation5 + $0x5e8] sm:$0xff]
    %v420 = vld [vmem:[#allocation5 + $0x5f0] sm:$0xf]
    %v421 = vld [vmem:[#allocation5 + $0x5f4] sm:$0xff]
    %v422 = vld [vmem:[#allocation5 + $0x5fc] sm:$0xf]
    %v423 = vld [vmem:[#allocation5 + $0x600] sm:$0xff]
    %v424 = vld [vmem:[#allocation5 + $0x608] sm:$0xf]
    %v425 = vld [vmem:[#allocation5 + $0x60c] sm:$0xff]
    %v426 = vld [vmem:[#allocation5 + $0x614] sm:$0xf]
    %v427 = vld [vmem:[#allocation5 + $0x618] sm:$0xff]
    %v428 = vld [vmem:[#allocation5 + $0x620] sm:$0xf]
    %v429 = vld [vmem:[#allocation5 + $0x624] sm:$0xff]
    %v430 = vld [vmem:[#allocation5 + $0x62c] sm:$0xf]
    %v431 = vld [vmem:[#allocation5 + $0x630] sm:$0xff]
    %v432 = vld [vmem:[#allocation5 + $0x638] sm:$0xf]
    %v433 = vld [vmem:[#allocation5 + $0x63c] sm:$0xff]
    %v434 = vld [vmem:[#allocation5 + $0x644] sm:$0xf]
    %v435 = vld [vmem:[#allocation5 + $0x648] sm:$0xff]
    %v436 = vld [vmem:[#allocation5 + $0x650] sm:$0xf]
    %v437 = vld [vmem:[#allocation5 + $0x654] sm:$0xff]
    %v438 = vld [vmem:[#allocation5 + $0x65c] sm:$0xf]
    %v439 = vld [vmem:[#allocation5 + $0x660] sm:$0xff]
    %v440 = vld [vmem:[#allocation5 + $0x668] sm:$0xf]
    %v441 = vld [vmem:[#allocation5 + $0x66c] sm:$0xff]
    %v442 = vld [vmem:[#allocation5 + $0x674] sm:$0xf]
    %v443 = vld [vmem:[#allocation5 + $0x678] sm:$0xff]
    %v444 = vld [vmem:[#allocation5 + $0x680] sm:$0xf]
    %v445 = vld [vmem:[#allocation5 + $0x684] sm:$0xff]
    %v446 = vld [vmem:[#allocation5 + $0x68c] sm:$0xf]
    %v447 = vld [vmem:[#allocation5 + $0x690] sm:$0xff]
    %v448 = vld [vmem:[#allocation5 + $0x698] sm:$0xf]
    %v449 = vld [vmem:[#allocation5 + $0x69c] sm:$0xff]
    %v450 = vld [vmem:[#allocation5 + $0x6a4] sm:$0xf]
    %v451 = vld [vmem:[#allocation5 + $0x6a8] sm:$0xff]
    %v452 = vld [vmem:[#allocation5 + $0x6b0] sm:$0xf]
    %v453 = vld [vmem:[#allocation5 + $0x6b4] sm:$0xff]
    %v454 = vld [vmem:[#allocation5 + $0x6bc] sm:$0xf]
    %v455 = vld [vmem:[#allocation5 + $0x6c0] sm:$0xff]
    %v456 = vld [vmem:[#allocation5 + $0x6c8] sm:$0xf]
    %v457 = vld [vmem:[#allocation5 + $0x6cc] sm:$0xff]
    %v458 = vld [vmem:[#allocation5 + $0x6d4] sm:$0xf]
    %v459 = vld [vmem:[#allocation5 + $0x6d8] sm:$0xff]
    %v460 = vld [vmem:[#allocation5 + $0x6e0] sm:$0xf]
    %v461 = vld [vmem:[#allocation5 + $0x6e4] sm:$0xff]
    %v462 = vld [vmem:[#allocation5 + $0x6ec] sm:$0xf]
    %v463 = vld [vmem:[#allocation5 + $0x6f0] sm:$0xff]
    %v464 = vld [vmem:[#allocation5 + $0x6f8] sm:$0xf]
    %v465 = vld [vmem:[#allocation5 + $0x6fc] sm:$0xff]
    %v466 = vld [vmem:[#allocation5 + $0x704] sm:$0xf]
    %v467 = vld [vmem:[#allocation5 + $0x708] sm:$0xff]
    %v468 = vld [vmem:[#allocation5 + $0x710] sm:$0xf]
    %v469 = vld [vmem:[#allocation5 + $0x714] sm:$0xff]
    %v470 = vld [vmem:[#allocation5 + $0x71c] sm:$0xf]
    %v471 = vld [vmem:[#allocation5 + $0x720] sm:$0xff]
    %v472 = vld [vmem:[#allocation5 + $0x728] sm:$0xf]
    %v473 = vld [vmem:[#allocation5 + $0x72c] sm:$0xff]
    %v474 = vld [vmem:[#allocation5 + $0x734] sm:$0xf]
    %v475 = vld [vmem:[#allocation5 + $0x738] sm:$0xff]
    %v476 = vld [vmem:[#allocation5 + $0x740] sm:$0xf]
    %v477 = vld [vmem:[#allocation5 + $0x744] sm:$0xff]
    %v478 = vld [vmem:[#allocation5 + $0x74c] sm:$0xf]
    %v479 = vld [vmem:[#allocation5 + $0x750] sm:$0xff]
    %v480 = vld [vmem:[#allocation5 + $0x758] sm:$0xf]
    %v481 = vld [vmem:[#allocation5 + $0x75c] sm:$0xff]
    %v482 = vld [vmem:[#allocation5 + $0x764] sm:$0xf]
    %v483 = vld [vmem:[#allocation5 + $0x768] sm:$0xff]
    %v484 = vld [vmem:[#allocation5 + $0x770] sm:$0xf]
    %v485 = vld [vmem:[#allocation5 + $0x774] sm:$0xff]
    %v486 = vld [vmem:[#allocation5 + $0x77c] sm:$0xf]
    %v487 = vld [vmem:[#allocation5 + $0x780] sm:$0xff]
    %v488 = vld [vmem:[#allocation5 + $0x788] sm:$0xf]
    %v489 = vld [vmem:[#allocation5 + $0x78c] sm:$0xff]
    %v490 = vld [vmem:[#allocation5 + $0x794] sm:$0xf]
    %v491 = vld [vmem:[#allocation5 + $0x798] sm:$0xff]
    %v492 = vld [vmem:[#allocation5 + $0x7a0] sm:$0xf]
    %v493 = vld [vmem:[#allocation5 + $0x7a4] sm:$0xff]
    %v494 = vld [vmem:[#allocation5 + $0x7ac] sm:$0xf]
    %v495 = vld [vmem:[#allocation5 + $0x7b0] sm:$0xff]
    %v496 = vld [vmem:[#allocation5 + $0x7b8] sm:$0xf]
    %v497 = vld [vmem:[#allocation5 + $0x7bc] sm:$0xff]
    %v498 = vld [vmem:[#allocation5 + $0x7c4] sm:$0xf]
    %v499 = vld [vmem:[#allocation5 + $0x7c8] sm:$0xff]
    %v500 = vld [vmem:[#allocation5 + $0x7d0] sm:$0xf]
    %v501 = vld [vmem:[#allocation5 + $0x7d4] sm:$0xff]
    %v502 = vld [vmem:[#allocation5 + $0x7dc] sm:$0xf]
    %v503 = vld [vmem:[#allocation5 + $0x7e0] sm:$0xff]
    %v504 = vld [vmem:[#allocation5 + $0x7e8] sm:$0xf]
    %v505 = vld [vmem:[#allocation5 + $0x7ec] sm:$0xff]
    %v506 = vld [vmem:[#allocation5 + $0x7f4] sm:$0xf]
    %v507 = vld [vmem:[#allocation5 + $0x7f8] sm:$0xff]
    %v508 = vld [vmem:[#allocation5 + $0x800] sm:$0xf]
    %v509 = vld [vmem:[#allocation5 + $0x804] sm:$0xff]
    %v510 = vld [vmem:[#allocation5 + $0x80c] sm:$0xf]
    %v511 = vld [vmem:[#allocation5 + $0x810] sm:$0xff]
    %v512 = vld [vmem:[#allocation5 + $0x818] sm:$0xf]
    %v513 = vld [vmem:[#allocation5 + $0x81c] sm:$0xff]
    %v514 = vld [vmem:[#allocation5 + $0x824] sm:$0xf]
    %v515 = vld [vmem:[#allocation5 + $0x828] sm:$0xff]
    %v516 = vld [vmem:[#allocation5 + $0x830] sm:$0xf]
    %v517 = vld [vmem:[#allocation5 + $0x834] sm:$0xff]
    %v518 = vld [vmem:[#allocation5 + $0x83c] sm:$0xf]
    %v519 = vld [vmem:[#allocation5 + $0x840] sm:$0xff]
    %v520 = vld [vmem:[#allocation5 + $0x848] sm:$0xf]
    %v521 = vld [vmem:[#allocation5 + $0x84c] sm:$0xff]
    %v522 = vld [vmem:[#allocation5 + $0x854] sm:$0xf]
    %v523 = vld [vmem:[#allocation5 + $0x858] sm:$0xff]
    %v524 = vld [vmem:[#allocation5 + $0x860] sm:$0xf]
    %v525 = vld [vmem:[#allocation5 + $0x864] sm:$0xff]
    %v526 = vld [vmem:[#allocation5 + $0x86c] sm:$0xf]
    %v527 = vld [vmem:[#allocation5 + $0x870] sm:$0xff]
    %v528 = vld [vmem:[#allocation5 + $0x878] sm:$0xf]
    %v529 = vld [vmem:[#allocation5 + $0x87c] sm:$0xff]
    %v530 = vld [vmem:[#allocation5 + $0x884] sm:$0xf]
    %v531 = vld [vmem:[#allocation5 + $0x888] sm:$0xff]
    %v532 = vld [vmem:[#allocation5 + $0x890] sm:$0xf]
    %v533 = vld [vmem:[#allocation5 + $0x894] sm:$0xff]
    %v534 = vld [vmem:[#allocation5 + $0x89c] sm:$0xf]
    %v535 = vld [vmem:[#allocation5 + $0x8a0] sm:$0xff]
    %v536 = vld [vmem:[#allocation5 + $0x8a8] sm:$0xf]
    %v537 = vld [vmem:[#allocation5 + $0x8ac] sm:$0xff]
    %v538 = vld [vmem:[#allocation5 + $0x8b4] sm:$0xf]
    %v539 = vld [vmem:[#allocation5 + $0x8b8] sm:$0xff]
    %v540 = vld [vmem:[#allocation5 + $0x8c0] sm:$0xf]
    %v541 = vld [vmem:[#allocation5 + $0x8c4] sm:$0xff]
    %v542 = vld [vmem:[#allocation5 + $0x8cc] sm:$0xf]
    %v543 = vld [vmem:[#allocation5 + $0x8d0] sm:$0xff]
    %v544 = vld [vmem:[#allocation5 + $0x8d8] sm:$0xf]
    %v545 = vld [vmem:[#allocation5 + $0x8dc] sm:$0xff]
    %v546 = vld [vmem:[#allocation5 + $0x8e4] sm:$0xf]
    %v547 = vld [vmem:[#allocation5 + $0x8e8] sm:$0xff]
    %v548 = vld [vmem:[#allocation5 + $0x8f0] sm:$0xf]
    %v549 = vld [vmem:[#allocation5 + $0x8f4] sm:$0xff]
    %v550 = vld [vmem:[#allocation5 + $0x8fc] sm:$0xf]
    %v551 = vld [vmem:[#allocation5 + $0x900] sm:$0xff]
    %v552 = vld [vmem:[#allocation5 + $0x908] sm:$0xf]
    %v553 = vld [vmem:[#allocation5 + $0x90c] sm:$0xff]
    %v554 = vld [vmem:[#allocation5 + $0x914] sm:$0xf]
    %v555 = vld [vmem:[#allocation5 + $0x918] sm:$0xff]
    %v556 = vld [vmem:[#allocation5 + $0x920] sm:$0xf]
    %v557 = vld [vmem:[#allocation5 + $0x924] sm:$0xff]
    %v558 = vld [vmem:[#allocation5 + $0x92c] sm:$0xf]
    %v559 = vld [vmem:[#allocation5 + $0x930] sm:$0xff]
    %v560 = vld [vmem:[#allocation5 + $0x938] sm:$0xf]
    %v561 = vld [vmem:[#allocation5 + $0x93c] sm:$0xff]
    %v562 = vld [vmem:[#allocation5 + $0x944] sm:$0xf]
    %v563 = vld [vmem:[#allocation5 + $0x948] sm:$0xff]
    %v564 = vld [vmem:[#allocation5 + $0x950] sm:$0xf]
    %v565 = vld [vmem:[#allocation5 + $0x954] sm:$0xff]
    %v566 = vld [vmem:[#allocation5 + $0x95c] sm:$0xf]
    %v567 = vld [vmem:[#allocation5 + $0x960] sm:$0xff]
    %v568 = vld [vmem:[#allocation5 + $0x968] sm:$0xf]
    %v569 = vld [vmem:[#allocation5 + $0x96c] sm:$0xff]
    %v570 = vld [vmem:[#allocation5 + $0x974] sm:$0xf]
    %v571 = vld [vmem:[#allocation5 + $0x978] sm:$0xff]
    %v572 = vld [vmem:[#allocation5 + $0x980] sm:$0xf]
    %v573 = vld [vmem:[#allocation5 + $0x984] sm:$0xff]
    %v574 = vld [vmem:[#allocation5 + $0x98c] sm:$0xf]
    %v575 = vld [vmem:[#allocation5 + $0x990] sm:$0xff]
    %v576 = vld [vmem:[#allocation5 + $0x998] sm:$0xf]
    %v577 = vld [vmem:[#allocation5 + $0x99c] sm:$0xff]
    %v578 = vld [vmem:[#allocation5 + $0x9a4] sm:$0xf]
    %v579 = vld [vmem:[#allocation5 + $0x9a8] sm:$0xff]
    %v580 = vld [vmem:[#allocation5 + $0x9b0] sm:$0xf]
    %v581 = vld [vmem:[#allocation5 + $0x9b4] sm:$0xff]
    %v582 = vld [vmem:[#allocation5 + $0x9bc] sm:$0xf]
    %v583 = vld [vmem:[#allocation5 + $0x9c0] sm:$0xff]
    %v584 = vld [vmem:[#allocation5 + $0x9c8] sm:$0xf]
    %v585 = vld [vmem:[#allocation5 + $0x9cc] sm:$0xff]
    %v586 = vld [vmem:[#allocation5 + $0x9d4] sm:$0xf]
    %v587 = vld [vmem:[#allocation5 + $0x9d8] sm:$0xff]
    %v588 = vld [vmem:[#allocation5 + $0x9e0] sm:$0xf]
    %v589 = vld [vmem:[#allocation5 + $0x9e4] sm:$0xff]
    %v590 = vld [vmem:[#allocation5 + $0x9ec] sm:$0xf]
    %v591 = vld [vmem:[#allocation5 + $0x9f0] sm:$0xff]
    %v592 = vld [vmem:[#allocation5 + $0x9f8] sm:$0xf]
    %v593 = vld [vmem:[#allocation5 + $0x9fc] sm:$0xff]
    %v594 = vld [vmem:[#allocation5 + $0xa04] sm:$0xf]
    %v595 = vld [vmem:[#allocation5 + $0xa08] sm:$0xff]
    %v596 = vld [vmem:[#allocation5 + $0xa10] sm:$0xf]
    %v597 = vld [vmem:[#allocation5 + $0xa14] sm:$0xff]
    %v598 = vld [vmem:[#allocation5 + $0xa1c] sm:$0xf]
    %v599 = vld [vmem:[#allocation5 + $0xa20] sm:$0xff]
    %v600 = vld [vmem:[#allocation5 + $0xa28] sm:$0xf]
    %v601 = vld [vmem:[#allocation5 + $0xa2c] sm:$0xff]
    %v602 = vld [vmem:[#allocation5 + $0xa34] sm:$0xf]
    %v603 = vld [vmem:[#allocation5 + $0xa38] sm:$0xff]
    %v604 = vld [vmem:[#allocation5 + $0xa40] sm:$0xf]
    %v605 = vld [vmem:[#allocation5 + $0xa44] sm:$0xff]
    %v606 = vld [vmem:[#allocation5 + $0xa4c] sm:$0xf]
    %v607 = vld [vmem:[#allocation5 + $0xa50] sm:$0xff]
    %v608 = vld [vmem:[#allocation5 + $0xa58] sm:$0xf]
    %v609 = vld [vmem:[#allocation5 + $0xa5c] sm:$0xff]
    %v610 = vld [vmem:[#allocation5 + $0xa64] sm:$0xf]
    %v611 = vld [vmem:[#allocation5 + $0xa68] sm:$0xff]
    %v612 = vld [vmem:[#allocation5 + $0xa70] sm:$0xf]
    %v613 = vld [vmem:[#allocation5 + $0xa74] sm:$0xff]
    %v614 = vld [vmem:[#allocation5 + $0xa7c] sm:$0xf]
    %v615 = vld [vmem:[#allocation5 + $0xa80] sm:$0xff]
    %v616 = vld [vmem:[#allocation5 + $0xa88] sm:$0xf]
    %v617 = vld [vmem:[#allocation5 + $0xa8c] sm:$0xff]
    %v618 = vld [vmem:[#allocation5 + $0xa94] sm:$0xf]
    %v619 = vld [vmem:[#allocation5 + $0xa98] sm:$0xff]
    %v620 = vld [vmem:[#allocation5 + $0xaa0] sm:$0xf]
    %v621 = vld [vmem:[#allocation5 + $0xaa4] sm:$0xff]
    %v622 = vld [vmem:[#allocation5 + $0xaac] sm:$0xf]
    %v623 = vld [vmem:[#allocation5 + $0xab0] sm:$0xff]
    %v624 = vld [vmem:[#allocation5 + $0xab8] sm:$0xf]
    %v625 = vld [vmem:[#allocation5 + $0xabc] sm:$0xff]
    %v626 = vld [vmem:[#allocation5 + $0xac4] sm:$0xf]
    %v627 = vld [vmem:[#allocation5 + $0xac8] sm:$0xff]
    %v628 = vld [vmem:[#allocation5 + $0xad0] sm:$0xf]
    %v629 = vld [vmem:[#allocation5 + $0xad4] sm:$0xff]
    %v630 = vld [vmem:[#allocation5 + $0xadc] sm:$0xf]
    %v631 = vld [vmem:[#allocation5 + $0xae0] sm:$0xff]
    %v632 = vld [vmem:[#allocation5 + $0xae8] sm:$0xf]
    %v633 = vld [vmem:[#allocation5 + $0xaec] sm:$0xff]
    %v634 = vld [vmem:[#allocation5 + $0xaf4] sm:$0xf]
    %v635 = vld [vmem:[#allocation5 + $0xaf8] sm:$0xff]
    %v636 = vld [vmem:[#allocation5 + $0xb00] sm:$0xf]
    %v637 = vld [vmem:[#allocation5 + $0xb04] sm:$0xff]
    %v638 = vld [vmem:[#allocation5 + $0xb0c] sm:$0xf]
    %v639 = vld [vmem:[#allocation5 + $0xb10] sm:$0xff]
    %v640 = vld [vmem:[#allocation5 + $0xb18] sm:$0xf]
    %v641 = vld [vmem:[#allocation5 + $0xb1c] sm:$0xff]
    %v642 = vld [vmem:[#allocation5 + $0xb24] sm:$0xf]
    %v643 = vld [vmem:[#allocation5 + $0xb28] sm:$0xff]
    %v644 = vld [vmem:[#allocation5 + $0xb30] sm:$0xf]
    %v645 = vld [vmem:[#allocation5 + $0xb34] sm:$0xff]
    %v646 = vld [vmem:[#allocation5 + $0xb3c] sm:$0xf]
    %v647 = vld [vmem:[#allocation5 + $0xb40] sm:$0xff]
    %v648 = vld [vmem:[#allocation5 + $0xb48] sm:$0xf]
    %v649 = vld [vmem:[#allocation5 + $0xb4c] sm:$0xff]
    %v650 = vld [vmem:[#allocation5 + $0xb54] sm:$0xf]
    %v651 = vld [vmem:[#allocation5 + $0xb58] sm:$0xff]
    %v652 = vld [vmem:[#allocation5 + $0xb60] sm:$0xf]
    %v653 = vld [vmem:[#allocation5 + $0xb64] sm:$0xff]
    %v654 = vld [vmem:[#allocation5 + $0xb6c] sm:$0xf]
    %v655 = vld [vmem:[#allocation5 + $0xb70] sm:$0xff]
    %v656 = vld [vmem:[#allocation5 + $0xb78] sm:$0xf]
    %v657 = vld [vmem:[#allocation5 + $0xb7c] sm:$0xff]
    %v658 = vld [vmem:[#allocation5 + $0xb84] sm:$0xf]
    %v659 = vld [vmem:[#allocation5 + $0xb88] sm:$0xff]
    %v660 = vld [vmem:[#allocation5 + $0xb90] sm:$0xf]
    %v661 = vld [vmem:[#allocation5 + $0xb94] sm:$0xff]
    %v662 = vld [vmem:[#allocation5 + $0xb9c] sm:$0xf]
    %v663 = vld [vmem:[#allocation5 + $0xba0] sm:$0xff]
    %v664 = vld [vmem:[#allocation5 + $0xba8] sm:$0xf]
    %v665 = vld [vmem:[#allocation5 + $0xbac] sm:$0xff]
    %v666 = vld [vmem:[#allocation5 + $0xbb4] sm:$0xf]
    %v667 = vld [vmem:[#allocation5 + $0xbb8] sm:$0xff]
    %v668 = vld [vmem:[#allocation5 + $0xbc0] sm:$0xf]
    %v669 = vld [vmem:[#allocation5 + $0xbc4] sm:$0xff]
    %v670 = vld [vmem:[#allocation5 + $0xbcc] sm:$0xf]
    %v671 = vld [vmem:[#allocation5 + $0xbd0] sm:$0xff]
    %v672 = vld [vmem:[#allocation5 + $0xbd8] sm:$0xf]
    %v673 = vld [vmem:[#allocation5 + $0xbdc] sm:$0xff]
    %v674 = vld [vmem:[#allocation5 + $0xbe4] sm:$0xf]
    %v675 = vld [vmem:[#allocation5 + $0xbe8] sm:$0xff]
    %v676 = vld [vmem:[#allocation5 + $0xbf0] sm:$0xf]
    %v677 = vld [vmem:[#allocation5 + $0xbf4] sm:$0xff]
    %v678 = vld [vmem:[#allocation5 + $0xbfc] sm:$0xf]
    %v679 = vld [vmem:[#allocation7] sm:$0x7]
    %v681 = vlaneseq
    %v682 = vshrl.u32 %v681, 7
    %v683 = vsub.s32 0, %v682
    %v684 = vrot.slane %v679, %v683
    %v685 = vlaneseq
    %v686 = vshrl.u32 %v685, 7
    %v687 = vsub.s32 1, %v686
    %v688 = vrot.slane %v679, %v687
    %v689 = vlaneseq
    %v690 = vshrl.u32 %v689, 7
    %v691 = vsub.s32 2, %v690
    %v692 = vrot.slane %v679, %v691
    %v712 = vcombine.low %v151, %v153
    %v713 = vcombine.high %v151, %v153
    %v714 = vcombine.low %v155, %v157
    %v715 = vcombine.high %v155, %v157
    %v716 = vcombine.low %v159, %v161
    %v717 = vcombine.high %v159, %v161
    %v718 = vcombine.low %v163, %v165
    %v719 = vcombine.high %v163, %v165
    %v721 = vunpack.c.l.s4 1966171168
    %v722 = vunpack.c.0.s8 %v721
    %v723 = vlaneseq
    %v724 = vshrl.u32 %v723, 7
    %v725 = vsub.s32 %v722, %v724
    %v726 = vrot.slane %v712, %v725
    %v728 = vunpack.c.l.s4 1966171168
    %v729 = vunpack.c.0.s8 %v728
    %v730 = vlaneseq
    %v731 = vshrl.u32 %v730, 7
    %v732 = vsub.s32 %v729, %v731
    %v733 = vrot.slane %v713, %v732
    %v735 = vunpack.c.l.s4 1966171168
    %v736 = vunpack.c.0.s8 %v735
    %v737 = vlaneseq
    %v738 = vshrl.u32 %v737, 7
    %v739 = vsub.s32 %v736, %v738
    %v740 = vrot.slane %v714, %v739
    %v742 = vunpack.c.l.s4 1966171168
    %v743 = vunpack.c.0.s8 %v742
    %v744 = vlaneseq
    %v745 = vshrl.u32 %v744, 7
    %v746 = vsub.s32 %v743, %v745
    %v747 = vrot.slane %v715, %v746
    %v749 = vunpack.c.l.s4 1966171168
    %v750 = vunpack.c.0.s8 %v749
    %v751 = vlaneseq
    %v752 = vshrl.u32 %v751, 7
    %v753 = vsub.s32 %v750, %v752
    %v754 = vrot.slane %v716, %v753
    %v756 = vunpack.c.l.s4 1966171168
    %v757 = vunpack.c.0.s8 %v756
    %v758 = vlaneseq
    %v759 = vshrl.u32 %v758, 7
    %v760 = vsub.s32 %v757, %v759
    %v761 = vrot.slane %v717, %v760
    %v763 = vunpack.c.l.s4 1966171168
    %v764 = vunpack.c.0.s8 %v763
    %v765 = vlaneseq
    %v766 = vshrl.u32 %v765, 7
    %v767 = vsub.s32 %v764, %v766
    %v768 = vrot.slane %v718, %v767
    %v770 = vunpack.c.l.s4 1966171168
    %v771 = vunpack.c.0.s8 %v770
    %v772 = vlaneseq
    %v773 = vshrl.u32 %v772, 7
    %v774 = vsub.s32 %v771, %v773
    %v775 = vrot.slane %v719, %v774
    %v776 = vcombine.low %v726, %v740
    %v777 = vcombine.high %v726, %v740
    %v778 = vcombine.low %v733, %v747
    %v779 = vcombine.high %v733, %v747
    %v780 = vcombine.low %v754, %v768
    %v781 = vcombine.high %v754, %v768
    %v782 = vcombine.low %v761, %v775
    %v783 = vcombine.high %v761, %v775
    %v785 = vunpack.c.l.s4 1966171168
    %v786 = vunpack.c.0.s8 %v785
    %v787 = vlaneseq
    %v788 = vshrl.u32 %v787, 7
    %v789 = vsub.s32 %v786, %v788
    %v790 = vrot.slane %v776, %v789
    %v792 = vunpack.c.l.s4 1966171168
    %v793 = vunpack.c.0.s8 %v792
    %v794 = vlaneseq
    %v795 = vshrl.u32 %v794, 7
    %v796 = vsub.s32 %v793, %v795
    %v797 = vrot.slane %v778, %v796
    %v799 = vunpack.c.l.s4 1966171168
    %v800 = vunpack.c.0.s8 %v799
    %v801 = vlaneseq
    %v802 = vshrl.u32 %v801, 7
    %v803 = vsub.s32 %v800, %v802
    %v804 = vrot.slane %v777, %v803
    %v806 = vunpack.c.l.s4 1966171168
    %v807 = vunpack.c.0.s8 %v806
    %v808 = vlaneseq
    %v809 = vshrl.u32 %v808, 7
    %v810 = vsub.s32 %v807, %v809
    %v811 = vrot.slane %v779, %v810
    %v813 = vunpack.c.l.s4 1966171168
    %v814 = vunpack.c.0.s8 %v813
    %v815 = vlaneseq
    %v816 = vshrl.u32 %v815, 7
    %v817 = vsub.s32 %v814, %v816
    %v818 = vrot.slane %v780, %v817
    %v820 = vunpack.c.l.s4 1966171168
    %v821 = vunpack.c.0.s8 %v820
    %v822 = vlaneseq
    %v823 = vshrl.u32 %v822, 7
    %v824 = vsub.s32 %v821, %v823
    %v825 = vrot.slane %v782, %v824
    %v827 = vunpack.c.l.s4 1966171168
    %v828 = vunpack.c.0.s8 %v827
    %v829 = vlaneseq
    %v830 = vshrl.u32 %v829, 7
    %v831 = vsub.s32 %v828, %v830
    %v832 = vrot.slane %v781, %v831
    %v834 = vunpack.c.l.s4 1966171168
    %v835 = vunpack.c.0.s8 %v834
    %v836 = vlaneseq
    %v837 = vshrl.u32 %v836, 7
    %v838 = vsub.s32 %v835, %v837
    %v839 = vrot.slane %v783, %v838
    %v840 = vcombine.low %v790, %v818
    %v841 = vcombine.high %v790, %v818
    %v842 = vcombine.low %v797, %v825
    %v843 = vcombine.high %v797, %v825
    %v844 = vcombine.low %v804, %v832
    %v845 = vcombine.high %v804, %v832
    %v846 = vcombine.low %v811, %v839
    %v847 = vcombine.high %v811, %v839
    %v848 = vcombine.low %v152, %v154
    %v849 = vcombine.high %v152, %v154
    %v850 = vcombine.low %v156, %v158
    %v851 = vcombine.high %v156, %v158
    %v852 = vcombine.low %v160, %v162
    %v853 = vcombine.high %v160, %v162
    %v854 = vcombine.low %v164, %v166
    %v855 = vcombine.high %v164, %v166
    %v857 = vunpack.c.l.s4 1966171168
    %v858 = vunpack.c.0.s8 %v857
    %v859 = vlaneseq
    %v860 = vshrl.u32 %v859, 7
    %v861 = vsub.s32 %v858, %v860
    %v862 = vrot.slane %v848, %v861
    %v864 = vunpack.c.l.s4 1966171168
    %v865 = vunpack.c.0.s8 %v864
    %v866 = vlaneseq
    %v867 = vshrl.u32 %v866, 7
    %v868 = vsub.s32 %v865, %v867
    %v869 = vrot.slane %v849, %v868
    %v871 = vunpack.c.l.s4 1966171168
    %v872 = vunpack.c.0.s8 %v871
    %v873 = vlaneseq
    %v874 = vshrl.u32 %v873, 7
    %v875 = vsub.s32 %v872, %v874
    %v876 = vrot.slane %v850, %v875
    %v878 = vunpack.c.l.s4 1966171168
    %v879 = vunpack.c.0.s8 %v878
    %v880 = vlaneseq
    %v881 = vshrl.u32 %v880, 7
    %v882 = vsub.s32 %v879, %v881
    %v883 = vrot.slane %v851, %v882
    %v885 = vunpack.c.l.s4 1966171168
    %v886 = vunpack.c.0.s8 %v885
    %v887 = vlaneseq
    %v888 = vshrl.u32 %v887, 7
    %v889 = vsub.s32 %v886, %v888
    %v890 = vrot.slane %v852, %v889
    %v892 = vunpack.c.l.s4 1966171168
    %v893 = vunpack.c.0.s8 %v892
    %v894 = vlaneseq
    %v895 = vshrl.u32 %v894, 7
    %v896 = vsub.s32 %v893, %v895
    %v897 = vrot.slane %v853, %v896
    %v899 = vunpack.c.l.s4 1966171168
    %v900 = vunpack.c.0.s8 %v899
    %v901 = vlaneseq
    %v902 = vshrl.u32 %v901, 7
    %v903 = vsub.s32 %v900, %v902
    %v904 = vrot.slane %v854, %v903
    %v906 = vunpack.c.l.s4 1966171168
    %v907 = vunpack.c.0.s8 %v906
    %v908 = vlaneseq
    %v909 = vshrl.u32 %v908, 7
    %v910 = vsub.s32 %v907, %v909
    %v911 = vrot.slane %v855, %v910
    %v912 = vcombine.low %v862, %v876
    %v913 = vcombine.high %v862, %v876
    %v914 = vcombine.low %v869, %v883
    %v915 = vcombine.high %v869, %v883
    %v916 = vcombine.low %v890, %v904
    %v917 = vcombine.high %v890, %v904
    %v918 = vcombine.low %v897, %v911
    %v919 = vcombine.high %v897, %v911
    %v921 = vunpack.c.l.s4 1966171168
    %v922 = vunpack.c.0.s8 %v921
    %v923 = vlaneseq
    %v924 = vshrl.u32 %v923, 7
    %v925 = vsub.s32 %v922, %v924
    %v926 = vrot.slane %v912, %v925
    %v928 = vunpack.c.l.s4 1966171168
    %v929 = vunpack.c.0.s8 %v928
    %v930 = vlaneseq
    %v931 = vshrl.u32 %v930, 7
    %v932 = vsub.s32 %v929, %v931
    %v933 = vrot.slane %v914, %v932
    %v935 = vunpack.c.l.s4 1966171168
    %v936 = vunpack.c.0.s8 %v935
    %v937 = vlaneseq
    %v938 = vshrl.u32 %v937, 7
    %v939 = vsub.s32 %v936, %v938
    %v940 = vrot.slane %v913, %v939
    %v942 = vunpack.c.l.s4 1966171168
    %v943 = vunpack.c.0.s8 %v942
    %v944 = vlaneseq
    %v945 = vshrl.u32 %v944, 7
    %v946 = vsub.s32 %v943, %v945
    %v947 = vrot.slane %v915, %v946
    %v949 = vunpack.c.l.s4 1966171168
    %v950 = vunpack.c.0.s8 %v949
    %v951 = vlaneseq
    %v952 = vshrl.u32 %v951, 7
    %v953 = vsub.s32 %v950, %v952
    %v954 = vrot.slane %v916, %v953
    %v956 = vunpack.c.l.s4 1966171168
    %v957 = vunpack.c.0.s8 %v956
    %v958 = vlaneseq
    %v959 = vshrl.u32 %v958, 7
    %v960 = vsub.s32 %v957, %v959
    %v961 = vrot.slane %v918, %v960
    %v963 = vunpack.c.l.s4 1966171168
    %v964 = vunpack.c.0.s8 %v963
    %v965 = vlaneseq
    %v966 = vshrl.u32 %v965, 7
    %v967 = vsub.s32 %v964, %v966
    %v968 = vrot.slane %v917, %v967
    %v970 = vunpack.c.l.s4 1966171168
    %v971 = vunpack.c.0.s8 %v970
    %v972 = vlaneseq
    %v973 = vshrl.u32 %v972, 7
    %v974 = vsub.s32 %v971, %v973
    %v975 = vrot.slane %v919, %v974
    %v976 = vcombine.low %v926, %v954
    %v977 = vcombine.high %v926, %v954
    %v978 = vcombine.low %v933, %v961
    %v979 = vcombine.high %v933, %v961
    %v980 = vcombine.low %v940, %v968
    %v981 = vcombine.high %v940, %v968
    %v982 = vcombine.low %v947, %v975
    %v983 = vcombine.high %v947, %v975
    %v1512 = vunpack.c.l.b16 %v167
    %v1513 = vunpack.c.h.b16 %v167
    %v1514 = vunpack.c.l.b16 %v168
    %v1515 = vunpack.c.l.b16 %v169
    %v1516 = vunpack.c.h.b16 %v169
    %v1517 = vunpack.c.l.b16 %v170
    %v1518 = vunpack.c.l.b16 %v171
    %v1519 = vunpack.c.h.b16 %v171
    %v1520 = vunpack.c.l.b16 %v172
    %v1521 = vunpack.c.l.b16 %v173
    %v1522 = vunpack.c.h.b16 %v173
    %v1523 = vunpack.c.l.b16 %v174
    %v1524 = vunpack.c.l.b16 %v175
    %v1525 = vunpack.c.h.b16 %v175
    %v1526 = vunpack.c.l.b16 %v176
    %v1527 = vunpack.c.l.b16 %v177
    %v1528 = vunpack.c.h.b16 %v177
    %v1529 = vunpack.c.l.b16 %v178
    %v1530 = vunpack.c.l.b16 %v179
    %v1531 = vunpack.c.h.b16 %v179
    %v1532 = vunpack.c.l.b16 %v180
    %v1533 = vunpack.c.l.b16 %v181
    %v1534 = vunpack.c.h.b16 %v181
    %v1535 = vunpack.c.l.b16 %v182
    %v1536 = vunpack.c.l.b16 %v183
    %v1537 = vunpack.c.h.b16 %v183
    %v1538 = vunpack.c.l.b16 %v184
    %v1539 = vunpack.c.l.b16 %v185
    %v1540 = vunpack.c.h.b16 %v185
    %v1541 = vunpack.c.l.b16 %v186
    %v1542 = vunpack.c.l.b16 %v187
    %v1543 = vunpack.c.h.b16 %v187
    %v1544 = vunpack.c.l.b16 %v188
    %v1545 = vunpack.c.l.b16 %v189
    %v1546 = vunpack.c.h.b16 %v189
    %v1547 = vunpack.c.l.b16 %v190
    %v1548 = vunpack.c.l.b16 %v191
    %v1549 = vunpack.c.h.b16 %v191
    %v1550 = vunpack.c.l.b16 %v192
    %v1551 = vunpack.c.l.b16 %v193
    %v1552 = vunpack.c.h.b16 %v193
    %v1553 = vunpack.c.l.b16 %v194
    %v1554 = vunpack.c.l.b16 %v195
    %v1555 = vunpack.c.h.b16 %v195
    %v1556 = vunpack.c.l.b16 %v196
    %v1557 = vunpack.c.l.b16 %v197
    %v1558 = vunpack.c.h.b16 %v197
    %v1559 = vunpack.c.l.b16 %v198
    %v1560 = vunpack.c.l.b16 %v199
    %v1561 = vunpack.c.h.b16 %v199
    %v1562 = vunpack.c.l.b16 %v200
    %v1563 = vunpack.c.l.b16 %v201
    %v1564 = vunpack.c.h.b16 %v201
    %v1565 = vunpack.c.l.b16 %v202
    %v1566 = vunpack.c.l.b16 %v203
    %v1567 = vunpack.c.h.b16 %v203
    %v1568 = vunpack.c.l.b16 %v204
    %v1569 = vunpack.c.l.b16 %v205
    %v1570 = vunpack.c.h.b16 %v205
    %v1571 = vunpack.c.l.b16 %v206
    %v1572 = vunpack.c.l.b16 %v207
    %v1573 = vunpack.c.h.b16 %v207
    %v1574 = vunpack.c.l.b16 %v208
    %v1575 = vunpack.c.l.b16 %v209
    %v1576 = vunpack.c.h.b16 %v209
    %v1577 = vunpack.c.l.b16 %v210
    %v1578 = vunpack.c.l.b16 %v211
    %v1579 = vunpack.c.h.b16 %v211
    %v1580 = vunpack.c.l.b16 %v212
    %v1581 = vunpack.c.l.b16 %v213
    %v1582 = vunpack.c.h.b16 %v213
    %v1583 = vunpack.c.l.b16 %v214
    %v1584 = vunpack.c.l.b16 %v215
    %v1585 = vunpack.c.h.b16 %v215
    %v1586 = vunpack.c.l.b16 %v216
    %v1587 = vunpack.c.l.b16 %v217
    %v1588 = vunpack.c.h.b16 %v217
    %v1589 = vunpack.c.l.b16 %v218
    %v1590 = vunpack.c.l.b16 %v219
    %v1591 = vunpack.c.h.b16 %v219
    %v1592 = vunpack.c.l.b16 %v220
    %v1593 = vunpack.c.l.b16 %v221
    %v1594 = vunpack.c.h.b16 %v221
    %v1595 = vunpack.c.l.b16 %v222
    %v1596 = vunpack.c.l.b16 %v223
    %v1597 = vunpack.c.h.b16 %v223
    %v1598 = vunpack.c.l.b16 %v224
    %v1599 = vunpack.c.l.b16 %v225
    %v1600 = vunpack.c.h.b16 %v225
    %v1601 = vunpack.c.l.b16 %v226
    %v1602 = vunpack.c.l.b16 %v227
    %v1603 = vunpack.c.h.b16 %v227
    %v1604 = vunpack.c.l.b16 %v228
    %v1605 = vunpack.c.l.b16 %v229
    %v1606 = vunpack.c.h.b16 %v229
    %v1607 = vunpack.c.l.b16 %v230
    %v1608 = vunpack.c.l.b16 %v231
    %v1609 = vunpack.c.h.b16 %v231
    %v1610 = vunpack.c.l.b16 %v232
    %v1611 = vunpack.c.l.b16 %v233
    %v1612 = vunpack.c.h.b16 %v233
    %v1613 = vunpack.c.l.b16 %v234
    %v1614 = vunpack.c.l.b16 %v235
    %v1615 = vunpack.c.h.b16 %v235
    %v1616 = vunpack.c.l.b16 %v236
    %v1617 = vunpack.c.l.b16 %v237
    %v1618 = vunpack.c.h.b16 %v237
    %v1619 = vunpack.c.l.b16 %v238
    %v1620 = vunpack.c.l.b16 %v239
    %v1621 = vunpack.c.h.b16 %v239
    %v1622 = vunpack.c.l.b16 %v240
    %v1623 = vunpack.c.l.b16 %v241
    %v1624 = vunpack.c.h.b16 %v241
    %v1625 = vunpack.c.l.b16 %v242
    %v1626 = vunpack.c.l.b16 %v243
    %v1627 = vunpack.c.h.b16 %v243
    %v1628 = vunpack.c.l.b16 %v244
    %v1629 = vunpack.c.l.b16 %v245
    %v1630 = vunpack.c.h.b16 %v245
    %v1631 = vunpack.c.l.b16 %v246
    %v1632 = vunpack.c.l.b16 %v247
    %v1633 = vunpack.c.h.b16 %v247
    %v1634 = vunpack.c.l.b16 %v248
    %v1635 = vunpack.c.l.b16 %v249
    %v1636 = vunpack.c.h.b16 %v249
    %v1637 = vunpack.c.l.b16 %v250
    %v1638 = vunpack.c.l.b16 %v251
    %v1639 = vunpack.c.h.b16 %v251
    %v1640 = vunpack.c.l.b16 %v252
    %v1641 = vunpack.c.l.b16 %v253
    %v1642 = vunpack.c.h.b16 %v253
    %v1643 = vunpack.c.l.b16 %v254
    %v1644 = vunpack.c.l.b16 %v255
    %v1645 = vunpack.c.h.b16 %v255
    %v1646 = vunpack.c.l.b16 %v256
    %v1647 = vunpack.c.l.b16 %v257
    %v1648 = vunpack.c.h.b16 %v257
    %v1649 = vunpack.c.l.b16 %v258
    %v1650 = vunpack.c.l.b16 %v259
    %v1651 = vunpack.c.h.b16 %v259
    %v1652 = vunpack.c.l.b16 %v260
    %v1653 = vunpack.c.l.b16 %v261
    %v1654 = vunpack.c.h.b16 %v261
    %v1655 = vunpack.c.l.b16 %v262
    %v1656 = vunpack.c.l.b16 %v263
    %v1657 = vunpack.c.h.b16 %v263
    %v1658 = vunpack.c.l.b16 %v264
    %v1659 = vunpack.c.l.b16 %v265
    %v1660 = vunpack.c.h.b16 %v265
    %v1661 = vunpack.c.l.b16 %v266
    %v1662 = vunpack.c.l.b16 %v267
    %v1663 = vunpack.c.h.b16 %v267
    %v1664 = vunpack.c.l.b16 %v268
    %v1665 = vunpack.c.l.b16 %v269
    %v1666 = vunpack.c.h.b16 %v269
    %v1667 = vunpack.c.l.b16 %v270
    %v1668 = vunpack.c.l.b16 %v271
    %v1669 = vunpack.c.h.b16 %v271
    %v1670 = vunpack.c.l.b16 %v272
    %v1671 = vunpack.c.l.b16 %v273
    %v1672 = vunpack.c.h.b16 %v273
    %v1673 = vunpack.c.l.b16 %v274
    %v1674 = vunpack.c.l.b16 %v275
    %v1675 = vunpack.c.h.b16 %v275
    %v1676 = vunpack.c.l.b16 %v276
    %v1677 = vunpack.c.l.b16 %v277
    %v1678 = vunpack.c.h.b16 %v277
    %v1679 = vunpack.c.l.b16 %v278
    %v1680 = vunpack.c.l.b16 %v279
    %v1681 = vunpack.c.h.b16 %v279
    %v1682 = vunpack.c.l.b16 %v280
    %v1683 = vunpack.c.l.b16 %v281
    %v1684 = vunpack.c.h.b16 %v281
    %v1685 = vunpack.c.l.b16 %v282
    %v1686 = vunpack.c.l.b16 %v283
    %v1687 = vunpack.c.h.b16 %v283
    %v1688 = vunpack.c.l.b16 %v284
    %v1689 = vunpack.c.l.b16 %v285
    %v1690 = vunpack.c.h.b16 %v285
    %v1691 = vunpack.c.l.b16 %v286
    %v1692 = vunpack.c.l.b16 %v287
    %v1693 = vunpack.c.h.b16 %v287
    %v1694 = vunpack.c.l.b16 %v288
    %v1695 = vunpack.c.l.b16 %v289
    %v1696 = vunpack.c.h.b16 %v289
    %v1697 = vunpack.c.l.b16 %v290
    %v1698 = vunpack.c.l.b16 %v291
    %v1699 = vunpack.c.h.b16 %v291
    %v1700 = vunpack.c.l.b16 %v292
    %v1701 = vunpack.c.l.b16 %v293
    %v1702 = vunpack.c.h.b16 %v293
    %v1703 = vunpack.c.l.b16 %v294
    %v1704 = vunpack.c.l.b16 %v295
    %v1705 = vunpack.c.h.b16 %v295
    %v1706 = vunpack.c.l.b16 %v296
    %v1707 = vunpack.c.l.b16 %v297
    %v1708 = vunpack.c.h.b16 %v297
    %v1709 = vunpack.c.l.b16 %v298
    %v1710 = vunpack.c.l.b16 %v299
    %v1711 = vunpack.c.h.b16 %v299
    %v1712 = vunpack.c.l.b16 %v300
    %v1713 = vunpack.c.l.b16 %v301
    %v1714 = vunpack.c.h.b16 %v301
    %v1715 = vunpack.c.l.b16 %v302
    %v1716 = vunpack.c.l.b16 %v303
    %v1717 = vunpack.c.h.b16 %v303
    %v1718 = vunpack.c.l.b16 %v304
    %v1719 = vunpack.c.l.b16 %v305
    %v1720 = vunpack.c.h.b16 %v305
    %v1721 = vunpack.c.l.b16 %v306
    %v1722 = vunpack.c.l.b16 %v307
    %v1723 = vunpack.c.h.b16 %v307
    %v1724 = vunpack.c.l.b16 %v308
    %v1725 = vunpack.c.l.b16 %v309
    %v1726 = vunpack.c.h.b16 %v309
    %v1727 = vunpack.c.l.b16 %v310
    %v1728 = vunpack.c.l.b16 %v311
    %v1729 = vunpack.c.h.b16 %v311
    %v1730 = vunpack.c.l.b16 %v312
    %v1731 = vunpack.c.l.b16 %v313
    %v1732 = vunpack.c.h.b16 %v313
    %v1733 = vunpack.c.l.b16 %v314
    %v1734 = vunpack.c.l.b16 %v315
    %v1735 = vunpack.c.h.b16 %v315
    %v1736 = vunpack.c.l.b16 %v316
    %v1737 = vunpack.c.l.b16 %v317
    %v1738 = vunpack.c.h.b16 %v317
    %v1739 = vunpack.c.l.b16 %v318
    %v1740 = vunpack.c.l.b16 %v319
    %v1741 = vunpack.c.h.b16 %v319
    %v1742 = vunpack.c.l.b16 %v320
    %v1743 = vunpack.c.l.b16 %v321
    %v1744 = vunpack.c.h.b16 %v321
    %v1745 = vunpack.c.l.b16 %v322
    %v1746 = vunpack.c.l.b16 %v323
    %v1747 = vunpack.c.h.b16 %v323
    %v1748 = vunpack.c.l.b16 %v324
    %v1749 = vunpack.c.l.b16 %v325
    %v1750 = vunpack.c.h.b16 %v325
    %v1751 = vunpack.c.l.b16 %v326
    %v1752 = vunpack.c.l.b16 %v327
    %v1753 = vunpack.c.h.b16 %v327
    %v1754 = vunpack.c.l.b16 %v328
    %v1755 = vunpack.c.l.b16 %v329
    %v1756 = vunpack.c.h.b16 %v329
    %v1757 = vunpack.c.l.b16 %v330
    %v1758 = vunpack.c.l.b16 %v331
    %v1759 = vunpack.c.h.b16 %v331
    %v1760 = vunpack.c.l.b16 %v332
    %v1761 = vunpack.c.l.b16 %v333
    %v1762 = vunpack.c.h.b16 %v333
    %v1763 = vunpack.c.l.b16 %v334
    %v1764 = vunpack.c.l.b16 %v335
    %v1765 = vunpack.c.h.b16 %v335
    %v1766 = vunpack.c.l.b16 %v336
    %v1767 = vunpack.c.l.b16 %v337
    %v1768 = vunpack.c.h.b16 %v337
    %v1769 = vunpack.c.l.b16 %v338
    %v1770 = vunpack.c.l.b16 %v339
    %v1771 = vunpack.c.h.b16 %v339
    %v1772 = vunpack.c.l.b16 %v340
    %v1773 = vunpack.c.l.b16 %v341
    %v1774 = vunpack.c.h.b16 %v341
    %v1775 = vunpack.c.l.b16 %v342
    %v1776 = vunpack.c.l.b16 %v343
    %v1777 = vunpack.c.h.b16 %v343
    %v1778 = vunpack.c.l.b16 %v344
    %v1779 = vunpack.c.l.b16 %v345
    %v1780 = vunpack.c.h.b16 %v345
    %v1781 = vunpack.c.l.b16 %v346
    %v1782 = vunpack.c.l.b16 %v347
    %v1783 = vunpack.c.h.b16 %v347
    %v1784 = vunpack.c.l.b16 %v348
    %v1785 = vunpack.c.l.b16 %v349
    %v1786 = vunpack.c.h.b16 %v349
    %v1787 = vunpack.c.l.b16 %v350
    %v1788 = vunpack.c.l.b16 %v351
    %v1789 = vunpack.c.h.b16 %v351
    %v1790 = vunpack.c.l.b16 %v352
    %v1791 = vunpack.c.l.b16 %v353
    %v1792 = vunpack.c.h.b16 %v353
    %v1793 = vunpack.c.l.b16 %v354
    %v1794 = vunpack.c.l.b16 %v355
    %v1795 = vunpack.c.h.b16 %v355
    %v1796 = vunpack.c.l.b16 %v356
    %v1797 = vunpack.c.l.b16 %v357
    %v1798 = vunpack.c.h.b16 %v357
    %v1799 = vunpack.c.l.b16 %v358
    %v1800 = vunpack.c.l.b16 %v359
    %v1801 = vunpack.c.h.b16 %v359
    %v1802 = vunpack.c.l.b16 %v360
    %v1803 = vunpack.c.l.b16 %v361
    %v1804 = vunpack.c.h.b16 %v361
    %v1805 = vunpack.c.l.b16 %v362
    %v1806 = vunpack.c.l.b16 %v363
    %v1807 = vunpack.c.h.b16 %v363
    %v1808 = vunpack.c.l.b16 %v364
    %v1809 = vunpack.c.l.b16 %v365
    %v1810 = vunpack.c.h.b16 %v365
    %v1811 = vunpack.c.l.b16 %v366
    %v1812 = vunpack.c.l.b16 %v367
    %v1813 = vunpack.c.h.b16 %v367
    %v1814 = vunpack.c.l.b16 %v368
    %v1815 = vunpack.c.l.b16 %v369
    %v1816 = vunpack.c.h.b16 %v369
    %v1817 = vunpack.c.l.b16 %v370
    %v1818 = vunpack.c.l.b16 %v371
    %v1819 = vunpack.c.h.b16 %v371
    %v1820 = vunpack.c.l.b16 %v372
    %v1821 = vunpack.c.l.b16 %v373
    %v1822 = vunpack.c.h.b16 %v373
    %v1823 = vunpack.c.l.b16 %v374
    %v1824 = vunpack.c.l.b16 %v375
    %v1825 = vunpack.c.h.b16 %v375
    %v1826 = vunpack.c.l.b16 %v376
    %v1827 = vunpack.c.l.b16 %v377
    %v1828 = vunpack.c.h.b16 %v377
    %v1829 = vunpack.c.l.b16 %v378
    %v1830 = vunpack.c.l.b16 %v379
    %v1831 = vunpack.c.h.b16 %v379
    %v1832 = vunpack.c.l.b16 %v380
    %v1833 = vunpack.c.l.b16 %v381
    %v1834 = vunpack.c.h.b16 %v381
    %v1835 = vunpack.c.l.b16 %v382
    %v1836 = vunpack.c.l.b16 %v383
    %v1837 = vunpack.c.h.b16 %v383
    %v1838 = vunpack.c.l.b16 %v384
    %v1839 = vunpack.c.l.b16 %v385
    %v1840 = vunpack.c.h.b16 %v385
    %v1841 = vunpack.c.l.b16 %v386
    %v1842 = vunpack.c.l.b16 %v387
    %v1843 = vunpack.c.h.b16 %v387
    %v1844 = vunpack.c.l.b16 %v388
    %v1845 = vunpack.c.l.b16 %v389
    %v1846 = vunpack.c.h.b16 %v389
    %v1847 = vunpack.c.l.b16 %v390
    %v1848 = vunpack.c.l.b16 %v391
    %v1849 = vunpack.c.h.b16 %v391
    %v1850 = vunpack.c.l.b16 %v392
    %v1851 = vunpack.c.l.b16 %v393
    %v1852 = vunpack.c.h.b16 %v393
    %v1853 = vunpack.c.l.b16 %v394
    %v1854 = vunpack.c.l.b16 %v395
    %v1855 = vunpack.c.h.b16 %v395
    %v1856 = vunpack.c.l.b16 %v396
    %v1857 = vunpack.c.l.b16 %v397
    %v1858 = vunpack.c.h.b16 %v397
    %v1859 = vunpack.c.l.b16 %v398
    %v1860 = vunpack.c.l.b16 %v399
    %v1861 = vunpack.c.h.b16 %v399
    %v1862 = vunpack.c.l.b16 %v400
    %v1863 = vunpack.c.l.b16 %v401
    %v1864 = vunpack.c.h.b16 %v401
    %v1865 = vunpack.c.l.b16 %v402
    %v1866 = vunpack.c.l.b16 %v403
    %v1867 = vunpack.c.h.b16 %v403
    %v1868 = vunpack.c.l.b16 %v404
    %v1869 = vunpack.c.l.b16 %v405
    %v1870 = vunpack.c.h.b16 %v405
    %v1871 = vunpack.c.l.b16 %v406
    %v1872 = vunpack.c.l.b16 %v407
    %v1873 = vunpack.c.h.b16 %v407
    %v1874 = vunpack.c.l.b16 %v408
    %v1875 = vunpack.c.l.b16 %v409
    %v1876 = vunpack.c.h.b16 %v409
    %v1877 = vunpack.c.l.b16 %v410
    %v1878 = vunpack.c.l.b16 %v411
    %v1879 = vunpack.c.h.b16 %v411
    %v1880 = vunpack.c.l.b16 %v412
    %v1881 = vunpack.c.l.b16 %v413
    %v1882 = vunpack.c.h.b16 %v413
    %v1883 = vunpack.c.l.b16 %v414
    %v1884 = vunpack.c.l.b16 %v415
    %v1885 = vunpack.c.h.b16 %v415
    %v1886 = vunpack.c.l.b16 %v416
    %v1887 = vunpack.c.l.b16 %v417
    %v1888 = vunpack.c.h.b16 %v417
    %v1889 = vunpack.c.l.b16 %v418
    %v1890 = vunpack.c.l.b16 %v419
    %v1891 = vunpack.c.h.b16 %v419
    %v1892 = vunpack.c.l.b16 %v420
    %v1893 = vunpack.c.l.b16 %v421
    %v1894 = vunpack.c.h.b16 %v421
    %v1895 = vunpack.c.l.b16 %v422
    %v1896 = vunpack.c.l.b16 %v423
    %v1897 = vunpack.c.h.b16 %v423
    %v1898 = vunpack.c.l.b16 %v424
    %v1899 = vunpack.c.l.b16 %v425
    %v1900 = vunpack.c.h.b16 %v425
    %v1901 = vunpack.c.l.b16 %v426
    %v1902 = vunpack.c.l.b16 %v427
    %v1903 = vunpack.c.h.b16 %v427
    %v1904 = vunpack.c.l.b16 %v428
    %v1905 = vunpack.c.l.b16 %v429
    %v1906 = vunpack.c.h.b16 %v429
    %v1907 = vunpack.c.l.b16 %v430
    %v1908 = vunpack.c.l.b16 %v431
    %v1909 = vunpack.c.h.b16 %v431
    %v1910 = vunpack.c.l.b16 %v432
    %v1911 = vunpack.c.l.b16 %v433
    %v1912 = vunpack.c.h.b16 %v433
    %v1913 = vunpack.c.l.b16 %v434
    %v1914 = vunpack.c.l.b16 %v435
    %v1915 = vunpack.c.h.b16 %v435
    %v1916 = vunpack.c.l.b16 %v436
    %v1917 = vunpack.c.l.b16 %v437
    %v1918 = vunpack.c.h.b16 %v437
    %v1919 = vunpack.c.l.b16 %v438
    %v1920 = vunpack.c.l.b16 %v439
    %v1921 = vunpack.c.h.b16 %v439
    %v1922 = vunpack.c.l.b16 %v440
    %v1923 = vunpack.c.l.b16 %v441
    %v1924 = vunpack.c.h.b16 %v441
    %v1925 = vunpack.c.l.b16 %v442
    %v1926 = vunpack.c.l.b16 %v443
    %v1927 = vunpack.c.h.b16 %v443
    %v1928 = vunpack.c.l.b16 %v444
    %v1929 = vunpack.c.l.b16 %v445
    %v1930 = vunpack.c.h.b16 %v445
    %v1931 = vunpack.c.l.b16 %v446
    %v1932 = vunpack.c.l.b16 %v447
    %v1933 = vunpack.c.h.b16 %v447
    %v1934 = vunpack.c.l.b16 %v448
    %v1935 = vunpack.c.l.b16 %v449
    %v1936 = vunpack.c.h.b16 %v449
    %v1937 = vunpack.c.l.b16 %v450
    %v1938 = vunpack.c.l.b16 %v451
    %v1939 = vunpack.c.h.b16 %v451
    %v1940 = vunpack.c.l.b16 %v452
    %v1941 = vunpack.c.l.b16 %v453
    %v1942 = vunpack.c.h.b16 %v453
    %v1943 = vunpack.c.l.b16 %v454
    %v1944 = vunpack.c.l.b16 %v455
    %v1945 = vunpack.c.h.b16 %v455
    %v1946 = vunpack.c.l.b16 %v456
    %v1947 = vunpack.c.l.b16 %v457
    %v1948 = vunpack.c.h.b16 %v457
    %v1949 = vunpack.c.l.b16 %v458
    %v1950 = vunpack.c.l.b16 %v459
    %v1951 = vunpack.c.h.b16 %v459
    %v1952 = vunpack.c.l.b16 %v460
    %v1953 = vunpack.c.l.b16 %v461
    %v1954 = vunpack.c.h.b16 %v461
    %v1955 = vunpack.c.l.b16 %v462
    %v1956 = vunpack.c.l.b16 %v463
    %v1957 = vunpack.c.h.b16 %v463
    %v1958 = vunpack.c.l.b16 %v464
    %v1959 = vunpack.c.l.b16 %v465
    %v1960 = vunpack.c.h.b16 %v465
    %v1961 = vunpack.c.l.b16 %v466
    %v1962 = vunpack.c.l.b16 %v467
    %v1963 = vunpack.c.h.b16 %v467
    %v1964 = vunpack.c.l.b16 %v468
    %v1965 = vunpack.c.l.b16 %v469
    %v1966 = vunpack.c.h.b16 %v469
    %v1967 = vunpack.c.l.b16 %v470
    %v1968 = vunpack.c.l.b16 %v471
    %v1969 = vunpack.c.h.b16 %v471
    %v1970 = vunpack.c.l.b16 %v472
    %v1971 = vunpack.c.l.b16 %v473
    %v1972 = vunpack.c.h.b16 %v473
    %v1973 = vunpack.c.l.b16 %v474
    %v1974 = vunpack.c.l.b16 %v475
    %v1975 = vunpack.c.h.b16 %v475
    %v1976 = vunpack.c.l.b16 %v476
    %v1977 = vunpack.c.l.b16 %v477
    %v1978 = vunpack.c.h.b16 %v477
    %v1979 = vunpack.c.l.b16 %v478
    %v1980 = vunpack.c.l.b16 %v479
    %v1981 = vunpack.c.h.b16 %v479
    %v1982 = vunpack.c.l.b16 %v480
    %v1983 = vunpack.c.l.b16 %v481
    %v1984 = vunpack.c.h.b16 %v481
    %v1985 = vunpack.c.l.b16 %v482
    %v1986 = vunpack.c.l.b16 %v483
    %v1987 = vunpack.c.h.b16 %v483
    %v1988 = vunpack.c.l.b16 %v484
    %v1989 = vunpack.c.l.b16 %v485
    %v1990 = vunpack.c.h.b16 %v485
    %v1991 = vunpack.c.l.b16 %v486
    %v1992 = vunpack.c.l.b16 %v487
    %v1993 = vunpack.c.h.b16 %v487
    %v1994 = vunpack.c.l.b16 %v488
    %v1995 = vunpack.c.l.b16 %v489
    %v1996 = vunpack.c.h.b16 %v489
    %v1997 = vunpack.c.l.b16 %v490
    %v1998 = vunpack.c.l.b16 %v491
    %v1999 = vunpack.c.h.b16 %v491
    %v2000 = vunpack.c.l.b16 %v492
    %v2001 = vunpack.c.l.b16 %v493
    %v2002 = vunpack.c.h.b16 %v493
    %v2003 = vunpack.c.l.b16 %v494
    %v2004 = vunpack.c.l.b16 %v495
    %v2005 = vunpack.c.h.b16 %v495
    %v2006 = vunpack.c.l.b16 %v496
    %v2007 = vunpack.c.l.b16 %v497
    %v2008 = vunpack.c.h.b16 %v497
    %v2009 = vunpack.c.l.b16 %v498
    %v2010 = vunpack.c.l.b16 %v499
    %v2011 = vunpack.c.h.b16 %v499
    %v2012 = vunpack.c.l.b16 %v500
    %v2013 = vunpack.c.l.b16 %v501
    %v2014 = vunpack.c.h.b16 %v501
    %v2015 = vunpack.c.l.b16 %v502
    %v2016 = vunpack.c.l.b16 %v503
    %v2017 = vunpack.c.h.b16 %v503
    %v2018 = vunpack.c.l.b16 %v504
    %v2019 = vunpack.c.l.b16 %v505
    %v2020 = vunpack.c.h.b16 %v505
    %v2021 = vunpack.c.l.b16 %v506
    %v2022 = vunpack.c.l.b16 %v507
    %v2023 = vunpack.c.h.b16 %v507
    %v2024 = vunpack.c.l.b16 %v508
    %v2025 = vunpack.c.l.b16 %v509
    %v2026 = vunpack.c.h.b16 %v509
    %v2027 = vunpack.c.l.b16 %v510
    %v2028 = vunpack.c.l.b16 %v511
    %v2029 = vunpack.c.h.b16 %v511
    %v2030 = vunpack.c.l.b16 %v512
    %v2031 = vunpack.c.l.b16 %v513
    %v2032 = vunpack.c.h.b16 %v513
    %v2033 = vunpack.c.l.b16 %v514
    %v2034 = vunpack.c.l.b16 %v515
    %v2035 = vunpack.c.h.b16 %v515
    %v2036 = vunpack.c.l.b16 %v516
    %v2037 = vunpack.c.l.b16 %v517
    %v2038 = vunpack.c.h.b16 %v517
    %v2039 = vunpack.c.l.b16 %v518
    %v2040 = vunpack.c.l.b16 %v519
    %v2041 = vunpack.c.h.b16 %v519
    %v2042 = vunpack.c.l.b16 %v520
    %v2043 = vunpack.c.l.b16 %v521
    %v2044 = vunpack.c.h.b16 %v521
    %v2045 = vunpack.c.l.b16 %v522
    %v2046 = vunpack.c.l.b16 %v523
    %v2047 = vunpack.c.h.b16 %v523
    %v2048 = vunpack.c.l.b16 %v524
    %v2049 = vunpack.c.l.b16 %v525
    %v2050 = vunpack.c.h.b16 %v525
    %v2051 = vunpack.c.l.b16 %v526
    %v2052 = vunpack.c.l.b16 %v527
    %v2053 = vunpack.c.h.b16 %v527
    %v2054 = vunpack.c.l.b16 %v528
    %v2055 = vunpack.c.l.b16 %v529
    %v2056 = vunpack.c.h.b16 %v529
    %v2057 = vunpack.c.l.b16 %v530
    %v2058 = vunpack.c.l.b16 %v531
    %v2059 = vunpack.c.h.b16 %v531
    %v2060 = vunpack.c.l.b16 %v532
    %v2061 = vunpack.c.l.b16 %v533
    %v2062 = vunpack.c.h.b16 %v533
    %v2063 = vunpack.c.l.b16 %v534
    %v2064 = vunpack.c.l.b16 %v535
    %v2065 = vunpack.c.h.b16 %v535
    %v2066 = vunpack.c.l.b16 %v536
    %v2067 = vunpack.c.l.b16 %v537
    %v2068 = vunpack.c.h.b16 %v537
    %v2069 = vunpack.c.l.b16 %v538
    %v2070 = vunpack.c.l.b16 %v539
    %v2071 = vunpack.c.h.b16 %v539
    %v2072 = vunpack.c.l.b16 %v540
    %v2073 = vunpack.c.l.b16 %v541
    %v2074 = vunpack.c.h.b16 %v541
    %v2075 = vunpack.c.l.b16 %v542
    %v2076 = vunpack.c.l.b16 %v543
    %v2077 = vunpack.c.h.b16 %v543
    %v2078 = vunpack.c.l.b16 %v544
    %v2079 = vunpack.c.l.b16 %v545
    %v2080 = vunpack.c.h.b16 %v545
    %v2081 = vunpack.c.l.b16 %v546
    %v2082 = vunpack.c.l.b16 %v547
    %v2083 = vunpack.c.h.b16 %v547
    %v2084 = vunpack.c.l.b16 %v548
    %v2085 = vunpack.c.l.b16 %v549
    %v2086 = vunpack.c.h.b16 %v549
    %v2087 = vunpack.c.l.b16 %v550
    %v2088 = vunpack.c.l.b16 %v551
    %v2089 = vunpack.c.h.b16 %v551
    %v2090 = vunpack.c.l.b16 %v552
    %v2091 = vunpack.c.l.b16 %v553
    %v2092 = vunpack.c.h.b16 %v553
    %v2093 = vunpack.c.l.b16 %v554
    %v2094 = vunpack.c.l.b16 %v555
    %v2095 = vunpack.c.h.b16 %v555
    %v2096 = vunpack.c.l.b16 %v556
    %v2097 = vunpack.c.l.b16 %v557
    %v2098 = vunpack.c.h.b16 %v557
    %v2099 = vunpack.c.l.b16 %v558
    %v2100 = vunpack.c.l.b16 %v559
    %v2101 = vunpack.c.h.b16 %v559
    %v2102 = vunpack.c.l.b16 %v560
    %v2103 = vunpack.c.l.b16 %v561
    %v2104 = vunpack.c.h.b16 %v561
    %v2105 = vunpack.c.l.b16 %v562
    %v2106 = vunpack.c.l.b16 %v563
    %v2107 = vunpack.c.h.b16 %v563
    %v2108 = vunpack.c.l.b16 %v564
    %v2109 = vunpack.c.l.b16 %v565
    %v2110 = vunpack.c.h.b16 %v565
    %v2111 = vunpack.c.l.b16 %v566
    %v2112 = vunpack.c.l.b16 %v567
    %v2113 = vunpack.c.h.b16 %v567
    %v2114 = vunpack.c.l.b16 %v568
    %v2115 = vunpack.c.l.b16 %v569
    %v2116 = vunpack.c.h.b16 %v569
    %v2117 = vunpack.c.l.b16 %v570
    %v2118 = vunpack.c.l.b16 %v571
    %v2119 = vunpack.c.h.b16 %v571
    %v2120 = vunpack.c.l.b16 %v572
    %v2121 = vunpack.c.l.b16 %v573
    %v2122 = vunpack.c.h.b16 %v573
    %v2123 = vunpack.c.l.b16 %v574
    %v2124 = vunpack.c.l.b16 %v575
    %v2125 = vunpack.c.h.b16 %v575
    %v2126 = vunpack.c.l.b16 %v576
    %v2127 = vunpack.c.l.b16 %v577
    %v2128 = vunpack.c.h.b16 %v577
    %v2129 = vunpack.c.l.b16 %v578
    %v2130 = vunpack.c.l.b16 %v579
    %v2131 = vunpack.c.h.b16 %v579
    %v2132 = vunpack.c.l.b16 %v580
    %v2133 = vunpack.c.l.b16 %v581
    %v2134 = vunpack.c.h.b16 %v581
    %v2135 = vunpack.c.l.b16 %v582
    %v2136 = vunpack.c.l.b16 %v583
    %v2137 = vunpack.c.h.b16 %v583
    %v2138 = vunpack.c.l.b16 %v584
    %v2139 = vunpack.c.l.b16 %v585
    %v2140 = vunpack.c.h.b16 %v585
    %v2141 = vunpack.c.l.b16 %v586
    %v2142 = vunpack.c.l.b16 %v587
    %v2143 = vunpack.c.h.b16 %v587
    %v2144 = vunpack.c.l.b16 %v588
    %v2145 = vunpack.c.l.b16 %v589
    %v2146 = vunpack.c.h.b16 %v589
    %v2147 = vunpack.c.l.b16 %v590
    %v2148 = vunpack.c.l.b16 %v591
    %v2149 = vunpack.c.h.b16 %v591
    %v2150 = vunpack.c.l.b16 %v592
    %v2151 = vunpack.c.l.b16 %v593
    %v2152 = vunpack.c.h.b16 %v593
    %v2153 = vunpack.c.l.b16 %v594
    %v2154 = vunpack.c.l.b16 %v595
    %v2155 = vunpack.c.h.b16 %v595
    %v2156 = vunpack.c.l.b16 %v596
    %v2157 = vunpack.c.l.b16 %v597
    %v2158 = vunpack.c.h.b16 %v597
    %v2159 = vunpack.c.l.b16 %v598
    %v2160 = vunpack.c.l.b16 %v599
    %v2161 = vunpack.c.h.b16 %v599
    %v2162 = vunpack.c.l.b16 %v600
    %v2163 = vunpack.c.l.b16 %v601
    %v2164 = vunpack.c.h.b16 %v601
    %v2165 = vunpack.c.l.b16 %v602
    %v2166 = vunpack.c.l.b16 %v603
    %v2167 = vunpack.c.h.b16 %v603
    %v2168 = vunpack.c.l.b16 %v604
    %v2169 = vunpack.c.l.b16 %v605
    %v2170 = vunpack.c.h.b16 %v605
    %v2171 = vunpack.c.l.b16 %v606
    %v2172 = vunpack.c.l.b16 %v607
    %v2173 = vunpack.c.h.b16 %v607
    %v2174 = vunpack.c.l.b16 %v608
    %v2175 = vunpack.c.l.b16 %v609
    %v2176 = vunpack.c.h.b16 %v609
    %v2177 = vunpack.c.l.b16 %v610
    %v2178 = vunpack.c.l.b16 %v611
    %v2179 = vunpack.c.h.b16 %v611
    %v2180 = vunpack.c.l.b16 %v612
    %v2181 = vunpack.c.l.b16 %v613
    %v2182 = vunpack.c.h.b16 %v613
    %v2183 = vunpack.c.l.b16 %v614
    %v2184 = vunpack.c.l.b16 %v615
    %v2185 = vunpack.c.h.b16 %v615
    %v2186 = vunpack.c.l.b16 %v616
    %v2187 = vunpack.c.l.b16 %v617
    %v2188 = vunpack.c.h.b16 %v617
    %v2189 = vunpack.c.l.b16 %v618
    %v2190 = vunpack.c.l.b16 %v619
    %v2191 = vunpack.c.h.b16 %v619
    %v2192 = vunpack.c.l.b16 %v620
    %v2193 = vunpack.c.l.b16 %v621
    %v2194 = vunpack.c.h.b16 %v621
    %v2195 = vunpack.c.l.b16 %v622
    %v2196 = vunpack.c.l.b16 %v623
    %v2197 = vunpack.c.h.b16 %v623
    %v2198 = vunpack.c.l.b16 %v624
    %v2199 = vunpack.c.l.b16 %v625
    %v2200 = vunpack.c.h.b16 %v625
    %v2201 = vunpack.c.l.b16 %v626
    %v2202 = vunpack.c.l.b16 %v627
    %v2203 = vunpack.c.h.b16 %v627
    %v2204 = vunpack.c.l.b16 %v628
    %v2205 = vunpack.c.l.b16 %v629
    %v2206 = vunpack.c.h.b16 %v629
    %v2207 = vunpack.c.l.b16 %v630
    %v2208 = vunpack.c.l.b16 %v631
    %v2209 = vunpack.c.h.b16 %v631
    %v2210 = vunpack.c.l.b16 %v632
    %v2211 = vunpack.c.l.b16 %v633
    %v2212 = vunpack.c.h.b16 %v633
    %v2213 = vunpack.c.l.b16 %v634
    %v2214 = vunpack.c.l.b16 %v635
    %v2215 = vunpack.c.h.b16 %v635
    %v2216 = vunpack.c.l.b16 %v636
    %v2217 = vunpack.c.l.b16 %v637
    %v2218 = vunpack.c.h.b16 %v637
    %v2219 = vunpack.c.l.b16 %v638
    %v2220 = vunpack.c.l.b16 %v639
    %v2221 = vunpack.c.h.b16 %v639
    %v2222 = vunpack.c.l.b16 %v640
    %v2223 = vunpack.c.l.b16 %v641
    %v2224 = vunpack.c.h.b16 %v641
    %v2225 = vunpack.c.l.b16 %v642
    %v2226 = vunpack.c.l.b16 %v643
    %v2227 = vunpack.c.h.b16 %v643
    %v2228 = vunpack.c.l.b16 %v644
    %v2229 = vunpack.c.l.b16 %v645
    %v2230 = vunpack.c.h.b16 %v645
    %v2231 = vunpack.c.l.b16 %v646
    %v2232 = vunpack.c.l.b16 %v647
    %v2233 = vunpack.c.h.b16 %v647
    %v2234 = vunpack.c.l.b16 %v648
    %v2235 = vunpack.c.l.b16 %v649
    %v2236 = vunpack.c.h.b16 %v649
    %v2237 = vunpack.c.l.b16 %v650
    %v2238 = vunpack.c.l.b16 %v651
    %v2239 = vunpack.c.h.b16 %v651
    %v2240 = vunpack.c.l.b16 %v652
    %v2241 = vunpack.c.l.b16 %v653
    %v2242 = vunpack.c.h.b16 %v653
    %v2243 = vunpack.c.l.b16 %v654
    %v2244 = vunpack.c.l.b16 %v655
    %v2245 = vunpack.c.h.b16 %v655
    %v2246 = vunpack.c.l.b16 %v656
    %v2247 = vunpack.c.l.b16 %v657
    %v2248 = vunpack.c.h.b16 %v657
    %v2249 = vunpack.c.l.b16 %v658
    %v2250 = vunpack.c.l.b16 %v659
    %v2251 = vunpack.c.h.b16 %v659
    %v2252 = vunpack.c.l.b16 %v660
    %v2253 = vunpack.c.l.b16 %v661
    %v2254 = vunpack.c.h.b16 %v661
    %v2255 = vunpack.c.l.b16 %v662
    %v2256 = vunpack.c.l.b16 %v663
    %v2257 = vunpack.c.h.b16 %v663
    %v2258 = vunpack.c.l.b16 %v664
    %v2259 = vunpack.c.l.b16 %v665
    %v2260 = vunpack.c.h.b16 %v665
    %v2261 = vunpack.c.l.b16 %v666
    %v2262 = vunpack.c.l.b16 %v667
    %v2263 = vunpack.c.h.b16 %v667
    %v2264 = vunpack.c.l.b16 %v668
    %v2265 = vunpack.c.l.b16 %v669
    %v2266 = vunpack.c.h.b16 %v669
    %v2267 = vunpack.c.l.b16 %v670
    %v2268 = vunpack.c.l.b16 %v671
    %v2269 = vunpack.c.h.b16 %v671
    %v2270 = vunpack.c.l.b16 %v672
    %v2271 = vunpack.c.l.b16 %v673
    %v2272 = vunpack.c.h.b16 %v673
    %v2273 = vunpack.c.l.b16 %v674
    %v2274 = vunpack.c.l.b16 %v675
    %v2275 = vunpack.c.h.b16 %v675
    %v2276 = vunpack.c.l.b16 %v676
    %v2277 = vunpack.c.l.b16 %v677
    %v2278 = vunpack.c.h.b16 %v677
    %v2279 = vunpack.c.l.b16 %v678
    %v2280 = vpack.c.b16 %v1515, %v1512
    %v2281 = vpack.c.b16 %v1516, %v1513
    %v2282 = vpack.c.b16 %v1517, %v1514
    %v2283 = vpack.c.b16 %v1521, %v1518
    %v2284 = vpack.c.b16 %v1522, %v1519
    %v2285 = vpack.c.b16 %v1523, %v1520
    %v2286 = vpack.c.b16 %v1527, %v1524
    %v2287 = vpack.c.b16 %v1528, %v1525
    %v2288 = vpack.c.b16 %v1529, %v1526
    %v2289 = vpack.c.b16 %v1533, %v1530
    %v2290 = vpack.c.b16 %v1534, %v1531
    %v2291 = vpack.c.b16 %v1535, %v1532
    %v2292 = vpack.c.b16 %v1539, %v1536
    %v2293 = vpack.c.b16 %v1540, %v1537
    %v2294 = vpack.c.b16 %v1541, %v1538
    %v2295 = vpack.c.b16 %v1545, %v1542
    %v2296 = vpack.c.b16 %v1546, %v1543
    %v2297 = vpack.c.b16 %v1547, %v1544
    %v2298 = vpack.c.b16 %v1551, %v1548
    %v2299 = vpack.c.b16 %v1552, %v1549
    %v2300 = vpack.c.b16 %v1553, %v1550
    %v2301 = vpack.c.b16 %v1557, %v1554
    %v2302 = vpack.c.b16 %v1558, %v1555
    %v2303 = vpack.c.b16 %v1559, %v1556
    %v2304 = vpack.c.b16 %v1563, %v1560
    %v2305 = vpack.c.b16 %v1564, %v1561
    %v2306 = vpack.c.b16 %v1565, %v1562
    %v2307 = vpack.c.b16 %v1569, %v1566
    %v2308 = vpack.c.b16 %v1570, %v1567
    %v2309 = vpack.c.b16 %v1571, %v1568
    %v2310 = vpack.c.b16 %v1575, %v1572
    %v2311 = vpack.c.b16 %v1576, %v1573
    %v2312 = vpack.c.b16 %v1577, %v1574
    %v2313 = vpack.c.b16 %v1581, %v1578
    %v2314 = vpack.c.b16 %v1582, %v1579
    %v2315 = vpack.c.b16 %v1583, %v1580
    %v2316 = vpack.c.b16 %v1587, %v1584
    %v2317 = vpack.c.b16 %v1588, %v1585
    %v2318 = vpack.c.b16 %v1589, %v1586
    %v2319 = vpack.c.b16 %v1593, %v1590
    %v2320 = vpack.c.b16 %v1594, %v1591
    %v2321 = vpack.c.b16 %v1595, %v1592
    %v2322 = vpack.c.b16 %v1599, %v1596
    %v2323 = vpack.c.b16 %v1600, %v1597
    %v2324 = vpack.c.b16 %v1601, %v1598
    %v2325 = vpack.c.b16 %v1605, %v1602
    %v2326 = vpack.c.b16 %v1606, %v1603
    %v2327 = vpack.c.b16 %v1607, %v1604
    %v2328 = vpack.c.b16 %v1611, %v1608
    %v2329 = vpack.c.b16 %v1612, %v1609
    %v2330 = vpack.c.b16 %v1613, %v1610
    %v2331 = vpack.c.b16 %v1617, %v1614
    %v2332 = vpack.c.b16 %v1618, %v1615
    %v2333 = vpack.c.b16 %v1619, %v1616
    %v2334 = vpack.c.b16 %v1623, %v1620
    %v2335 = vpack.c.b16 %v1624, %v1621
    %v2336 = vpack.c.b16 %v1625, %v1622
    %v2337 = vpack.c.b16 %v1629, %v1626
    %v2338 = vpack.c.b16 %v1630, %v1627
    %v2339 = vpack.c.b16 %v1631, %v1628
    %v2340 = vpack.c.b16 %v1635, %v1632
    %v2341 = vpack.c.b16 %v1636, %v1633
    %v2342 = vpack.c.b16 %v1637, %v1634
    %v2343 = vpack.c.b16 %v1641, %v1638
    %v2344 = vpack.c.b16 %v1642, %v1639
    %v2345 = vpack.c.b16 %v1643, %v1640
    %v2346 = vpack.c.b16 %v1647, %v1644
    %v2347 = vpack.c.b16 %v1648, %v1645
    %v2348 = vpack.c.b16 %v1649, %v1646
    %v2349 = vpack.c.b16 %v1653, %v1650
    %v2350 = vpack.c.b16 %v1654, %v1651
    %v2351 = vpack.c.b16 %v1655, %v1652
    %v2352 = vpack.c.b16 %v1659, %v1656
    %v2353 = vpack.c.b16 %v1660, %v1657
    %v2354 = vpack.c.b16 %v1661, %v1658
    %v2355 = vpack.c.b16 %v1665, %v1662
    %v2356 = vpack.c.b16 %v1666, %v1663
    %v2357 = vpack.c.b16 %v1667, %v1664
    %v2358 = vpack.c.b16 %v1671, %v1668
    %v2359 = vpack.c.b16 %v1672, %v1669
    %v2360 = vpack.c.b16 %v1673, %v1670
    %v2361 = vpack.c.b16 %v1677, %v1674
    %v2362 = vpack.c.b16 %v1678, %v1675
    %v2363 = vpack.c.b16 %v1679, %v1676
    %v2364 = vpack.c.b16 %v1683, %v1680
    %v2365 = vpack.c.b16 %v1684, %v1681
    %v2366 = vpack.c.b16 %v1685, %v1682
    %v2367 = vpack.c.b16 %v1689, %v1686
    %v2368 = vpack.c.b16 %v1690, %v1687
    %v2369 = vpack.c.b16 %v1691, %v1688
    %v2370 = vpack.c.b16 %v1695, %v1692
    %v2371 = vpack.c.b16 %v1696, %v1693
    %v2372 = vpack.c.b16 %v1697, %v1694
    %v2373 = vpack.c.b16 %v1701, %v1698
    %v2374 = vpack.c.b16 %v1702, %v1699
    %v2375 = vpack.c.b16 %v1703, %v1700
    %v2376 = vpack.c.b16 %v1707, %v1704
    %v2377 = vpack.c.b16 %v1708, %v1705
    %v2378 = vpack.c.b16 %v1709, %v1706
    %v2379 = vpack.c.b16 %v1713, %v1710
    %v2380 = vpack.c.b16 %v1714, %v1711
    %v2381 = vpack.c.b16 %v1715, %v1712
    %v2382 = vpack.c.b16 %v1719, %v1716
    %v2383 = vpack.c.b16 %v1720, %v1717
    %v2384 = vpack.c.b16 %v1721, %v1718
    %v2385 = vpack.c.b16 %v1725, %v1722
    %v2386 = vpack.c.b16 %v1726, %v1723
    %v2387 = vpack.c.b16 %v1727, %v1724
    %v2388 = vpack.c.b16 %v1731, %v1728
    %v2389 = vpack.c.b16 %v1732, %v1729
    %v2390 = vpack.c.b16 %v1733, %v1730
    %v2391 = vpack.c.b16 %v1737, %v1734
    %v2392 = vpack.c.b16 %v1738, %v1735
    %v2393 = vpack.c.b16 %v1739, %v1736
    %v2394 = vpack.c.b16 %v1743, %v1740
    %v2395 = vpack.c.b16 %v1744, %v1741
    %v2396 = vpack.c.b16 %v1745, %v1742
    %v2397 = vpack.c.b16 %v1749, %v1746
    %v2398 = vpack.c.b16 %v1750, %v1747
    %v2399 = vpack.c.b16 %v1751, %v1748
    %v2400 = vpack.c.b16 %v1755, %v1752
    %v2401 = vpack.c.b16 %v1756, %v1753
    %v2402 = vpack.c.b16 %v1757, %v1754
    %v2403 = vpack.c.b16 %v1761, %v1758
    %v2404 = vpack.c.b16 %v1762, %v1759
    %v2405 = vpack.c.b16 %v1763, %v1760
    %v2406 = vpack.c.b16 %v1767, %v1764
    %v2407 = vpack.c.b16 %v1768, %v1765
    %v2408 = vpack.c.b16 %v1769, %v1766
    %v2409 = vpack.c.b16 %v1773, %v1770
    %v2410 = vpack.c.b16 %v1774, %v1771
    %v2411 = vpack.c.b16 %v1775, %v1772
    %v2412 = vpack.c.b16 %v1779, %v1776
    %v2413 = vpack.c.b16 %v1780, %v1777
    %v2414 = vpack.c.b16 %v1781, %v1778
    %v2415 = vpack.c.b16 %v1785, %v1782
    %v2416 = vpack.c.b16 %v1786, %v1783
    %v2417 = vpack.c.b16 %v1787, %v1784
    %v2418 = vpack.c.b16 %v1791, %v1788
    %v2419 = vpack.c.b16 %v1792, %v1789
    %v2420 = vpack.c.b16 %v1793, %v1790
    %v2421 = vpack.c.b16 %v1797, %v1794
    %v2422 = vpack.c.b16 %v1798, %v1795
    %v2423 = vpack.c.b16 %v1799, %v1796
    %v2424 = vpack.c.b16 %v1803, %v1800
    %v2425 = vpack.c.b16 %v1804, %v1801
    %v2426 = vpack.c.b16 %v1805, %v1802
    %v2427 = vpack.c.b16 %v1809, %v1806
    %v2428 = vpack.c.b16 %v1810, %v1807
    %v2429 = vpack.c.b16 %v1811, %v1808
    %v2430 = vpack.c.b16 %v1815, %v1812
    %v2431 = vpack.c.b16 %v1816, %v1813
    %v2432 = vpack.c.b16 %v1817, %v1814
    %v2433 = vpack.c.b16 %v1821, %v1818
    %v2434 = vpack.c.b16 %v1822, %v1819
    %v2435 = vpack.c.b16 %v1823, %v1820
    %v2436 = vpack.c.b16 %v1827, %v1824
    %v2437 = vpack.c.b16 %v1828, %v1825
    %v2438 = vpack.c.b16 %v1829, %v1826
    %v2439 = vpack.c.b16 %v1833, %v1830
    %v2440 = vpack.c.b16 %v1834, %v1831
    %v2441 = vpack.c.b16 %v1835, %v1832
    %v2442 = vpack.c.b16 %v1839, %v1836
    %v2443 = vpack.c.b16 %v1840, %v1837
    %v2444 = vpack.c.b16 %v1841, %v1838
    %v2445 = vpack.c.b16 %v1845, %v1842
    %v2446 = vpack.c.b16 %v1846, %v1843
    %v2447 = vpack.c.b16 %v1847, %v1844
    %v2448 = vpack.c.b16 %v1851, %v1848
    %v2449 = vpack.c.b16 %v1852, %v1849
    %v2450 = vpack.c.b16 %v1853, %v1850
    %v2451 = vpack.c.b16 %v1857, %v1854
    %v2452 = vpack.c.b16 %v1858, %v1855
    %v2453 = vpack.c.b16 %v1859, %v1856
    %v2454 = vpack.c.b16 %v1863, %v1860
    %v2455 = vpack.c.b16 %v1864, %v1861
    %v2456 = vpack.c.b16 %v1865, %v1862
    %v2457 = vpack.c.b16 %v1869, %v1866
    %v2458 = vpack.c.b16 %v1870, %v1867
    %v2459 = vpack.c.b16 %v1871, %v1868
    %v2460 = vpack.c.b16 %v1875, %v1872
    %v2461 = vpack.c.b16 %v1876, %v1873
    %v2462 = vpack.c.b16 %v1877, %v1874
    %v2463 = vpack.c.b16 %v1881, %v1878
    %v2464 = vpack.c.b16 %v1882, %v1879
    %v2465 = vpack.c.b16 %v1883, %v1880
    %v2466 = vpack.c.b16 %v1887, %v1884
    %v2467 = vpack.c.b16 %v1888, %v1885
    %v2468 = vpack.c.b16 %v1889, %v1886
    %v2469 = vpack.c.b16 %v1893, %v1890
    %v2470 = vpack.c.b16 %v1894, %v1891
    %v2471 = vpack.c.b16 %v1895, %v1892
    %v2472 = vpack.c.b16 %v1899, %v1896
    %v2473 = vpack.c.b16 %v1900, %v1897
    %v2474 = vpack.c.b16 %v1901, %v1898
    %v2475 = vpack.c.b16 %v1905, %v1902
    %v2476 = vpack.c.b16 %v1906, %v1903
    %v2477 = vpack.c.b16 %v1907, %v1904
    %v2478 = vpack.c.b16 %v1911, %v1908
    %v2479 = vpack.c.b16 %v1912, %v1909
    %v2480 = vpack.c.b16 %v1913, %v1910
    %v2481 = vpack.c.b16 %v1917, %v1914
    %v2482 = vpack.c.b16 %v1918, %v1915
    %v2483 = vpack.c.b16 %v1919, %v1916
    %v2484 = vpack.c.b16 %v1923, %v1920
    %v2485 = vpack.c.b16 %v1924, %v1921
    %v2486 = vpack.c.b16 %v1925, %v1922
    %v2487 = vpack.c.b16 %v1929, %v1926
    %v2488 = vpack.c.b16 %v1930, %v1927
    %v2489 = vpack.c.b16 %v1931, %v1928
    %v2490 = vpack.c.b16 %v1935, %v1932
    %v2491 = vpack.c.b16 %v1936, %v1933
    %v2492 = vpack.c.b16 %v1937, %v1934
    %v2493 = vpack.c.b16 %v1941, %v1938
    %v2494 = vpack.c.b16 %v1942, %v1939
    %v2495 = vpack.c.b16 %v1943, %v1940
    %v2496 = vpack.c.b16 %v1947, %v1944
    %v2497 = vpack.c.b16 %v1948, %v1945
    %v2498 = vpack.c.b16 %v1949, %v1946
    %v2499 = vpack.c.b16 %v1953, %v1950
    %v2500 = vpack.c.b16 %v1954, %v1951
    %v2501 = vpack.c.b16 %v1955, %v1952
    %v2502 = vpack.c.b16 %v1959, %v1956
    %v2503 = vpack.c.b16 %v1960, %v1957
    %v2504 = vpack.c.b16 %v1961, %v1958
    %v2505 = vpack.c.b16 %v1965, %v1962
    %v2506 = vpack.c.b16 %v1966, %v1963
    %v2507 = vpack.c.b16 %v1967, %v1964
    %v2508 = vpack.c.b16 %v1971, %v1968
    %v2509 = vpack.c.b16 %v1972, %v1969
    %v2510 = vpack.c.b16 %v1973, %v1970
    %v2511 = vpack.c.b16 %v1977, %v1974
    %v2512 = vpack.c.b16 %v1978, %v1975
    %v2513 = vpack.c.b16 %v1979, %v1976
    %v2514 = vpack.c.b16 %v1983, %v1980
    %v2515 = vpack.c.b16 %v1984, %v1981
    %v2516 = vpack.c.b16 %v1985, %v1982
    %v2517 = vpack.c.b16 %v1989, %v1986
    %v2518 = vpack.c.b16 %v1990, %v1987
    %v2519 = vpack.c.b16 %v1991, %v1988
    %v2520 = vpack.c.b16 %v1995, %v1992
    %v2521 = vpack.c.b16 %v1996, %v1993
    %v2522 = vpack.c.b16 %v1997, %v1994
    %v2523 = vpack.c.b16 %v2001, %v1998
    %v2524 = vpack.c.b16 %v2002, %v1999
    %v2525 = vpack.c.b16 %v2003, %v2000
    %v2526 = vpack.c.b16 %v2007, %v2004
    %v2527 = vpack.c.b16 %v2008, %v2005
    %v2528 = vpack.c.b16 %v2009, %v2006
    %v2529 = vpack.c.b16 %v2013, %v2010
    %v2530 = vpack.c.b16 %v2014, %v2011
    %v2531 = vpack.c.b16 %v2015, %v2012
    %v2532 = vpack.c.b16 %v2019, %v2016
    %v2533 = vpack.c.b16 %v2020, %v2017
    %v2534 = vpack.c.b16 %v2021, %v2018
    %v2535 = vpack.c.b16 %v2025, %v2022
    %v2536 = vpack.c.b16 %v2026, %v2023
    %v2537 = vpack.c.b16 %v2027, %v2024
    %v2538 = vpack.c.b16 %v2031, %v2028
    %v2539 = vpack.c.b16 %v2032, %v2029
    %v2540 = vpack.c.b16 %v2033, %v2030
    %v2541 = vpack.c.b16 %v2037, %v2034
    %v2542 = vpack.c.b16 %v2038, %v2035
    %v2543 = vpack.c.b16 %v2039, %v2036
    %v2544 = vpack.c.b16 %v2043, %v2040
    %v2545 = vpack.c.b16 %v2044, %v2041
    %v2546 = vpack.c.b16 %v2045, %v2042
    %v2547 = vpack.c.b16 %v2049, %v2046
    %v2548 = vpack.c.b16 %v2050, %v2047
    %v2549 = vpack.c.b16 %v2051, %v2048
    %v2550 = vpack.c.b16 %v2055, %v2052
    %v2551 = vpack.c.b16 %v2056, %v2053
    %v2552 = vpack.c.b16 %v2057, %v2054
    %v2553 = vpack.c.b16 %v2061, %v2058
    %v2554 = vpack.c.b16 %v2062, %v2059
    %v2555 = vpack.c.b16 %v2063, %v2060
    %v2556 = vpack.c.b16 %v2067, %v2064
    %v2557 = vpack.c.b16 %v2068, %v2065
    %v2558 = vpack.c.b16 %v2069, %v2066
    %v2559 = vpack.c.b16 %v2073, %v2070
    %v2560 = vpack.c.b16 %v2074, %v2071
    %v2561 = vpack.c.b16 %v2075, %v2072
    %v2562 = vpack.c.b16 %v2079, %v2076
    %v2563 = vpack.c.b16 %v2080, %v2077
    %v2564 = vpack.c.b16 %v2081, %v2078
    %v2565 = vpack.c.b16 %v2085, %v2082
    %v2566 = vpack.c.b16 %v2086, %v2083
    %v2567 = vpack.c.b16 %v2087, %v2084
    %v2568 = vpack.c.b16 %v2091, %v2088
    %v2569 = vpack.c.b16 %v2092, %v2089
    %v2570 = vpack.c.b16 %v2093, %v2090
    %v2571 = vpack.c.b16 %v2097, %v2094
    %v2572 = vpack.c.b16 %v2098, %v2095
    %v2573 = vpack.c.b16 %v2099, %v2096
    %v2574 = vpack.c.b16 %v2103, %v2100
    %v2575 = vpack.c.b16 %v2104, %v2101
    %v2576 = vpack.c.b16 %v2105, %v2102
    %v2577 = vpack.c.b16 %v2109, %v2106
    %v2578 = vpack.c.b16 %v2110, %v2107
    %v2579 = vpack.c.b16 %v2111, %v2108
    %v2580 = vpack.c.b16 %v2115, %v2112
    %v2581 = vpack.c.b16 %v2116, %v2113
    %v2582 = vpack.c.b16 %v2117, %v2114
    %v2583 = vpack.c.b16 %v2121, %v2118
    %v2584 = vpack.c.b16 %v2122, %v2119
    %v2585 = vpack.c.b16 %v2123, %v2120
    %v2586 = vpack.c.b16 %v2127, %v2124
    %v2587 = vpack.c.b16 %v2128, %v2125
    %v2588 = vpack.c.b16 %v2129, %v2126
    %v2589 = vpack.c.b16 %v2133, %v2130
    %v2590 = vpack.c.b16 %v2134, %v2131
    %v2591 = vpack.c.b16 %v2135, %v2132
    %v2592 = vpack.c.b16 %v2139, %v2136
    %v2593 = vpack.c.b16 %v2140, %v2137
    %v2594 = vpack.c.b16 %v2141, %v2138
    %v2595 = vpack.c.b16 %v2145, %v2142
    %v2596 = vpack.c.b16 %v2146, %v2143
    %v2597 = vpack.c.b16 %v2147, %v2144
    %v2598 = vpack.c.b16 %v2151, %v2148
    %v2599 = vpack.c.b16 %v2152, %v2149
    %v2600 = vpack.c.b16 %v2153, %v2150
    %v2601 = vpack.c.b16 %v2157, %v2154
    %v2602 = vpack.c.b16 %v2158, %v2155
    %v2603 = vpack.c.b16 %v2159, %v2156
    %v2604 = vpack.c.b16 %v2163, %v2160
    %v2605 = vpack.c.b16 %v2164, %v2161
    %v2606 = vpack.c.b16 %v2165, %v2162
    %v2607 = vpack.c.b16 %v2169, %v2166
    %v2608 = vpack.c.b16 %v2170, %v2167
    %v2609 = vpack.c.b16 %v2171, %v2168
    %v2610 = vpack.c.b16 %v2175, %v2172
    %v2611 = vpack.c.b16 %v2176, %v2173
    %v2612 = vpack.c.b16 %v2177, %v2174
    %v2613 = vpack.c.b16 %v2181, %v2178
    %v2614 = vpack.c.b16 %v2182, %v2179
    %v2615 = vpack.c.b16 %v2183, %v2180
    %v2616 = vpack.c.b16 %v2187, %v2184
    %v2617 = vpack.c.b16 %v2188, %v2185
    %v2618 = vpack.c.b16 %v2189, %v2186
    %v2619 = vpack.c.b16 %v2193, %v2190
    %v2620 = vpack.c.b16 %v2194, %v2191
    %v2621 = vpack.c.b16 %v2195, %v2192
    %v2622 = vpack.c.b16 %v2199, %v2196
    %v2623 = vpack.c.b16 %v2200, %v2197
    %v2624 = vpack.c.b16 %v2201, %v2198
    %v2625 = vpack.c.b16 %v2205, %v2202
    %v2626 = vpack.c.b16 %v2206, %v2203
    %v2627 = vpack.c.b16 %v2207, %v2204
    %v2628 = vpack.c.b16 %v2211, %v2208
    %v2629 = vpack.c.b16 %v2212, %v2209
    %v2630 = vpack.c.b16 %v2213, %v2210
    %v2631 = vpack.c.b16 %v2217, %v2214
    %v2632 = vpack.c.b16 %v2218, %v2215
    %v2633 = vpack.c.b16 %v2219, %v2216
    %v2634 = vpack.c.b16 %v2223, %v2220
    %v2635 = vpack.c.b16 %v2224, %v2221
    %v2636 = vpack.c.b16 %v2225, %v2222
    %v2637 = vpack.c.b16 %v2229, %v2226
    %v2638 = vpack.c.b16 %v2230, %v2227
    %v2639 = vpack.c.b16 %v2231, %v2228
    %v2640 = vpack.c.b16 %v2235, %v2232
    %v2641 = vpack.c.b16 %v2236, %v2233
    %v2642 = vpack.c.b16 %v2237, %v2234
    %v2643 = vpack.c.b16 %v2241, %v2238
    %v2644 = vpack.c.b16 %v2242, %v2239
    %v2645 = vpack.c.b16 %v2243, %v2240
    %v2646 = vpack.c.b16 %v2247, %v2244
    %v2647 = vpack.c.b16 %v2248, %v2245
    %v2648 = vpack.c.b16 %v2249, %v2246
    %v2649 = vpack.c.b16 %v2253, %v2250
    %v2650 = vpack.c.b16 %v2254, %v2251
    %v2651 = vpack.c.b16 %v2255, %v2252
    %v2652 = vpack.c.b16 %v2259, %v2256
    %v2653 = vpack.c.b16 %v2260, %v2257
    %v2654 = vpack.c.b16 %v2261, %v2258
    %v2655 = vpack.c.b16 %v2265, %v2262
    %v2656 = vpack.c.b16 %v2266, %v2263
    %v2657 = vpack.c.b16 %v2267, %v2264
    %v2658 = vpack.c.b16 %v2271, %v2268
    %v2659 = vpack.c.b16 %v2272, %v2269
    %v2660 = vpack.c.b16 %v2273, %v2270
    %v2661 = vpack.c.b16 %v2277, %v2274
    %v2662 = vpack.c.b16 %v2278, %v2275
    %v2663 = vpack.c.b16 %v2279, %v2276
    %3048 = vmatprep.subr.bf16.mxu0 %v2281
    %3049 = vmatpush1.bf16.msra.mxu0 %v2280
    %3050 = vmatprep.subr.bf16.mxu0 %v2284
    %3051 = vmatpush1.bf16.msra.mxu0 %v2283
    %3052 = vmatprep.subr.bf16.mxu0 %v2287
    %3053 = vmatpush1.bf16.msra.mxu0 %v2286
    %3054 = vmatprep.subr.bf16.mxu0 %v2290
    %3055 = vmatpush1.bf16.msra.mxu0 %v2289
    %3056 = vmatprep.subr.bf16.mxu0 %v2293
    %3057 = vmatpush1.bf16.msra.mxu0 %v2292
    %3058 = vmatprep.subr.bf16.mxu0 %v2296
    %3059 = vmatpush1.bf16.msra.mxu0 %v2295
    %3060 = vmatprep.subr.bf16.mxu0 %v2299
    %3061 = vmatpush1.bf16.msra.mxu0 %v2298
    %3062 = vmatprep.subr.bf16.mxu0 %v2302
    %3063 = vmatpush1.bf16.msra.mxu0 %v2301
    %3064 = vmatprep.subr.bf16.mxu0 %v2305
    %3065 = vmatpush1.bf16.msra.mxu0 %v2304
    %3066 = vmatprep.subr.bf16.mxu0 %v2308
    %3067 = vmatpush1.bf16.msra.mxu0 %v2307
    %3068 = vmatprep.subr.bf16.mxu0 %v2311
    %3069 = vmatpush1.bf16.msra.mxu0 %v2310
    %3070 = vmatprep.subr.bf16.mxu0 %v2314
    %3071 = vmatpush1.bf16.msra.mxu0 %v2313
    %3072 = vmatprep.subr.bf16.mxu0 %v2317
    %3073 = vmatpush1.bf16.msra.mxu0 %v2316
    %3074 = vmatprep.subr.bf16.mxu0 %v2320
    %3075 = vmatpush1.bf16.msra.mxu0 %v2319
    %3076 = vmatprep.subr.bf16.mxu0 %v2323
    %3077 = vmatpush1.bf16.msra.mxu0 %v2322
    %3078 = vmatprep.subr.bf16.mxu0 %v2326
    %3079 = vmatpush1.bf16.msra.mxu0 %v2325
    %3080 = vmatprep.mubr.bf16.mxu0 %v844
    %3081 = vmatmul.mubr.bf16.gmra.mrb[0].mxu0 %v840
    %v3082 = vpop.f32.mrb[0].mxu0
    %v3083 = vadd.f32 %v684, %v3082
    %v3084 = vpop.f32.mrb[0].mxu0
    %v3085 = vadd.f32 %v688, %v3084
    %v3086 = vpop.f32.mrb[0].mxu0
    %v3087 = vadd.f32 %v684, %v3086
    %v3088 = vpop.f32.mrb[0].mxu0
    %v3089 = vadd.f32 %v688, %v3088
    %3090 = vdwg.mxu0
    %3091 = vmatprep.subr.bf16.mxu0 %v2329
    %3092 = vmatpush1.bf16.msra.mxu0 %v2328
    %3093 = vmatprep.subr.bf16.mxu0 %v2332
    %3094 = vmatpush1.bf16.msra.mxu0 %v2331
    %3095 = vmatprep.subr.bf16.mxu0 %v2335
    %3096 = vmatpush1.bf16.msra.mxu0 %v2334
    %3097 = vmatprep.subr.bf16.mxu0 %v2338
    %3098 = vmatpush1.bf16.msra.mxu0 %v2337
    %3099 = vmatprep.subr.bf16.mxu0 %v2341
    %3100 = vmatpush1.bf16.msra.mxu0 %v2340
    %3101 = vmatprep.subr.bf16.mxu0 %v2344
    %3102 = vmatpush1.bf16.msra.mxu0 %v2343
    %3103 = vmatprep.subr.bf16.mxu0 %v2347
    %3104 = vmatpush1.bf16.msra.mxu0 %v2346
    %3105 = vmatprep.subr.bf16.mxu0 %v2350
    %3106 = vmatpush1.bf16.msra.mxu0 %v2349
    %3107 = vmatprep.subr.bf16.mxu0 %v2353
    %3108 = vmatpush1.bf16.msra.mxu0 %v2352
    %3109 = vmatprep.subr.bf16.mxu0 %v2356
    %3110 = vmatpush1.bf16.msra.mxu0 %v2355
    %3111 = vmatprep.subr.bf16.mxu0 %v2359
    %3112 = vmatpush1.bf16.msra.mxu0 %v2358
    %3113 = vmatprep.subr.bf16.mxu0 %v2362
    %3114 = vmatpush1.bf16.msra.mxu0 %v2361
    %3115 = vmatprep.subr.bf16.mxu0 %v2365
    %3116 = vmatpush1.bf16.msra.mxu0 %v2364
    %3117 = vmatprep.subr.bf16.mxu0 %v2368
    %3118 = vmatpush1.bf16.msra.mxu0 %v2367
    %3119 = vmatprep.subr.bf16.mxu0 %v2371
    %3120 = vmatpush1.bf16.msra.mxu0 %v2370
    %3121 = vmatprep.subr.bf16.mxu0 %v2374
    %3122 = vmatpush1.bf16.msra.mxu0 %v2373
    %3123 = vmatprep.mubr.bf16.mxu0 %v845
    %3124 = vmatmul.mubr.bf16.gmra.mrb[0].mxu0 %v841
    %v3125 = vpop.f32.mrb[0].mxu0
    %v3126 = vadd.f32 %v3083, %v3125
    %v3127 = vpop.f32.mrb[0].mxu0
    %v3128 = vadd.f32 %v3085, %v3127
    %v3129 = vpop.f32.mrb[0].mxu0
    %v3130 = vadd.f32 %v3087, %v3129
    %v3131 = vpop.f32.mrb[0].mxu0
    %v3132 = vadd.f32 %v3089, %v3131
    %3133 = vdwg.mxu0
    %3134 = vmatprep.subr.bf16.mxu0 %v2377
    %3135 = vmatpush1.bf16.msra.mxu0 %v2376
    %3136 = vmatprep.subr.bf16.mxu0 %v2380
    %3137 = vmatpush1.bf16.msra.mxu0 %v2379
    %3138 = vmatprep.subr.bf16.mxu0 %v2383
    %3139 = vmatpush1.bf16.msra.mxu0 %v2382
    %3140 = vmatprep.subr.bf16.mxu0 %v2386
    %3141 = vmatpush1.bf16.msra.mxu0 %v2385
    %3142 = vmatprep.subr.bf16.mxu0 %v2389
    %3143 = vmatpush1.bf16.msra.mxu0 %v2388
    %3144 = vmatprep.subr.bf16.mxu0 %v2392
    %3145 = vmatpush1.bf16.msra.mxu0 %v2391
    %3146 = vmatprep.subr.bf16.mxu0 %v2395
    %3147 = vmatpush1.bf16.msra.mxu0 %v2394
    %3148 = vmatprep.subr.bf16.mxu0 %v2398
    %3149 = vmatpush1.bf16.msra.mxu0 %v2397
    %3150 = vmatprep.subr.bf16.mxu0 %v2401
    %3151 = vmatpush1.bf16.msra.mxu0 %v2400
    %3152 = vmatprep.subr.bf16.mxu0 %v2404
    %3153 = vmatpush1.bf16.msra.mxu0 %v2403
    %3154 = vmatprep.subr.bf16.mxu0 %v2407
    %3155 = vmatpush1.bf16.msra.mxu0 %v2406
    %3156 = vmatprep.subr.bf16.mxu0 %v2410
    %3157 = vmatpush1.bf16.msra.mxu0 %v2409
    %3158 = vmatprep.subr.bf16.mxu0 %v2413
    %3159 = vmatpush1.bf16.msra.mxu0 %v2412
    %3160 = vmatprep.subr.bf16.mxu0 %v2416
    %3161 = vmatpush1.bf16.msra.mxu0 %v2415
    %3162 = vmatprep.subr.bf16.mxu0 %v2419
    %3163 = vmatpush1.bf16.msra.mxu0 %v2418
    %3164 = vmatprep.subr.bf16.mxu0 %v2422
    %3165 = vmatpush1.bf16.msra.mxu0 %v2421
    %3166 = vmatprep.mubr.bf16.mxu0 %v846
    %3167 = vmatmul.mubr.bf16.gmra.mrb[0].mxu0 %v842
    %v3168 = vpop.f32.mrb[0].mxu0
    %v3169 = vadd.f32 %v3126, %v3168
    %v3170 = vpop.f32.mrb[0].mxu0
    %v3171 = vadd.f32 %v3128, %v3170
    %v3172 = vpop.f32.mrb[0].mxu0
    %v3173 = vadd.f32 %v3130, %v3172
    %v3174 = vpop.f32.mrb[0].mxu0
    %v3175 = vadd.f32 %v3132, %v3174
    %3176 = vdwg.mxu0
    %3177 = vmatprep.subr.bf16.mxu0 %v2425
    %3178 = vmatpush1.bf16.msra.mxu0 %v2424
    %3179 = vmatprep.subr.bf16.mxu0 %v2428
    %3180 = vmatpush1.bf16.msra.mxu0 %v2427
    %3181 = vmatprep.subr.bf16.mxu0 %v2431
    %3182 = vmatpush1.bf16.msra.mxu0 %v2430
    %3183 = vmatprep.subr.bf16.mxu0 %v2434
    %3184 = vmatpush1.bf16.msra.mxu0 %v2433
    %3185 = vmatprep.subr.bf16.mxu0 %v2437
    %3186 = vmatpush1.bf16.msra.mxu0 %v2436
    %3187 = vmatprep.subr.bf16.mxu0 %v2440
    %3188 = vmatpush1.bf16.msra.mxu0 %v2439
    %3189 = vmatprep.subr.bf16.mxu0 %v2443
    %3190 = vmatpush1.bf16.msra.mxu0 %v2442
    %3191 = vmatprep.subr.bf16.mxu0 %v2446
    %3192 = vmatpush1.bf16.msra.mxu0 %v2445
    %3193 = vmatprep.subr.bf16.mxu0 %v2449
    %3194 = vmatpush1.bf16.msra.mxu0 %v2448
    %3195 = vmatprep.subr.bf16.mxu0 %v2452
    %3196 = vmatpush1.bf16.msra.mxu0 %v2451
    %3197 = vmatprep.subr.bf16.mxu0 %v2455
    %3198 = vmatpush1.bf16.msra.mxu0 %v2454
    %3199 = vmatprep.subr.bf16.mxu0 %v2458
    %3200 = vmatpush1.bf16.msra.mxu0 %v2457
    %3201 = vmatprep.subr.bf16.mxu0 %v2461
    %3202 = vmatpush1.bf16.msra.mxu0 %v2460
    %3203 = vmatprep.subr.bf16.mxu0 %v2464
    %3204 = vmatpush1.bf16.msra.mxu0 %v2463
    %3205 = vmatprep.subr.bf16.mxu0 %v2467
    %3206 = vmatpush1.bf16.msra.mxu0 %v2466
    %3207 = vmatprep.subr.bf16.mxu0 %v2470
    %3208 = vmatpush1.bf16.msra.mxu0 %v2469
    %3209 = vmatprep.mubr.bf16.mxu0 %v847
    %3210 = vmatmul.mubr.bf16.gmra.mrb[0].mxu0 %v843
    %v3211 = vpop.f32.mrb[0].mxu0
    %v3212 = vadd.f32 %v3169, %v3211
    %v3213 = vpop.f32.mrb[0].mxu0
    %v3214 = vadd.f32 %v3171, %v3213
    %v3215 = vpop.f32.mrb[0].mxu0
    %v3216 = vadd.f32 %v3173, %v3215
    %v3217 = vpop.f32.mrb[0].mxu0
    %v3218 = vadd.f32 %v3175, %v3217
    %3219 = vdwg.mxu0
    %3220 = vmatprep.subr.bf16.mxu0 %v2473
    %3221 = vmatpush1.bf16.msra.mxu0 %v2472
    %3222 = vmatprep.subr.bf16.mxu0 %v2476
    %3223 = vmatpush1.bf16.msra.mxu0 %v2475
    %3224 = vmatprep.subr.bf16.mxu0 %v2479
    %3225 = vmatpush1.bf16.msra.mxu0 %v2478
    %3226 = vmatprep.subr.bf16.mxu0 %v2482
    %3227 = vmatpush1.bf16.msra.mxu0 %v2481
    %3228 = vmatprep.subr.bf16.mxu0 %v2485
    %3229 = vmatpush1.bf16.msra.mxu0 %v2484
    %3230 = vmatprep.subr.bf16.mxu0 %v2488
    %3231 = vmatpush1.bf16.msra.mxu0 %v2487
    %3232 = vmatprep.subr.bf16.mxu0 %v2491
    %3233 = vmatpush1.bf16.msra.mxu0 %v2490
    %3234 = vmatprep.subr.bf16.mxu0 %v2494
    %3235 = vmatpush1.bf16.msra.mxu0 %v2493
    %3236 = vmatprep.subr.bf16.mxu0 %v2497
    %3237 = vmatpush1.bf16.msra.mxu0 %v2496
    %3238 = vmatprep.subr.bf16.mxu0 %v2500
    %3239 = vmatpush1.bf16.msra.mxu0 %v2499
    %3240 = vmatprep.subr.bf16.mxu0 %v2503
    %3241 = vmatpush1.bf16.msra.mxu0 %v2502
    %3242 = vmatprep.subr.bf16.mxu0 %v2506
    %3243 = vmatpush1.bf16.msra.mxu0 %v2505
    %3244 = vmatprep.subr.bf16.mxu0 %v2509
    %3245 = vmatpush1.bf16.msra.mxu0 %v2508
    %3246 = vmatprep.subr.bf16.mxu0 %v2512
    %3247 = vmatpush1.bf16.msra.mxu0 %v2511
    %3248 = vmatprep.subr.bf16.mxu0 %v2515
    %3249 = vmatpush1.bf16.msra.mxu0 %v2514
    %3250 = vmatprep.subr.bf16.mxu0 %v2518
    %3251 = vmatpush1.bf16.msra.mxu0 %v2517
    %3252 = vmatprep.mubr.bf16.mxu0 %v980
    %3253 = vmatmul.mubr.bf16.gmra.mrb[0].mxu0 %v976
    %v3254 = vpop.f32.mrb[0].mxu0
    %v3255 = vadd.f32 %v3212, %v3254
    %v3256 = vpop.f32.mrb[0].mxu0
    %v3257 = vadd.f32 %v3214, %v3256
    %v3258 = vpop.f32.mrb[0].mxu0
    %v3259 = vadd.f32 %v3216, %v3258
    %v3260 = vpop.f32.mrb[0].mxu0
    %v3261 = vadd.f32 %v3218, %v3260
    %3262 = vdwg.mxu0
    %3263 = vmatprep.subr.bf16.mxu0 %v2521
    %3264 = vmatpush1.bf16.msra.mxu0 %v2520
    %3265 = vmatprep.subr.bf16.mxu0 %v2524
    %3266 = vmatpush1.bf16.msra.mxu0 %v2523
    %3267 = vmatprep.subr.bf16.mxu0 %v2527
    %3268 = vmatpush1.bf16.msra.mxu0 %v2526
    %3269 = vmatprep.subr.bf16.mxu0 %v2530
    %3270 = vmatpush1.bf16.msra.mxu0 %v2529
    %3271 = vmatprep.subr.bf16.mxu0 %v2533
    %3272 = vmatpush1.bf16.msra.mxu0 %v2532
    %3273 = vmatprep.subr.bf16.mxu0 %v2536
    %3274 = vmatpush1.bf16.msra.mxu0 %v2535
    %3275 = vmatprep.subr.bf16.mxu0 %v2539
    %3276 = vmatpush1.bf16.msra.mxu0 %v2538
    %3277 = vmatprep.subr.bf16.mxu0 %v2542
    %3278 = vmatpush1.bf16.msra.mxu0 %v2541
    %3279 = vmatprep.subr.bf16.mxu0 %v2545
    %3280 = vmatpush1.bf16.msra.mxu0 %v2544
    %3281 = vmatprep.subr.bf16.mxu0 %v2548
    %3282 = vmatpush1.bf16.msra.mxu0 %v2547
    %3283 = vmatprep.subr.bf16.mxu0 %v2551
    %3284 = vmatpush1.bf16.msra.mxu0 %v2550
    %3285 = vmatprep.subr.bf16.mxu0 %v2554
    %3286 = vmatpush1.bf16.msra.mxu0 %v2553
    %3287 = vmatprep.subr.bf16.mxu0 %v2557
    %3288 = vmatpush1.bf16.msra.mxu0 %v2556
    %3289 = vmatprep.subr.bf16.mxu0 %v2560
    %3290 = vmatpush1.bf16.msra.mxu0 %v2559
    %3291 = vmatprep.subr.bf16.mxu0 %v2563
    %3292 = vmatpush1.bf16.msra.mxu0 %v2562
    %3293 = vmatprep.subr.bf16.mxu0 %v2566
    %3294 = vmatpush1.bf16.msra.mxu0 %v2565
    %3295 = vmatprep.mubr.bf16.mxu0 %v981
    %3296 = vmatmul.mubr.bf16.gmra.mrb[0].mxu0 %v977
    %v3297 = vpop.f32.mrb[0].mxu0
    %v3298 = vadd.f32 %v3255, %v3297
    %v3299 = vpop.f32.mrb[0].mxu0
    %v3300 = vadd.f32 %v3257, %v3299
    %v3301 = vpop.f32.mrb[0].mxu0
    %v3302 = vadd.f32 %v3259, %v3301
    %v3303 = vpop.f32.mrb[0].mxu0
    %v3304 = vadd.f32 %v3261, %v3303
    %3305 = vdwg.mxu0
    %3306 = vmatprep.subr.bf16.mxu0 %v2569
    %3307 = vmatpush1.bf16.msra.mxu0 %v2568
    %3308 = vmatprep.subr.bf16.mxu0 %v2572
    %3309 = vmatpush1.bf16.msra.mxu0 %v2571
    %3310 = vmatprep.subr.bf16.mxu0 %v2575
    %3311 = vmatpush1.bf16.msra.mxu0 %v2574
    %3312 = vmatprep.subr.bf16.mxu0 %v2578
    %3313 = vmatpush1.bf16.msra.mxu0 %v2577
    %3314 = vmatprep.subr.bf16.mxu0 %v2581
    %3315 = vmatpush1.bf16.msra.mxu0 %v2580
    %3316 = vmatprep.subr.bf16.mxu0 %v2584
    %3317 = vmatpush1.bf16.msra.mxu0 %v2583
    %3318 = vmatprep.subr.bf16.mxu0 %v2587
    %3319 = vmatpush1.bf16.msra.mxu0 %v2586
    %3320 = vmatprep.subr.bf16.mxu0 %v2590
    %3321 = vmatpush1.bf16.msra.mxu0 %v2589
    %3322 = vmatprep.subr.bf16.mxu0 %v2593
    %3323 = vmatpush1.bf16.msra.mxu0 %v2592
    %3324 = vmatprep.subr.bf16.mxu0 %v2596
    %3325 = vmatpush1.bf16.msra.mxu0 %v2595
    %3326 = vmatprep.subr.bf16.mxu0 %v2599
    %3327 = vmatpush1.bf16.msra.mxu0 %v2598
    %3328 = vmatprep.subr.bf16.mxu0 %v2602
    %3329 = vmatpush1.bf16.msra.mxu0 %v2601
    %3330 = vmatprep.subr.bf16.mxu0 %v2605
    %3331 = vmatpush1.bf16.msra.mxu0 %v2604
    %3332 = vmatprep.subr.bf16.mxu0 %v2608
    %3333 = vmatpush1.bf16.msra.mxu0 %v2607
    %3334 = vmatprep.subr.bf16.mxu0 %v2611
    %3335 = vmatpush1.bf16.msra.mxu0 %v2610
    %3336 = vmatprep.subr.bf16.mxu0 %v2614
    %3337 = vmatpush1.bf16.msra.mxu0 %v2613
    %3338 = vmatprep.mubr.bf16.mxu0 %v982
    %3339 = vmatmul.mubr.bf16.gmra.mrb[0].mxu0 %v978
    %v3340 = vpop.f32.mrb[0].mxu0
    %v3341 = vadd.f32 %v3298, %v3340
    %v3342 = vpop.f32.mrb[0].mxu0
    %v3343 = vadd.f32 %v3300, %v3342
    %v3344 = vpop.f32.mrb[0].mxu0
    %v3345 = vadd.f32 %v3302, %v3344
    %v3346 = vpop.f32.mrb[0].mxu0
    %v3347 = vadd.f32 %v3304, %v3346
    %3348 = vdwg.mxu0
    %3349 = vmatprep.subr.bf16.mxu0 %v2617
    %3350 = vmatpush1.bf16.msra.mxu0 %v2616
    %3351 = vmatprep.subr.bf16.mxu0 %v2620
    %3352 = vmatpush1.bf16.msra.mxu0 %v2619
    %3353 = vmatprep.subr.bf16.mxu0 %v2623
    %3354 = vmatpush1.bf16.msra.mxu0 %v2622
    %3355 = vmatprep.subr.bf16.mxu0 %v2626
    %3356 = vmatpush1.bf16.msra.mxu0 %v2625
    %3357 = vmatprep.subr.bf16.mxu0 %v2629
    %3358 = vmatpush1.bf16.msra.mxu0 %v2628
    %3359 = vmatprep.subr.bf16.mxu0 %v2632
    %3360 = vmatpush1.bf16.msra.mxu0 %v2631
    %3361 = vmatprep.subr.bf16.mxu0 %v2635
    %3362 = vmatpush1.bf16.msra.mxu0 %v2634
    %3363 = vmatprep.subr.bf16.mxu0 %v2638
    %3364 = vmatpush1.bf16.msra.mxu0 %v2637
    %3365 = vmatprep.subr.bf16.mxu0 %v2641
    %3366 = vmatpush1.bf16.msra.mxu0 %v2640
    %3367 = vmatprep.subr.bf16.mxu0 %v2644
    %3368 = vmatpush1.bf16.msra.mxu0 %v2643
    %3369 = vmatprep.subr.bf16.mxu0 %v2647
    %3370 = vmatpush1.bf16.msra.mxu0 %v2646
    %3371 = vmatprep.subr.bf16.mxu0 %v2650
    %3372 = vmatpush1.bf16.msra.mxu0 %v2649
    %3373 = vmatprep.subr.bf16.mxu0 %v2653
    %3374 = vmatpush1.bf16.msra.mxu0 %v2652
    %3375 = vmatprep.subr.bf16.mxu0 %v2656
    %3376 = vmatpush1.bf16.msra.mxu0 %v2655
    %3377 = vmatprep.subr.bf16.mxu0 %v2659
    %3378 = vmatpush1.bf16.msra.mxu0 %v2658
    %3379 = vmatprep.subr.bf16.mxu0 %v2662
    %3380 = vmatpush1.bf16.msra.mxu0 %v2661
    %3381 = vmatprep.mubr.bf16.mxu0 %v983
    %3382 = vmatmul.mubr.bf16.gmra.mrb[0].mxu0 %v979
    %v3383 = vpop.f32.mrb[0].mxu0
    %v3384 = vadd.f32 %v3341, %v3383
    %v3385 = vpop.f32.mrb[0].mxu0
    %v3386 = vadd.f32 %v3343, %v3385
    %v3387 = vpop.f32.mrb[0].mxu0
    %v3388 = vadd.f32 %v3345, %v3387
    %v3389 = vpop.f32.mrb[0].mxu0
    %v3390 = vadd.f32 %v3347, %v3389
    %3391 = vdwg.mxu0
    %3392 = vmatprep.subr.bf16.mxu0 0
    %3393 = vmatpush1.bf16.msra.mxu0 %v2282
    %3394 = vmatprep.subr.bf16.mxu0 0
    %3395 = vmatpush1.bf16.msra.mxu0 %v2285
    %3396 = vmatprep.subr.bf16.mxu0 0
    %3397 = vmatpush1.bf16.msra.mxu0 %v2288
    %3398 = vmatprep.subr.bf16.mxu0 0
    %3399 = vmatpush1.bf16.msra.mxu0 %v2291
    %3400 = vmatprep.subr.bf16.mxu0 0
    %3401 = vmatpush1.bf16.msra.mxu0 %v2294
    %3402 = vmatprep.subr.bf16.mxu0 0
    %3403 = vmatpush1.bf16.msra.mxu0 %v2297
    %3404 = vmatprep.subr.bf16.mxu0 0
    %3405 = vmatpush1.bf16.msra.mxu0 %v2300
    %3406 = vmatprep.subr.bf16.mxu0 0
    %3407 = vmatpush1.bf16.msra.mxu0 %v2303
    %3408 = vmatprep.subr.bf16.mxu0 0
    %3409 = vmatpush1.bf16.msra.mxu0 %v2306
    %3410 = vmatprep.subr.bf16.mxu0 0
    %3411 = vmatpush1.bf16.msra.mxu0 %v2309
    %3412 = vmatprep.subr.bf16.mxu0 0
    %3413 = vmatpush1.bf16.msra.mxu0 %v2312
    %3414 = vmatprep.subr.bf16.mxu0 0
    %3415 = vmatpush1.bf16.msra.mxu0 %v2315
    %3416 = vmatprep.subr.bf16.mxu0 0
    %3417 = vmatpush1.bf16.msra.mxu0 %v2318
    %3418 = vmatprep.subr.bf16.mxu0 0
    %3419 = vmatpush1.bf16.msra.mxu0 %v2321
    %3420 = vmatprep.subr.bf16.mxu0 0
    %3421 = vmatpush1.bf16.msra.mxu0 %v2324
    %3422 = vmatprep.subr.bf16.mxu0 0
    %3423 = vmatpush1.bf16.msra.mxu0 %v2327
    %3424 = vmatprep.mubr.bf16.mxu0 %v844
    %3425 = vmatmul.mubr.bf16.gmra.mrb[0].mxu0 %v840
    %v3426 = vpop.f32.mrb[0].mxu0
    %v3427 = vadd.f32 %v692, %v3426
    %v3428 = vpop.f32.mrb[0].mxu0
    %v3429 = vpop.f32.mrb[0].mxu0
    %v3430 = vadd.f32 %v692, %v3429
    %v3431 = vpop.f32.mrb[0].mxu0
    %3432 = vdwg.mxu0
    %3433 = vmatprep.subr.bf16.mxu0 0
    %3434 = vmatpush1.bf16.msra.mxu0 %v2330
    %3435 = vmatprep.subr.bf16.mxu0 0
    %3436 = vmatpush1.bf16.msra.mxu0 %v2333
    %3437 = vmatprep.subr.bf16.mxu0 0
    %3438 = vmatpush1.bf16.msra.mxu0 %v2336
    %3439 = vmatprep.subr.bf16.mxu0 0
    %3440 = vmatpush1.bf16.msra.mxu0 %v2339
    %3441 = vmatprep.subr.bf16.mxu0 0
    %3442 = vmatpush1.bf16.msra.mxu0 %v2342
    %3443 = vmatprep.subr.bf16.mxu0 0
    %3444 = vmatpush1.bf16.msra.mxu0 %v2345
    %3445 = vmatprep.subr.bf16.mxu0 0
    %3446 = vmatpush1.bf16.msra.mxu0 %v2348
    %3447 = vmatprep.subr.bf16.mxu0 0
    %3448 = vmatpush1.bf16.msra.mxu0 %v2351
    %3449 = vmatprep.subr.bf16.mxu0 0
    %3450 = vmatpush1.bf16.msra.mxu0 %v2354
    %3451 = vmatprep.subr.bf16.mxu0 0
    %3452 = vmatpush1.bf16.msra.mxu0 %v2357
    %3453 = vmatprep.subr.bf16.mxu0 0
    %3454 = vmatpush1.bf16.msra.mxu0 %v2360
    %3455 = vmatprep.subr.bf16.mxu0 0
    %3456 = vmatpush1.bf16.msra.mxu0 %v2363
    %3457 = vmatprep.subr.bf16.mxu0 0
    %3458 = vmatpush1.bf16.msra.mxu0 %v2366
    %3459 = vmatprep.subr.bf16.mxu0 0
    %3460 = vmatpush1.bf16.msra.mxu0 %v2369
    %3461 = vmatprep.subr.bf16.mxu0 0
    %3462 = vmatpush1.bf16.msra.mxu0 %v2372
    %3463 = vmatprep.subr.bf16.mxu0 0
    %3464 = vmatpush1.bf16.msra.mxu0 %v2375
    %3465 = vmatprep.mubr.bf16.mxu0 %v845
    %3466 = vmatmul.mubr.bf16.gmra.mrb[0].mxu0 %v841
    %v3467 = vpop.f32.mrb[0].mxu0
    %v3468 = vadd.f32 %v3427, %v3467
    %v3469 = vpop.f32.mrb[0].mxu0
    %v3470 = vpop.f32.mrb[0].mxu0
    %v3471 = vadd.f32 %v3430, %v3470
    %v3472 = vpop.f32.mrb[0].mxu0
    %3473 = vdwg.mxu0
    %3474 = vmatprep.subr.bf16.mxu0 0
    %3475 = vmatpush1.bf16.msra.mxu0 %v2378
    %3476 = vmatprep.subr.bf16.mxu0 0
    %3477 = vmatpush1.bf16.msra.mxu0 %v2381
    %3478 = vmatprep.subr.bf16.mxu0 0
    %3479 = vmatpush1.bf16.msra.mxu0 %v2384
    %3480 = vmatprep.subr.bf16.mxu0 0
    %3481 = vmatpush1.bf16.msra.mxu0 %v2387
    %3482 = vmatprep.subr.bf16.mxu0 0
    %3483 = vmatpush1.bf16.msra.mxu0 %v2390
    %3484 = vmatprep.subr.bf16.mxu0 0
    %3485 = vmatpush1.bf16.msra.mxu0 %v2393
    %3486 = vmatprep.subr.bf16.mxu0 0
    %3487 = vmatpush1.bf16.msra.mxu0 %v2396
    %3488 = vmatprep.subr.bf16.mxu0 0
    %3489 = vmatpush1.bf16.msra.mxu0 %v2399
    %3490 = vmatprep.subr.bf16.mxu0 0
    %3491 = vmatpush1.bf16.msra.mxu0 %v2402
    %3492 = vmatprep.subr.bf16.mxu0 0
    %3493 = vmatpush1.bf16.msra.mxu0 %v2405
    %3494 = vmatprep.subr.bf16.mxu0 0
    %3495 = vmatpush1.bf16.msra.mxu0 %v2408
    %3496 = vmatprep.subr.bf16.mxu0 0
    %3497 = vmatpush1.bf16.msra.mxu0 %v2411
    %3498 = vmatprep.subr.bf16.mxu0 0
    %3499 = vmatpush1.bf16.msra.mxu0 %v2414
    %3500 = vmatprep.subr.bf16.mxu0 0
    %3501 = vmatpush1.bf16.msra.mxu0 %v2417
    %3502 = vmatprep.subr.bf16.mxu0 0
    %3503 = vmatpush1.bf16.msra.mxu0 %v2420
    %3504 = vmatprep.subr.bf16.mxu0 0
    %3505 = vmatpush1.bf16.msra.mxu0 %v2423
    %3506 = vmatprep.mubr.bf16.mxu0 %v846
    %3507 = vmatmul.mubr.bf16.gmra.mrb[0].mxu0 %v842
    %v3508 = vpop.f32.mrb[0].mxu0
    %v3509 = vadd.f32 %v3468, %v3508
    %v3510 = vpop.f32.mrb[0].mxu0
    %v3511 = vpop.f32.mrb[0].mxu0
    %v3512 = vadd.f32 %v3471, %v3511
    %v3513 = vpop.f32.mrb[0].mxu0
    %3514 = vdwg.mxu0
    %3515 = vmatprep.subr.bf16.mxu0 0
    %3516 = vmatpush1.bf16.msra.mxu0 %v2426
    %3517 = vmatprep.subr.bf16.mxu0 0
    %3518 = vmatpush1.bf16.msra.mxu0 %v2429
    %3519 = vmatprep.subr.bf16.mxu0 0
    %3520 = vmatpush1.bf16.msra.mxu0 %v2432
    %3521 = vmatprep.subr.bf16.mxu0 0
    %3522 = vmatpush1.bf16.msra.mxu0 %v2435
    %3523 = vmatprep.subr.bf16.mxu0 0
    %3524 = vmatpush1.bf16.msra.mxu0 %v2438
    %3525 = vmatprep.subr.bf16.mxu0 0
    %3526 = vmatpush1.bf16.msra.mxu0 %v2441
    %3527 = vmatprep.subr.bf16.mxu0 0
    %3528 = vmatpush1.bf16.msra.mxu0 %v2444
    %3529 = vmatprep.subr.bf16.mxu0 0
    %3530 = vmatpush1.bf16.msra.mxu0 %v2447
    %3531 = vmatprep.subr.bf16.mxu0 0
    %3532 = vmatpush1.bf16.msra.mxu0 %v2450
    %3533 = vmatprep.subr.bf16.mxu0 0
    %3534 = vmatpush1.bf16.msra.mxu0 %v2453
    %3535 = vmatprep.subr.bf16.mxu0 0
    %3536 = vmatpush1.bf16.msra.mxu0 %v2456
    %3537 = vmatprep.subr.bf16.mxu0 0
    %3538 = vmatpush1.bf16.msra.mxu0 %v2459
    %3539 = vmatprep.subr.bf16.mxu0 0
    %3540 = vmatpush1.bf16.msra.mxu0 %v2462
    %3541 = vmatprep.subr.bf16.mxu0 0
    %3542 = vmatpush1.bf16.msra.mxu0 %v2465
    %3543 = vmatprep.subr.bf16.mxu0 0
    %3544 = vmatpush1.bf16.msra.mxu0 %v2468
    %3545 = vmatprep.subr.bf16.mxu0 0
    %3546 = vmatpush1.bf16.msra.mxu0 %v2471
    %3547 = vmatprep.mubr.bf16.mxu0 %v847
    %3548 = vmatmul.mubr.bf16.gmra.mrb[0].mxu0 %v843
    %v3549 = vpop.f32.mrb[0].mxu0
    %v3550 = vadd.f32 %v3509, %v3549
    %v3551 = vpop.f32.mrb[0].mxu0
    %v3552 = vpop.f32.mrb[0].mxu0
    %v3553 = vadd.f32 %v3512, %v3552
    %v3554 = vpop.f32.mrb[0].mxu0
    %3555 = vdwg.mxu0
    %3556 = vmatprep.subr.bf16.mxu0 0
    %3557 = vmatpush1.bf16.msra.mxu0 %v2474
    %3558 = vmatprep.subr.bf16.mxu0 0
    %3559 = vmatpush1.bf16.msra.mxu0 %v2477
    %3560 = vmatprep.subr.bf16.mxu0 0
    %3561 = vmatpush1.bf16.msra.mxu0 %v2480
    %3562 = vmatprep.subr.bf16.mxu0 0
    %3563 = vmatpush1.bf16.msra.mxu0 %v2483
    %3564 = vmatprep.subr.bf16.mxu0 0
    %3565 = vmatpush1.bf16.msra.mxu0 %v2486
    %3566 = vmatprep.subr.bf16.mxu0 0
    %3567 = vmatpush1.bf16.msra.mxu0 %v2489
    %3568 = vmatprep.subr.bf16.mxu0 0
    %3569 = vmatpush1.bf16.msra.mxu0 %v2492
    %3570 = vmatprep.subr.bf16.mxu0 0
    %3571 = vmatpush1.bf16.msra.mxu0 %v2495
    %3572 = vmatprep.subr.bf16.mxu0 0
    %3573 = vmatpush1.bf16.msra.mxu0 %v2498
    %3574 = vmatprep.subr.bf16.mxu0 0
    %3575 = vmatpush1.bf16.msra.mxu0 %v2501
    %3576 = vmatprep.subr.bf16.mxu0 0
    %3577 = vmatpush1.bf16.msra.mxu0 %v2504
    %3578 = vmatprep.subr.bf16.mxu0 0
    %3579 = vmatpush1.bf16.msra.mxu0 %v2507
    %3580 = vmatprep.subr.bf16.mxu0 0
    %3581 = vmatpush1.bf16.msra.mxu0 %v2510
    %3582 = vmatprep.subr.bf16.mxu0 0
    %3583 = vmatpush1.bf16.msra.mxu0 %v2513
    %3584 = vmatprep.subr.bf16.mxu0 0
    %3585 = vmatpush1.bf16.msra.mxu0 %v2516
    %3586 = vmatprep.subr.bf16.mxu0 0
    %3587 = vmatpush1.bf16.msra.mxu0 %v2519
    %3588 = vmatprep.mubr.bf16.mxu0 %v980
    %3589 = vmatmul.mubr.bf16.gmra.mrb[0].mxu0 %v976
    %v3590 = vpop.f32.mrb[0].mxu0
    %v3591 = vadd.f32 %v3550, %v3590
    %v3592 = vpop.f32.mrb[0].mxu0
    %v3593 = vpop.f32.mrb[0].mxu0
    %v3594 = vadd.f32 %v3553, %v3593
    %v3595 = vpop.f32.mrb[0].mxu0
    %3596 = vdwg.mxu0
    %3597 = vmatprep.subr.bf16.mxu0 0
    %3598 = vmatpush1.bf16.msra.mxu0 %v2522
    %3599 = vmatprep.subr.bf16.mxu0 0
    %3600 = vmatpush1.bf16.msra.mxu0 %v2525
    %3601 = vmatprep.subr.bf16.mxu0 0
    %3602 = vmatpush1.bf16.msra.mxu0 %v2528
    %3603 = vmatprep.subr.bf16.mxu0 0
    %3604 = vmatpush1.bf16.msra.mxu0 %v2531
    %3605 = vmatprep.subr.bf16.mxu0 0
    %3606 = vmatpush1.bf16.msra.mxu0 %v2534
    %3607 = vmatprep.subr.bf16.mxu0 0
    %3608 = vmatpush1.bf16.msra.mxu0 %v2537
    %3609 = vmatprep.subr.bf16.mxu0 0
    %3610 = vmatpush1.bf16.msra.mxu0 %v2540
    %3611 = vmatprep.subr.bf16.mxu0 0
    %3612 = vmatpush1.bf16.msra.mxu0 %v2543
    %3613 = vmatprep.subr.bf16.mxu0 0
    %3614 = vmatpush1.bf16.msra.mxu0 %v2546
    %3615 = vmatprep.subr.bf16.mxu0 0
    %3616 = vmatpush1.bf16.msra.mxu0 %v2549
    %3617 = vmatprep.subr.bf16.mxu0 0
    %3618 = vmatpush1.bf16.msra.mxu0 %v2552
    %3619 = vmatprep.subr.bf16.mxu0 0
    %3620 = vmatpush1.bf16.msra.mxu0 %v2555
    %3621 = vmatprep.subr.bf16.mxu0 0
    %3622 = vmatpush1.bf16.msra.mxu0 %v2558
    %3623 = vmatprep.subr.bf16.mxu0 0
    %3624 = vmatpush1.bf16.msra.mxu0 %v2561
    %3625 = vmatprep.subr.bf16.mxu0 0
    %3626 = vmatpush1.bf16.msra.mxu0 %v2564
    %3627 = vmatprep.subr.bf16.mxu0 0
    %3628 = vmatpush1.bf16.msra.mxu0 %v2567
    %3629 = vmatprep.mubr.bf16.mxu0 %v981
    %3630 = vmatmul.mubr.bf16.gmra.mrb[0].mxu0 %v977
    %v3631 = vpop.f32.mrb[0].mxu0
    %v3632 = vadd.f32 %v3591, %v3631
    %v3633 = vpop.f32.mrb[0].mxu0
    %v3634 = vpop.f32.mrb[0].mxu0
    %v3635 = vadd.f32 %v3594, %v3634
    %v3636 = vpop.f32.mrb[0].mxu0
    %3637 = vdwg.mxu0
    %3638 = vmatprep.subr.bf16.mxu0 0
    %3639 = vmatpush1.bf16.msra.mxu0 %v2570
    %3640 = vmatprep.subr.bf16.mxu0 0
    %3641 = vmatpush1.bf16.msra.mxu0 %v2573
    %3642 = vmatprep.subr.bf16.mxu0 0
    %3643 = vmatpush1.bf16.msra.mxu0 %v2576
    %3644 = vmatprep.subr.bf16.mxu0 0
    %3645 = vmatpush1.bf16.msra.mxu0 %v2579
    %3646 = vmatprep.subr.bf16.mxu0 0
    %3647 = vmatpush1.bf16.msra.mxu0 %v2582
    %3648 = vmatprep.subr.bf16.mxu0 0
    %3649 = vmatpush1.bf16.msra.mxu0 %v2585
    %3650 = vmatprep.subr.bf16.mxu0 0
    %3651 = vmatpush1.bf16.msra.mxu0 %v2588
    %3652 = vmatprep.subr.bf16.mxu0 0
    %3653 = vmatpush1.bf16.msra.mxu0 %v2591
    %3654 = vmatprep.subr.bf16.mxu0 0
    %3655 = vmatpush1.bf16.msra.mxu0 %v2594
    %3656 = vmatprep.subr.bf16.mxu0 0
    %3657 = vmatpush1.bf16.msra.mxu0 %v2597
    %3658 = vmatprep.subr.bf16.mxu0 0
    %3659 = vmatpush1.bf16.msra.mxu0 %v2600
    %3660 = vmatprep.subr.bf16.mxu0 0
    %3661 = vmatpush1.bf16.msra.mxu0 %v2603
    %3662 = vmatprep.subr.bf16.mxu0 0
    %3663 = vmatpush1.bf16.msra.mxu0 %v2606
    %3664 = vmatprep.subr.bf16.mxu0 0
    %3665 = vmatpush1.bf16.msra.mxu0 %v2609
    %3666 = vmatprep.subr.bf16.mxu0 0
    %3667 = vmatpush1.bf16.msra.mxu0 %v2612
    %3668 = vmatprep.subr.bf16.mxu0 0
    %3669 = vmatpush1.bf16.msra.mxu0 %v2615
    %3670 = vmatprep.mubr.bf16.mxu0 %v982
    %3671 = vmatmul.mubr.bf16.gmra.mrb[0].mxu0 %v978
    %v3672 = vpop.f32.mrb[0].mxu0
    %v3673 = vadd.f32 %v3632, %v3672
    %v3674 = vpop.f32.mrb[0].mxu0
    %v3675 = vpop.f32.mrb[0].mxu0
    %v3676 = vadd.f32 %v3635, %v3675
    %v3677 = vpop.f32.mrb[0].mxu0
    %3678 = vdwg.mxu0
    %3679 = vmatprep.subr.bf16.mxu0 0
    %3680 = vmatpush1.bf16.msra.mxu0 %v2618
    %3681 = vmatprep.subr.bf16.mxu0 0
    %3682 = vmatpush1.bf16.msra.mxu0 %v2621
    %3683 = vmatprep.subr.bf16.mxu0 0
    %3684 = vmatpush1.bf16.msra.mxu0 %v2624
    %3685 = vmatprep.subr.bf16.mxu0 0
    %3686 = vmatpush1.bf16.msra.mxu0 %v2627
    %3687 = vmatprep.subr.bf16.mxu0 0
    %3688 = vmatpush1.bf16.msra.mxu0 %v2630
    %3689 = vmatprep.subr.bf16.mxu0 0
    %3690 = vmatpush1.bf16.msra.mxu0 %v2633
    %3691 = vmatprep.subr.bf16.mxu0 0
    %3692 = vmatpush1.bf16.msra.mxu0 %v2636
    %3693 = vmatprep.subr.bf16.mxu0 0
    %3694 = vmatpush1.bf16.msra.mxu0 %v2639
    %3695 = vmatprep.subr.bf16.mxu0 0
    %3696 = vmatpush1.bf16.msra.mxu0 %v2642
    %3697 = vmatprep.subr.bf16.mxu0 0
    %3698 = vmatpush1.bf16.msra.mxu0 %v2645
    %3699 = vmatprep.subr.bf16.mxu0 0
    %3700 = vmatpush1.bf16.msra.mxu0 %v2648
    %3701 = vmatprep.subr.bf16.mxu0 0
    %3702 = vmatpush1.bf16.msra.mxu0 %v2651
    %3703 = vmatprep.subr.bf16.mxu0 0
    %3704 = vmatpush1.bf16.msra.mxu0 %v2654
    %3705 = vmatprep.subr.bf16.mxu0 0
    %3706 = vmatpush1.bf16.msra.mxu0 %v2657
    %3707 = vmatprep.subr.bf16.mxu0 0
    %3708 = vmatpush1.bf16.msra.mxu0 %v2660
    %3709 = vmatprep.subr.bf16.mxu0 0
    %3710 = vmatpush1.bf16.msra.mxu0 %v2663
    %3711 = vmatprep.mubr.bf16.mxu0 %v983
    %3712 = vmatmul.mubr.bf16.gmra.mrb[0].mxu0 %v979
    %v3713 = vpop.f32.mrb[0].mxu0
    %v3714 = vadd.f32 %v3673, %v3713
    %v3715 = vpop.f32.mrb[0].mxu0
    %v3716 = vpop.f32.mrb[0].mxu0
    %v3717 = vadd.f32 %v3676, %v3716
    %v3718 = vpop.f32.mrb[0].mxu0
    %3719 = vdwg.mxu0
    %v3720 = vtanh.pop %v3384
    %v3721 = vtanh.pop %v3386
    %v3722 = vtanh.pop %v3714
    %v3723 = vtanh.pop %v3388
    %v3724 = vtanh.pop %v3390
    %v3725 = vtanh.pop %v3717
    %v3726 = vpack.c.bf16 %v3723, %v3720
    %v3727 = vpack.c.bf16 %v3724, %v3721
    %v3728 = vpack.c.bf16 %v3725, %v3722
    %v3729 = vld [vmem:[#allocation8] sm:$0xff]
    %v3730 = vld [vmem:[#allocation8 + $0x8] sm:$0xf]
    %v3731 = vld [vmem:[#allocation8 + $0xc] sm:$0xff]
    %v3732 = vld [vmem:[#allocation8 + $0x14] sm:$0xf]
    %v3733 = vld [vmem:[#allocation8 + $0x18] sm:$0xff]
    %v3734 = vld [vmem:[#allocation8 + $0x20] sm:$0xf]
    %v3735 = vld [vmem:[#allocation8 + $0x24] sm:$0xff]
    %v3736 = vld [vmem:[#allocation8 + $0x2c] sm:$0xf]
    %v3737 = vld [vmem:[#allocation8 + $0x30] sm:$0xff]
    %v3738 = vld [vmem:[#allocation8 + $0x38] sm:$0xf]
    %v3739 = vld [vmem:[#allocation8 + $0x3c] sm:$0xff]
    %v3740 = vld [vmem:[#allocation8 + $0x44] sm:$0xf]
    %v3741 = vld [vmem:[#allocation8 + $0x48] sm:$0xff]
    %v3742 = vld [vmem:[#allocation8 + $0x50] sm:$0xf]
    %v3743 = vld [vmem:[#allocation8 + $0x54] sm:$0xff]
    %v3744 = vld [vmem:[#allocation8 + $0x5c] sm:$0xf]
    %v3745 = vld [vmem:[#allocation8 + $0x60] sm:$0xff]
    %v3746 = vld [vmem:[#allocation8 + $0x68] sm:$0xf]
    %v3747 = vld [vmem:[#allocation8 + $0x6c] sm:$0xff]
    %v3748 = vld [vmem:[#allocation8 + $0x74] sm:$0xf]
    %v3749 = vld [vmem:[#allocation8 + $0x78] sm:$0xff]
    %v3750 = vld [vmem:[#allocation8 + $0x80] sm:$0xf]
    %v3751 = vld [vmem:[#allocation8 + $0x84] sm:$0xff]
    %v3752 = vld [vmem:[#allocation8 + $0x8c] sm:$0xf]
    %v3753 = vld [vmem:[#allocation8 + $0x90] sm:$0xff]
    %v3754 = vld [vmem:[#allocation8 + $0x98] sm:$0xf]
    %v3755 = vld [vmem:[#allocation8 + $0x9c] sm:$0xff]
    %v3756 = vld [vmem:[#allocation8 + $0xa4] sm:$0xf]
    %v3757 = vld [vmem:[#allocation8 + $0xa8] sm:$0xff]
    %v3758 = vld [vmem:[#allocation8 + $0xb0] sm:$0xf]
    %v3759 = vld [vmem:[#allocation8 + $0xb4] sm:$0xff]
    %v3760 = vld [vmem:[#allocation8 + $0xbc] sm:$0xf]
    %v3761 = vld [vmem:[#allocation8 + $0xc0] sm:$0xff]
    %v3762 = vld [vmem:[#allocation8 + $0xc8] sm:$0xf]
    %v3763 = vld [vmem:[#allocation8 + $0xcc] sm:$0xff]
    %v3764 = vld [vmem:[#allocation8 + $0xd4] sm:$0xf]
    %v3765 = vld [vmem:[#allocation8 + $0xd8] sm:$0xff]
    %v3766 = vld [vmem:[#allocation8 + $0xe0] sm:$0xf]
    %v3767 = vld [vmem:[#allocation8 + $0xe4] sm:$0xff]
    %v3768 = vld [vmem:[#allocation8 + $0xec] sm:$0xf]
    %v3769 = vld [vmem:[#allocation8 + $0xf0] sm:$0xff]
    %v3770 = vld [vmem:[#allocation8 + $0xf8] sm:$0xf]
    %v3771 = vld [vmem:[#allocation8 + $0xfc] sm:$0xff]
    %v3772 = vld [vmem:[#allocation8 + $0x104] sm:$0xf]
    %v3773 = vld [vmem:[#allocation8 + $0x108] sm:$0xff]
    %v3774 = vld [vmem:[#allocation8 + $0x110] sm:$0xf]
    %v3775 = vld [vmem:[#allocation8 + $0x114] sm:$0xff]
    %v3776 = vld [vmem:[#allocation8 + $0x11c] sm:$0xf]
    %v3777 = vld [vmem:[#allocation8 + $0x120] sm:$0xff]
    %v3778 = vld [vmem:[#allocation8 + $0x128] sm:$0xf]
    %v3779 = vld [vmem:[#allocation8 + $0x12c] sm:$0xff]
    %v3780 = vld [vmem:[#allocation8 + $0x134] sm:$0xf]
    %v3781 = vld [vmem:[#allocation8 + $0x138] sm:$0xff]
    %v3782 = vld [vmem:[#allocation8 + $0x140] sm:$0xf]
    %v3783 = vld [vmem:[#allocation8 + $0x144] sm:$0xff]
    %v3784 = vld [vmem:[#allocation8 + $0x14c] sm:$0xf]
    %v3785 = vld [vmem:[#allocation8 + $0x150] sm:$0xff]
    %v3786 = vld [vmem:[#allocation8 + $0x158] sm:$0xf]
    %v3787 = vld [vmem:[#allocation8 + $0x15c] sm:$0xff]
    %v3788 = vld [vmem:[#allocation8 + $0x164] sm:$0xf]
    %v3789 = vld [vmem:[#allocation8 + $0x168] sm:$0xff]
    %v3790 = vld [vmem:[#allocation8 + $0x170] sm:$0xf]
    %v3791 = vld [vmem:[#allocation8 + $0x174] sm:$0xff]
    %v3792 = vld [vmem:[#allocation8 + $0x17c] sm:$0xf]
    %v3793 = vld [vmem:[#allocation8 + $0x180] sm:$0xff]
    %v3794 = vld [vmem:[#allocation8 + $0x188] sm:$0xf]
    %v3795 = vld [vmem:[#allocation8 + $0x18c] sm:$0xff]
    %v3796 = vld [vmem:[#allocation8 + $0x194] sm:$0xf]
    %v3797 = vld [vmem:[#allocation8 + $0x198] sm:$0xff]
    %v3798 = vld [vmem:[#allocation8 + $0x1a0] sm:$0xf]
    %v3799 = vld [vmem:[#allocation8 + $0x1a4] sm:$0xff]
    %v3800 = vld [vmem:[#allocation8 + $0x1ac] sm:$0xf]
    %v3801 = vld [vmem:[#allocation8 + $0x1b0] sm:$0xff]
    %v3802 = vld [vmem:[#allocation8 + $0x1b8] sm:$0xf]
    %v3803 = vld [vmem:[#allocation8 + $0x1bc] sm:$0xff]
    %v3804 = vld [vmem:[#allocation8 + $0x1c4] sm:$0xf]
    %v3805 = vld [vmem:[#allocation8 + $0x1c8] sm:$0xff]
    %v3806 = vld [vmem:[#allocation8 + $0x1d0] sm:$0xf]
    %v3807 = vld [vmem:[#allocation8 + $0x1d4] sm:$0xff]
    %v3808 = vld [vmem:[#allocation8 + $0x1dc] sm:$0xf]
    %v3809 = vld [vmem:[#allocation8 + $0x1e0] sm:$0xff]
    %v3810 = vld [vmem:[#allocation8 + $0x1e8] sm:$0xf]
    %v3811 = vld [vmem:[#allocation8 + $0x1ec] sm:$0xff]
    %v3812 = vld [vmem:[#allocation8 + $0x1f4] sm:$0xf]
    %v3813 = vld [vmem:[#allocation8 + $0x1f8] sm:$0xff]
    %v3814 = vld [vmem:[#allocation8 + $0x200] sm:$0xf]
    %v3815 = vld [vmem:[#allocation8 + $0x204] sm:$0xff]
    %v3816 = vld [vmem:[#allocation8 + $0x20c] sm:$0xf]
    %v3817 = vld [vmem:[#allocation8 + $0x210] sm:$0xff]
    %v3818 = vld [vmem:[#allocation8 + $0x218] sm:$0xf]
    %v3819 = vld [vmem:[#allocation8 + $0x21c] sm:$0xff]
    %v3820 = vld [vmem:[#allocation8 + $0x224] sm:$0xf]
    %v3821 = vld [vmem:[#allocation8 + $0x228] sm:$0xff]
    %v3822 = vld [vmem:[#allocation8 + $0x230] sm:$0xf]
    %v3823 = vld [vmem:[#allocation8 + $0x234] sm:$0xff]
    %v3824 = vld [vmem:[#allocation8 + $0x23c] sm:$0xf]
    %v3825 = vld [vmem:[#allocation10] sm:$0x7]
    %v3827 = vlaneseq
    %v3828 = vshrl.u32 %v3827, 7
    %v3829 = vsub.s32 0, %v3828
    %v3830 = vrot.slane %v3825, %v3829
    %v3831 = vlaneseq
    %v3832 = vshrl.u32 %v3831, 7
    %v3833 = vsub.s32 1, %v3832
    %v3834 = vrot.slane %v3825, %v3833
    %v3835 = vlaneseq
    %v3836 = vshrl.u32 %v3835, 7
    %v3837 = vsub.s32 2, %v3836
    %v3838 = vrot.slane %v3825, %v3837
    %v3938 = vunpack.c.l.b16 %v3729
    %v3939 = vunpack.c.h.b16 %v3729
    %v3940 = vunpack.c.l.b16 %v3730
    %v3941 = vunpack.c.l.b16 %v3731
    %v3942 = vunpack.c.h.b16 %v3731
    %v3943 = vunpack.c.l.b16 %v3732
    %v3944 = vunpack.c.l.b16 %v3733
    %v3945 = vunpack.c.h.b16 %v3733
    %v3946 = vunpack.c.l.b16 %v3734
    %v3947 = vunpack.c.l.b16 %v3735
    %v3948 = vunpack.c.h.b16 %v3735
    %v3949 = vunpack.c.l.b16 %v3736
    %v3950 = vunpack.c.l.b16 %v3737
    %v3951 = vunpack.c.h.b16 %v3737
    %v3952 = vunpack.c.l.b16 %v3738
    %v3953 = vunpack.c.l.b16 %v3739
    %v3954 = vunpack.c.h.b16 %v3739
    %v3955 = vunpack.c.l.b16 %v3740
    %v3956 = vunpack.c.l.b16 %v3741
    %v3957 = vunpack.c.h.b16 %v3741
    %v3958 = vunpack.c.l.b16 %v3742
    %v3959 = vunpack.c.l.b16 %v3743
    %v3960 = vunpack.c.h.b16 %v3743
    %v3961 = vunpack.c.l.b16 %v3744
    %v3962 = vunpack.c.l.b16 %v3745
    %v3963 = vunpack.c.h.b16 %v3745
    %v3964 = vunpack.c.l.b16 %v3746
    %v3965 = vunpack.c.l.b16 %v3747
    %v3966 = vunpack.c.h.b16 %v3747
    %v3967 = vunpack.c.l.b16 %v3748
    %v3968 = vunpack.c.l.b16 %v3749
    %v3969 = vunpack.c.h.b16 %v3749
    %v3970 = vunpack.c.l.b16 %v3750
    %v3971 = vunpack.c.l.b16 %v3751
    %v3972 = vunpack.c.h.b16 %v3751
    %v3973 = vunpack.c.l.b16 %v3752
    %v3974 = vunpack.c.l.b16 %v3753
    %v3975 = vunpack.c.h.b16 %v3753
    %v3976 = vunpack.c.l.b16 %v3754
    %v3977 = vunpack.c.l.b16 %v3755
    %v3978 = vunpack.c.h.b16 %v3755
    %v3979 = vunpack.c.l.b16 %v3756
    %v3980 = vunpack.c.l.b16 %v3757
    %v3981 = vunpack.c.h.b16 %v3757
    %v3982 = vunpack.c.l.b16 %v3758
    %v3983 = vunpack.c.l.b16 %v3759
    %v3984 = vunpack.c.h.b16 %v3759
    %v3985 = vunpack.c.l.b16 %v3760
    %v3986 = vunpack.c.l.b16 %v3761
    %v3987 = vunpack.c.h.b16 %v3761
    %v3988 = vunpack.c.l.b16 %v3762
    %v3989 = vunpack.c.l.b16 %v3763
    %v3990 = vunpack.c.h.b16 %v3763
    %v3991 = vunpack.c.l.b16 %v3764
    %v3992 = vunpack.c.l.b16 %v3765
    %v3993 = vunpack.c.h.b16 %v3765
    %v3994 = vunpack.c.l.b16 %v3766
    %v3995 = vunpack.c.l.b16 %v3767
    %v3996 = vunpack.c.h.b16 %v3767
    %v3997 = vunpack.c.l.b16 %v3768
    %v3998 = vunpack.c.l.b16 %v3769
    %v3999 = vunpack.c.h.b16 %v3769
    %v4000 = vunpack.c.l.b16 %v3770
    %v4001 = vunpack.c.l.b16 %v3771
    %v4002 = vunpack.c.h.b16 %v3771
    %v4003 = vunpack.c.l.b16 %v3772
    %v4004 = vunpack.c.l.b16 %v3773
    %v4005 = vunpack.c.h.b16 %v3773
    %v4006 = vunpack.c.l.b16 %v3774
    %v4007 = vunpack.c.l.b16 %v3775
    %v4008 = vunpack.c.h.b16 %v3775
    %v4009 = vunpack.c.l.b16 %v3776
    %v4010 = vunpack.c.l.b16 %v3777
    %v4011 = vunpack.c.h.b16 %v3777
    %v4012 = vunpack.c.l.b16 %v3778
    %v4013 = vunpack.c.l.b16 %v3779
    %v4014 = vunpack.c.h.b16 %v3779
    %v4015 = vunpack.c.l.b16 %v3780
    %v4016 = vunpack.c.l.b16 %v3781
    %v4017 = vunpack.c.h.b16 %v3781
    %v4018 = vunpack.c.l.b16 %v3782
    %v4019 = vunpack.c.l.b16 %v3783
    %v4020 = vunpack.c.h.b16 %v3783
    %v4021 = vunpack.c.l.b16 %v3784
    %v4022 = vunpack.c.l.b16 %v3785
    %v4023 = vunpack.c.h.b16 %v3785
    %v4024 = vunpack.c.l.b16 %v3786
    %v4025 = vunpack.c.l.b16 %v3787
    %v4026 = vunpack.c.h.b16 %v3787
    %v4027 = vunpack.c.l.b16 %v3788
    %v4028 = vunpack.c.l.b16 %v3789
    %v4029 = vunpack.c.h.b16 %v3789
    %v4030 = vunpack.c.l.b16 %v3790
    %v4031 = vunpack.c.l.b16 %v3791
    %v4032 = vunpack.c.h.b16 %v3791
    %v4033 = vunpack.c.l.b16 %v3792
    %v4034 = vunpack.c.l.b16 %v3793
    %v4035 = vunpack.c.h.b16 %v3793
    %v4036 = vunpack.c.l.b16 %v3794
    %v4037 = vunpack.c.l.b16 %v3795
    %v4038 = vunpack.c.h.b16 %v3795
    %v4039 = vunpack.c.l.b16 %v3796
    %v4040 = vunpack.c.l.b16 %v3797
    %v4041 = vunpack.c.h.b16 %v3797
    %v4042 = vunpack.c.l.b16 %v3798
    %v4043 = vunpack.c.l.b16 %v3799
    %v4044 = vunpack.c.h.b16 %v3799
    %v4045 = vunpack.c.l.b16 %v3800
    %v4046 = vunpack.c.l.b16 %v3801
    %v4047 = vunpack.c.h.b16 %v3801
    %v4048 = vunpack.c.l.b16 %v3802
    %v4049 = vunpack.c.l.b16 %v3803
    %v4050 = vunpack.c.h.b16 %v3803
    %v4051 = vunpack.c.l.b16 %v3804
    %v4052 = vunpack.c.l.b16 %v3805
    %v4053 = vunpack.c.h.b16 %v3805
    %v4054 = vunpack.c.l.b16 %v3806
    %v4055 = vunpack.c.l.b16 %v3807
    %v4056 = vunpack.c.h.b16 %v3807
    %v4057 = vunpack.c.l.b16 %v3808
    %v4058 = vunpack.c.l.b16 %v3809
    %v4059 = vunpack.c.h.b16 %v3809
    %v4060 = vunpack.c.l.b16 %v3810
    %v4061 = vunpack.c.l.b16 %v3811
    %v4062 = vunpack.c.h.b16 %v3811
    %v4063 = vunpack.c.l.b16 %v3812
    %v4064 = vunpack.c.l.b16 %v3813
    %v4065 = vunpack.c.h.b16 %v3813
    %v4066 = vunpack.c.l.b16 %v3814
    %v4067 = vunpack.c.l.b16 %v3815
    %v4068 = vunpack.c.h.b16 %v3815
    %v4069 = vunpack.c.l.b16 %v3816
    %v4070 = vunpack.c.l.b16 %v3817
    %v4071 = vunpack.c.h.b16 %v3817
    %v4072 = vunpack.c.l.b16 %v3818
    %v4073 = vunpack.c.l.b16 %v3819
    %v4074 = vunpack.c.h.b16 %v3819
    %v4075 = vunpack.c.l.b16 %v3820
    %v4076 = vunpack.c.l.b16 %v3821
    %v4077 = vunpack.c.h.b16 %v3821
    %v4078 = vunpack.c.l.b16 %v3822
    %v4079 = vunpack.c.l.b16 %v3823
    %v4080 = vunpack.c.h.b16 %v3823
    %v4081 = vunpack.c.l.b16 %v3824
    %v4082 = vpack.c.b16 %v3941, %v3938
    %v4083 = vpack.c.b16 %v3942, %v3939
    %v4084 = vpack.c.b16 %v3943, %v3940
    %v4085 = vpack.c.b16 %v3947, %v3944
    %v4086 = vpack.c.b16 %v3948, %v3945
    %v4087 = vpack.c.b16 %v3949, %v3946
    %v4088 = vpack.c.b16 %v3953, %v3950
    %v4089 = vpack.c.b16 %v3954, %v3951
    %v4090 = vpack.c.b16 %v3955, %v3952
    %v4091 = vpack.c.b16 %v3959, %v3956
    %v4092 = vpack.c.b16 %v3960, %v3957
    %v4093 = vpack.c.b16 %v3961, %v3958
    %v4094 = vpack.c.b16 %v3965, %v3962
    %v4095 = vpack.c.b16 %v3966, %v3963
    %v4096 = vpack.c.b16 %v3967, %v3964
    %v4097 = vpack.c.b16 %v3971, %v3968
    %v4098 = vpack.c.b16 %v3972, %v3969
    %v4099 = vpack.c.b16 %v3973, %v3970
    %v4100 = vpack.c.b16 %v3977, %v3974
    %v4101 = vpack.c.b16 %v3978, %v3975
    %v4102 = vpack.c.b16 %v3979, %v3976
    %v4103 = vpack.c.b16 %v3983, %v3980
    %v4104 = vpack.c.b16 %v3984, %v3981
    %v4105 = vpack.c.b16 %v3985, %v3982
    %v4106 = vpack.c.b16 %v3989, %v3986
    %v4107 = vpack.c.b16 %v3990, %v3987
    %v4108 = vpack.c.b16 %v3991, %v3988
    %v4109 = vpack.c.b16 %v3995, %v3992
    %v4110 = vpack.c.b16 %v3996, %v3993
    %v4111 = vpack.c.b16 %v3997, %v3994
    %v4112 = vpack.c.b16 %v4001, %v3998
    %v4113 = vpack.c.b16 %v4002, %v3999
    %v4114 = vpack.c.b16 %v4003, %v4000
    %v4115 = vpack.c.b16 %v4007, %v4004
    %v4116 = vpack.c.b16 %v4008, %v4005
    %v4117 = vpack.c.b16 %v4009, %v4006
    %v4118 = vpack.c.b16 %v4013, %v4010
    %v4119 = vpack.c.b16 %v4014, %v4011
    %v4120 = vpack.c.b16 %v4015, %v4012
    %v4121 = vpack.c.b16 %v4019, %v4016
    %v4122 = vpack.c.b16 %v4020, %v4017
    %v4123 = vpack.c.b16 %v4021, %v4018
    %v4124 = vpack.c.b16 %v4025, %v4022
    %v4125 = vpack.c.b16 %v4026, %v4023
    %v4126 = vpack.c.b16 %v4027, %v4024
    %v4127 = vpack.c.b16 %v4031, %v4028
    %v4128 = vpack.c.b16 %v4032, %v4029
    %v4129 = vpack.c.b16 %v4033, %v4030
    %v4130 = vpack.c.b16 %v4037, %v4034
    %v4131 = vpack.c.b16 %v4038, %v4035
    %v4132 = vpack.c.b16 %v4039, %v4036
    %v4133 = vpack.c.b16 %v4043, %v4040
    %v4134 = vpack.c.b16 %v4044, %v4041
    %v4135 = vpack.c.b16 %v4045, %v4042
    %v4136 = vpack.c.b16 %v4049, %v4046
    %v4137 = vpack.c.b16 %v4050, %v4047
    %v4138 = vpack.c.b16 %v4051, %v4048
    %v4139 = vpack.c.b16 %v4055, %v4052
    %v4140 = vpack.c.b16 %v4056, %v4053
    %v4141 = vpack.c.b16 %v4057, %v4054
    %v4142 = vpack.c.b16 %v4061, %v4058
    %v4143 = vpack.c.b16 %v4062, %v4059
    %v4144 = vpack.c.b16 %v4063, %v4060
    %v4145 = vpack.c.b16 %v4067, %v4064
    %v4146 = vpack.c.b16 %v4068, %v4065
    %v4147 = vpack.c.b16 %v4069, %v4066
    %v4148 = vpack.c.b16 %v4073, %v4070
    %v4149 = vpack.c.b16 %v4074, %v4071
    %v4150 = vpack.c.b16 %v4075, %v4072
    %v4151 = vpack.c.b16 %v4079, %v4076
    %v4152 = vpack.c.b16 %v4080, %v4077
    %v4153 = vpack.c.b16 %v4081, %v4078
    %4226 = vmatprep.subr.bf16.mxu0 %v4083
    %4227 = vmatpush1.bf16.msra.mxu0 %v4082
    %4228 = vmatprep.subr.bf16.mxu0 %v4086
    %4229 = vmatpush1.bf16.msra.mxu0 %v4085
    %4230 = vmatprep.subr.bf16.mxu0 %v4089
    %4231 = vmatpush1.bf16.msra.mxu0 %v4088
    %4232 = vmatprep.subr.bf16.mxu0 %v4092
    %4233 = vmatpush1.bf16.msra.mxu0 %v4091
    %4234 = vmatprep.subr.bf16.mxu0 %v4095
    %4235 = vmatpush1.bf16.msra.mxu0 %v4094
    %4236 = vmatprep.subr.bf16.mxu0 %v4098
    %4237 = vmatpush1.bf16.msra.mxu0 %v4097
    %4238 = vmatprep.subr.bf16.mxu0 %v4101
    %4239 = vmatpush1.bf16.msra.mxu0 %v4100
    %4240 = vmatprep.subr.bf16.mxu0 %v4104
    %4241 = vmatpush1.bf16.msra.mxu0 %v4103
    %4242 = vmatprep.subr.bf16.mxu0 %v4107
    %4243 = vmatpush1.bf16.msra.mxu0 %v4106
    %4244 = vmatprep.subr.bf16.mxu0 %v4110
    %4245 = vmatpush1.bf16.msra.mxu0 %v4109
    %4246 = vmatprep.subr.bf16.mxu0 %v4113
    %4247 = vmatpush1.bf16.msra.mxu0 %v4112
    %4248 = vmatprep.subr.bf16.mxu0 %v4116
    %4249 = vmatpush1.bf16.msra.mxu0 %v4115
    %4250 = vmatprep.subr.bf16.mxu0 %v4119
    %4251 = vmatpush1.bf16.msra.mxu0 %v4118
    %4252 = vmatprep.subr.bf16.mxu0 %v4122
    %4253 = vmatpush1.bf16.msra.mxu0 %v4121
    %4254 = vmatprep.subr.bf16.mxu0 %v4125
    %4255 = vmatpush1.bf16.msra.mxu0 %v4124
    %4256 = vmatprep.subr.bf16.mxu0 %v4128
    %4257 = vmatpush1.bf16.msra.mxu0 %v4127
    %4258 = vmatprep.mubr.bf16.mxu0 %v3727
    %4259 = vmatmul.mubr.bf16.gmra.mrb[0].mxu0 %v3726
    %v4260 = vpop.f32.mrb[0].mxu0
    %v4261 = vadd.f32 %v3830, %v4260
    %v4262 = vpop.f32.mrb[0].mxu0
    %v4263 = vadd.f32 %v3834, %v4262
    %v4264 = vpop.f32.mrb[0].mxu0
    %v4265 = vadd.f32 %v3830, %v4264
    %v4266 = vpop.f32.mrb[0].mxu0
    %v4267 = vadd.f32 %v3834, %v4266
    %4268 = vdwg.mxu0
    %4269 = vmatprep.subr.bf16.mxu0 %v4131
    %4270 = vmatpush1.bf16.msra.mxu0 %v4130
    %4271 = vmatprep.subr.bf16.mxu0 %v4134
    %4272 = vmatpush1.bf16.msra.mxu0 %v4133
    %4273 = vmatprep.subr.bf16.mxu0 %v4137
    %4274 = vmatpush1.bf16.msra.mxu0 %v4136
    %4275 = vmatprep.subr.bf16.mxu0 %v4140
    %4276 = vmatpush1.bf16.msra.mxu0 %v4139
    %4277 = vmatprep.subr.bf16.mxu0 %v4143
    %4278 = vmatpush1.bf16.msra.mxu0 %v4142
    %4279 = vmatprep.subr.bf16.mxu0 %v4146
    %4280 = vmatpush1.bf16.msra.mxu0 %v4145
    %4281 = vmatprep.subr.bf16.mxu0 %v4149
    %4282 = vmatpush1.bf16.msra.mxu0 %v4148
    %4283 = vmatprep.subr.bf16.mxu0 %v4152
    %4284 = vmatpush1.bf16.msra.mxu0 %v4151
    %4285 = vmatprep.subr.bf16.mxu0 0
    %4286 = vmatpush1.bf16.msra.mxu0 0
    %4287 = vmatprep.subr.bf16.mxu0 0
    %4288 = vmatpush1.bf16.msra.mxu0 0
    %4289 = vmatprep.subr.bf16.mxu0 0
    %4290 = vmatpush1.bf16.msra.mxu0 0
    %4291 = vmatprep.subr.bf16.mxu0 0
    %4292 = vmatpush1.bf16.msra.mxu0 0
    %4293 = vmatprep.subr.bf16.mxu0 0
    %4294 = vmatpush1.bf16.msra.mxu0 0
    %4295 = vmatprep.subr.bf16.mxu0 0
    %4296 = vmatpush1.bf16.msra.mxu0 0
    %4297 = vmatprep.subr.bf16.mxu0 0
    %4298 = vmatpush1.bf16.msra.mxu0 0
    %4299 = vmatprep.subr.bf16.mxu0 0
    %4300 = vmatpush1.bf16.msra.mxu0 0
    %4301 = vmatprep.mubr.bf16.mxu0 0
    %4302 = vmatmul.mubr.bf16.gmra.mrb[0].mxu0 %v3728
    %v4303 = vpop.f32.mrb[0].mxu0
    %v4304 = vadd.f32 %v4261, %v4303
    %v4305 = vpop.f32.mrb[0].mxu0
    %v4306 = vadd.f32 %v4263, %v4305
    %v4307 = vpop.f32.mrb[0].mxu0
    %v4308 = vadd.f32 %v4265, %v4307
    %v4309 = vpop.f32.mrb[0].mxu0
    %v4310 = vadd.f32 %v4267, %v4309
    %4311 = vdwg.mxu0
    %4312 = vmatprep.subr.bf16.mxu0 0
    %4313 = vmatpush1.bf16.msra.mxu0 %v4084
    %4314 = vmatprep.subr.bf16.mxu0 0
    %4315 = vmatpush1.bf16.msra.mxu0 %v4087
    %4316 = vmatprep.subr.bf16.mxu0 0
    %4317 = vmatpush1.bf16.msra.mxu0 %v4090
    %4318 = vmatprep.subr.bf16.mxu0 0
    %4319 = vmatpush1.bf16.msra.mxu0 %v4093
    %4320 = vmatprep.subr.bf16.mxu0 0
    %4321 = vmatpush1.bf16.msra.mxu0 %v4096
    %4322 = vmatprep.subr.bf16.mxu0 0
    %4323 = vmatpush1.bf16.msra.mxu0 %v4099
    %4324 = vmatprep.subr.bf16.mxu0 0
    %4325 = vmatpush1.bf16.msra.mxu0 %v4102
    %4326 = vmatprep.subr.bf16.mxu0 0
    %4327 = vmatpush1.bf16.msra.mxu0 %v4105
    %4328 = vmatprep.subr.bf16.mxu0 0
    %4329 = vmatpush1.bf16.msra.mxu0 %v4108
    %4330 = vmatprep.subr.bf16.mxu0 0
    %4331 = vmatpush1.bf16.msra.mxu0 %v4111
    %4332 = vmatprep.subr.bf16.mxu0 0
    %4333 = vmatpush1.bf16.msra.mxu0 %v4114
    %4334 = vmatprep.subr.bf16.mxu0 0
    %4335 = vmatpush1.bf16.msra.mxu0 %v4117
    %4336 = vmatprep.subr.bf16.mxu0 0
    %4337 = vmatpush1.bf16.msra.mxu0 %v4120
    %4338 = vmatprep.subr.bf16.mxu0 0
    %4339 = vmatpush1.bf16.msra.mxu0 %v4123
    %4340 = vmatprep.subr.bf16.mxu0 0
    %4341 = vmatpush1.bf16.msra.mxu0 %v4126
    %4342 = vmatprep.subr.bf16.mxu0 0
    %4343 = vmatpush1.bf16.msra.mxu0 %v4129
    %4344 = vmatprep.mubr.bf16.mxu0 %v3727
    %4345 = vmatmul.mubr.bf16.gmra.mrb[0].mxu0 %v3726
    %v4346 = vpop.f32.mrb[0].mxu0
    %v4347 = vadd.f32 %v3838, %v4346
    %v4348 = vpop.f32.mrb[0].mxu0
    %v4349 = vpop.f32.mrb[0].mxu0
    %v4350 = vadd.f32 %v3838, %v4349
    %v4351 = vpop.f32.mrb[0].mxu0
    %4352 = vdwg.mxu0
    %4353 = vmatprep.subr.bf16.mxu0 0
    %4354 = vmatpush1.bf16.msra.mxu0 %v4132
    %4355 = vmatprep.subr.bf16.mxu0 0
    %4356 = vmatpush1.bf16.msra.mxu0 %v4135
    %4357 = vmatprep.subr.bf16.mxu0 0
    %4358 = vmatpush1.bf16.msra.mxu0 %v4138
    %4359 = vmatprep.subr.bf16.mxu0 0
    %4360 = vmatpush1.bf16.msra.mxu0 %v4141
    %4361 = vmatprep.subr.bf16.mxu0 0
    %4362 = vmatpush1.bf16.msra.mxu0 %v4144
    %4363 = vmatprep.subr.bf16.mxu0 0
    %4364 = vmatpush1.bf16.msra.mxu0 %v4147
    %4365 = vmatprep.subr.bf16.mxu0 0
    %4366 = vmatpush1.bf16.msra.mxu0 %v4150
    %4367 = vmatprep.subr.bf16.mxu0 0
    %4368 = vmatpush1.bf16.msra.mxu0 %v4153
    %4369 = vmatprep.subr.bf16.mxu0 0
    %4370 = vmatpush1.bf16.msra.mxu0 0
    %4371 = vmatprep.subr.bf16.mxu0 0
    %4372 = vmatpush1.bf16.msra.mxu0 0
    %4373 = vmatprep.subr.bf16.mxu0 0
    %4374 = vmatpush1.bf16.msra.mxu0 0
    %4375 = vmatprep.subr.bf16.mxu0 0
    %4376 = vmatpush1.bf16.msra.mxu0 0
    %4377 = vmatprep.subr.bf16.mxu0 0
    %4378 = vmatpush1.bf16.msra.mxu0 0
    %4379 = vmatprep.subr.bf16.mxu0 0
    %4380 = vmatpush1.bf16.msra.mxu0 0
    %4381 = vmatprep.subr.bf16.mxu0 0
    %4382 = vmatpush1.bf16.msra.mxu0 0
    %4383 = vmatprep.subr.bf16.mxu0 0
    %4384 = vmatpush1.bf16.msra.mxu0 0
    %4385 = vmatprep.mubr.bf16.mxu0 0
    %4386 = vmatmul.mubr.bf16.gmra.mrb[0].mxu0 %v3728
    %v4387 = vpop.f32.mrb[0].mxu0
    %v4388 = vadd.f32 %v4347, %v4387
    %v4389 = vpop.f32.mrb[0].mxu0
    %v4390 = vpop.f32.mrb[0].mxu0
    %v4391 = vadd.f32 %v4350, %v4390
    %v4392 = vpop.f32.mrb[0].mxu0
    %4393 = vdwg.mxu0
    %v4394 = vtanh.pop %v4304
    %v4395 = vtanh.pop %v4306
    %v4396 = vtanh.pop %v4388
    %v4397 = vtanh.pop %v4308
    %v4398 = vtanh.pop %v4310
    %v4399 = vtanh.pop %v4391
    %v4400 = vpack.c.bf16 %v4397, %v4394
    %v4401 = vpack.c.bf16 %v4398, %v4395
    %v4402 = vpack.c.bf16 %v4399, %v4396
    %v4403 = vld [vmem:[#allocation11] sm:$0xff]
    %v4404 = vld [vmem:[#allocation11 + $0x8] sm:$0xf]
    %v4405 = vld [vmem:[#allocation11 + $0xc] sm:$0xff]
    %v4406 = vld [vmem:[#allocation11 + $0x14] sm:$0xf]
    %v4407 = vld [vmem:[#allocation11 + $0x18] sm:$0xff]
    %v4408 = vld [vmem:[#allocation11 + $0x20] sm:$0xf]
    %v4409 = vld [vmem:[#allocation11 + $0x24] sm:$0xff]
    %v4410 = vld [vmem:[#allocation11 + $0x2c] sm:$0xf]
    %v4411 = vld [vmem:[#allocation11 + $0x30] sm:$0xff]
    %v4412 = vld [vmem:[#allocation11 + $0x38] sm:$0xf]
    %v4413 = vld [vmem:[#allocation11 + $0x3c] sm:$0xff]
    %v4414 = vld [vmem:[#allocation11 + $0x44] sm:$0xf]
    %v4415 = vld [vmem:[#allocation11 + $0x48] sm:$0xff]
    %v4416 = vld [vmem:[#allocation11 + $0x50] sm:$0xf]
    %v4417 = vld [vmem:[#allocation11 + $0x54] sm:$0xff]
    %v4418 = vld [vmem:[#allocation11 + $0x5c] sm:$0xf]
    %v4419 = vld [vmem:[#allocation11 + $0x60] sm:$0xff]
    %v4420 = vld [vmem:[#allocation11 + $0x68] sm:$0xf]
    %v4421 = vld [vmem:[#allocation11 + $0x6c] sm:$0xff]
    %v4422 = vld [vmem:[#allocation11 + $0x74] sm:$0xf]
    %v4423 = vld [vmem:[#allocation11 + $0x78] sm:$0xff]
    %v4424 = vld [vmem:[#allocation11 + $0x80] sm:$0xf]
    %v4425 = vld [vmem:[#allocation11 + $0x84] sm:$0xff]
    %v4426 = vld [vmem:[#allocation11 + $0x8c] sm:$0xf]
    %v4427 = vld [vmem:[#allocation11 + $0x90] sm:$0xff]
    %v4428 = vld [vmem:[#allocation11 + $0x98] sm:$0xf]
    %v4429 = vld [vmem:[#allocation11 + $0x9c] sm:$0xff]
    %v4430 = vld [vmem:[#allocation11 + $0xa4] sm:$0xf]
    %v4431 = vld [vmem:[#allocation11 + $0xa8] sm:$0xff]
    %v4432 = vld [vmem:[#allocation11 + $0xb0] sm:$0xf]
    %v4433 = vld [vmem:[#allocation11 + $0xb4] sm:$0xff]
    %v4434 = vld [vmem:[#allocation11 + $0xbc] sm:$0xf]
    %v4435 = vld [vmem:[#allocation11 + $0xc0] sm:$0xff]
    %v4436 = vld [vmem:[#allocation11 + $0xc8] sm:$0xf]
    %v4437 = vld [vmem:[#allocation11 + $0xcc] sm:$0xff]
    %v4438 = vld [vmem:[#allocation11 + $0xd4] sm:$0xf]
    %v4439 = vld [vmem:[#allocation11 + $0xd8] sm:$0xff]
    %v4440 = vld [vmem:[#allocation11 + $0xe0] sm:$0xf]
    %v4441 = vld [vmem:[#allocation11 + $0xe4] sm:$0xff]
    %v4442 = vld [vmem:[#allocation11 + $0xec] sm:$0xf]
    %v4443 = vld [vmem:[#allocation11 + $0xf0] sm:$0xff]
    %v4444 = vld [vmem:[#allocation11 + $0xf8] sm:$0xf]
    %v4445 = vld [vmem:[#allocation11 + $0xfc] sm:$0xff]
    %v4446 = vld [vmem:[#allocation11 + $0x104] sm:$0xf]
    %v4447 = vld [vmem:[#allocation11 + $0x108] sm:$0xff]
    %v4448 = vld [vmem:[#allocation11 + $0x110] sm:$0xf]
    %v4449 = vld [vmem:[#allocation11 + $0x114] sm:$0xff]
    %v4450 = vld [vmem:[#allocation11 + $0x11c] sm:$0xf]
    %v4451 = vld [vmem:[#allocation11 + $0x120] sm:$0xff]
    %v4452 = vld [vmem:[#allocation11 + $0x128] sm:$0xf]
    %v4453 = vld [vmem:[#allocation11 + $0x12c] sm:$0xff]
    %v4454 = vld [vmem:[#allocation11 + $0x134] sm:$0xf]
    %v4455 = vld [vmem:[#allocation11 + $0x138] sm:$0xff]
    %v4456 = vld [vmem:[#allocation11 + $0x140] sm:$0xf]
    %v4457 = vld [vmem:[#allocation11 + $0x144] sm:$0xff]
    %v4458 = vld [vmem:[#allocation11 + $0x14c] sm:$0xf]
    %v4459 = vld [vmem:[#allocation11 + $0x150] sm:$0xff]
    %v4460 = vld [vmem:[#allocation11 + $0x158] sm:$0xf]
    %v4461 = vld [vmem:[#allocation11 + $0x15c] sm:$0xff]
    %v4462 = vld [vmem:[#allocation11 + $0x164] sm:$0xf]
    %v4463 = vld [vmem:[#allocation11 + $0x168] sm:$0xff]
    %v4464 = vld [vmem:[#allocation11 + $0x170] sm:$0xf]
    %v4465 = vld [vmem:[#allocation11 + $0x174] sm:$0xff]
    %v4466 = vld [vmem:[#allocation11 + $0x17c] sm:$0xf]
    %v4467 = vld [vmem:[#allocation11 + $0x180] sm:$0xff]
    %v4468 = vld [vmem:[#allocation11 + $0x188] sm:$0xf]
    %v4469 = vld [vmem:[#allocation11 + $0x18c] sm:$0xff]
    %v4470 = vld [vmem:[#allocation11 + $0x194] sm:$0xf]
    %v4471 = vld [vmem:[#allocation11 + $0x198] sm:$0xff]
    %v4472 = vld [vmem:[#allocation11 + $0x1a0] sm:$0xf]
    %v4473 = vld [vmem:[#allocation11 + $0x1a4] sm:$0xff]
    %v4474 = vld [vmem:[#allocation11 + $0x1ac] sm:$0xf]
    %v4475 = vld [vmem:[#allocation11 + $0x1b0] sm:$0xff]
    %v4476 = vld [vmem:[#allocation11 + $0x1b8] sm:$0xf]
    %v4477 = vld [vmem:[#allocation11 + $0x1bc] sm:$0xff]
    %v4478 = vld [vmem:[#allocation11 + $0x1c4] sm:$0xf]
    %v4479 = vld [vmem:[#allocation11 + $0x1c8] sm:$0xff]
    %v4480 = vld [vmem:[#allocation11 + $0x1d0] sm:$0xf]
    %v4481 = vld [vmem:[#allocation11 + $0x1d4] sm:$0xff]
    %v4482 = vld [vmem:[#allocation11 + $0x1dc] sm:$0xf]
    %v4483 = vld [vmem:[#allocation11 + $0x1e0] sm:$0xff]
    %v4484 = vld [vmem:[#allocation11 + $0x1e8] sm:$0xf]
    %v4485 = vld [vmem:[#allocation11 + $0x1ec] sm:$0xff]
    %v4486 = vld [vmem:[#allocation11 + $0x1f4] sm:$0xf]
    %v4487 = vld [vmem:[#allocation11 + $0x1f8] sm:$0xff]
    %v4488 = vld [vmem:[#allocation11 + $0x200] sm:$0xf]
    %v4489 = vld [vmem:[#allocation11 + $0x204] sm:$0xff]
    %v4490 = vld [vmem:[#allocation11 + $0x20c] sm:$0xf]
    %v4491 = vld [vmem:[#allocation11 + $0x210] sm:$0xff]
    %v4492 = vld [vmem:[#allocation11 + $0x218] sm:$0xf]
    %v4493 = vld [vmem:[#allocation11 + $0x21c] sm:$0xff]
    %v4494 = vld [vmem:[#allocation11 + $0x224] sm:$0xf]
    %v4495 = vld [vmem:[#allocation11 + $0x228] sm:$0xff]
    %v4496 = vld [vmem:[#allocation11 + $0x230] sm:$0xf]
    %v4497 = vld [vmem:[#allocation11 + $0x234] sm:$0xff]
    %v4498 = vld [vmem:[#allocation11 + $0x23c] sm:$0xf]
    %v4499 = vld [vmem:[#allocation13] sm:$0x7]
    %v4501 = vlaneseq
    %v4502 = vshrl.u32 %v4501, 7
    %v4503 = vsub.s32 0, %v4502
    %v4504 = vrot.slane %v4499, %v4503
    %v4505 = vlaneseq
    %v4506 = vshrl.u32 %v4505, 7
    %v4507 = vsub.s32 1, %v4506
    %v4508 = vrot.slane %v4499, %v4507
    %v4509 = vlaneseq
    %v4510 = vshrl.u32 %v4509, 7
    %v4511 = vsub.s32 2, %v4510
    %v4512 = vrot.slane %v4499, %v4511
    %v4612 = vunpack.c.l.b16 %v4403
    %v4613 = vunpack.c.h.b16 %v4403
    %v4614 = vunpack.c.l.b16 %v4404
    %v4615 = vunpack.c.l.b16 %v4405
    %v4616 = vunpack.c.h.b16 %v4405
    %v4617 = vunpack.c.l.b16 %v4406
    %v4618 = vunpack.c.l.b16 %v4407
    %v4619 = vunpack.c.h.b16 %v4407
    %v4620 = vunpack.c.l.b16 %v4408
    %v4621 = vunpack.c.l.b16 %v4409
    %v4622 = vunpack.c.h.b16 %v4409
    %v4623 = vunpack.c.l.b16 %v4410
    %v4624 = vunpack.c.l.b16 %v4411
    %v4625 = vunpack.c.h.b16 %v4411
    %v4626 = vunpack.c.l.b16 %v4412
    %v4627 = vunpack.c.l.b16 %v4413
    %v4628 = vunpack.c.h.b16 %v4413
    %v4629 = vunpack.c.l.b16 %v4414
    %v4630 = vunpack.c.l.b16 %v4415
    %v4631 = vunpack.c.h.b16 %v4415
    %v4632 = vunpack.c.l.b16 %v4416
    %v4633 = vunpack.c.l.b16 %v4417
    %v4634 = vunpack.c.h.b16 %v4417
    %v4635 = vunpack.c.l.b16 %v4418
    %v4636 = vunpack.c.l.b16 %v4419
    %v4637 = vunpack.c.h.b16 %v4419
    %v4638 = vunpack.c.l.b16 %v4420
    %v4639 = vunpack.c.l.b16 %v4421
    %v4640 = vunpack.c.h.b16 %v4421
    %v4641 = vunpack.c.l.b16 %v4422
    %v4642 = vunpack.c.l.b16 %v4423
    %v4643 = vunpack.c.h.b16 %v4423
    %v4644 = vunpack.c.l.b16 %v4424
    %v4645 = vunpack.c.l.b16 %v4425
    %v4646 = vunpack.c.h.b16 %v4425
    %v4647 = vunpack.c.l.b16 %v4426
    %v4648 = vunpack.c.l.b16 %v4427
    %v4649 = vunpack.c.h.b16 %v4427
    %v4650 = vunpack.c.l.b16 %v4428
    %v4651 = vunpack.c.l.b16 %v4429
    %v4652 = vunpack.c.h.b16 %v4429
    %v4653 = vunpack.c.l.b16 %v4430
    %v4654 = vunpack.c.l.b16 %v4431
    %v4655 = vunpack.c.h.b16 %v4431
    %v4656 = vunpack.c.l.b16 %v4432
    %v4657 = vunpack.c.l.b16 %v4433
    %v4658 = vunpack.c.h.b16 %v4433
    %v4659 = vunpack.c.l.b16 %v4434
    %v4660 = vunpack.c.l.b16 %v4435
    %v4661 = vunpack.c.h.b16 %v4435
    %v4662 = vunpack.c.l.b16 %v4436
    %v4663 = vunpack.c.l.b16 %v4437
    %v4664 = vunpack.c.h.b16 %v4437
    %v4665 = vunpack.c.l.b16 %v4438
    %v4666 = vunpack.c.l.b16 %v4439
    %v4667 = vunpack.c.h.b16 %v4439
    %v4668 = vunpack.c.l.b16 %v4440
    %v4669 = vunpack.c.l.b16 %v4441
    %v4670 = vunpack.c.h.b16 %v4441
    %v4671 = vunpack.c.l.b16 %v4442
    %v4672 = vunpack.c.l.b16 %v4443
    %v4673 = vunpack.c.h.b16 %v4443
    %v4674 = vunpack.c.l.b16 %v4444
    %v4675 = vunpack.c.l.b16 %v4445
    %v4676 = vunpack.c.h.b16 %v4445
    %v4677 = vunpack.c.l.b16 %v4446
    %v4678 = vunpack.c.l.b16 %v4447
    %v4679 = vunpack.c.h.b16 %v4447
    %v4680 = vunpack.c.l.b16 %v4448
    %v4681 = vunpack.c.l.b16 %v4449
    %v4682 = vunpack.c.h.b16 %v4449
    %v4683 = vunpack.c.l.b16 %v4450
    %v4684 = vunpack.c.l.b16 %v4451
    %v4685 = vunpack.c.h.b16 %v4451
    %v4686 = vunpack.c.l.b16 %v4452
    %v4687 = vunpack.c.l.b16 %v4453
    %v4688 = vunpack.c.h.b16 %v4453
    %v4689 = vunpack.c.l.b16 %v4454
    %v4690 = vunpack.c.l.b16 %v4455
    %v4691 = vunpack.c.h.b16 %v4455
    %v4692 = vunpack.c.l.b16 %v4456
    %v4693 = vunpack.c.l.b16 %v4457
    %v4694 = vunpack.c.h.b16 %v4457
    %v4695 = vunpack.c.l.b16 %v4458
    %v4696 = vunpack.c.l.b16 %v4459
    %v4697 = vunpack.c.h.b16 %v4459
    %v4698 = vunpack.c.l.b16 %v4460
    %v4699 = vunpack.c.l.b16 %v4461
    %v4700 = vunpack.c.h.b16 %v4461
    %v4701 = vunpack.c.l.b16 %v4462
    %v4702 = vunpack.c.l.b16 %v4463
    %v4703 = vunpack.c.h.b16 %v4463
    %v4704 = vunpack.c.l.b16 %v4464
    %v4705 = vunpack.c.l.b16 %v4465
    %v4706 = vunpack.c.h.b16 %v4465
    %v4707 = vunpack.c.l.b16 %v4466
    %v4708 = vunpack.c.l.b16 %v4467
    %v4709 = vunpack.c.h.b16 %v4467
    %v4710 = vunpack.c.l.b16 %v4468
    %v4711 = vunpack.c.l.b16 %v4469
    %v4712 = vunpack.c.h.b16 %v4469
    %v4713 = vunpack.c.l.b16 %v4470
    %v4714 = vunpack.c.l.b16 %v4471
    %v4715 = vunpack.c.h.b16 %v4471
    %v4716 = vunpack.c.l.b16 %v4472
    %v4717 = vunpack.c.l.b16 %v4473
    %v4718 = vunpack.c.h.b16 %v4473
    %v4719 = vunpack.c.l.b16 %v4474
    %v4720 = vunpack.c.l.b16 %v4475
    %v4721 = vunpack.c.h.b16 %v4475
    %v4722 = vunpack.c.l.b16 %v4476
    %v4723 = vunpack.c.l.b16 %v4477
    %v4724 = vunpack.c.h.b16 %v4477
    %v4725 = vunpack.c.l.b16 %v4478
    %v4726 = vunpack.c.l.b16 %v4479
    %v4727 = vunpack.c.h.b16 %v4479
    %v4728 = vunpack.c.l.b16 %v4480
    %v4729 = vunpack.c.l.b16 %v4481
    %v4730 = vunpack.c.h.b16 %v4481
    %v4731 = vunpack.c.l.b16 %v4482
    %v4732 = vunpack.c.l.b16 %v4483
    %v4733 = vunpack.c.h.b16 %v4483
    %v4734 = vunpack.c.l.b16 %v4484
    %v4735 = vunpack.c.l.b16 %v4485
    %v4736 = vunpack.c.h.b16 %v4485
    %v4737 = vunpack.c.l.b16 %v4486
    %v4738 = vunpack.c.l.b16 %v4487
    %v4739 = vunpack.c.h.b16 %v4487
    %v4740 = vunpack.c.l.b16 %v4488
    %v4741 = vunpack.c.l.b16 %v4489
    %v4742 = vunpack.c.h.b16 %v4489
    %v4743 = vunpack.c.l.b16 %v4490
    %v4744 = vunpack.c.l.b16 %v4491
    %v4745 = vunpack.c.h.b16 %v4491
    %v4746 = vunpack.c.l.b16 %v4492
    %v4747 = vunpack.c.l.b16 %v4493
    %v4748 = vunpack.c.h.b16 %v4493
    %v4749 = vunpack.c.l.b16 %v4494
    %v4750 = vunpack.c.l.b16 %v4495
    %v4751 = vunpack.c.h.b16 %v4495
    %v4752 = vunpack.c.l.b16 %v4496
    %v4753 = vunpack.c.l.b16 %v4497
    %v4754 = vunpack.c.h.b16 %v4497
    %v4755 = vunpack.c.l.b16 %v4498
    %v4756 = vpack.c.b16 %v4615, %v4612
    %v4757 = vpack.c.b16 %v4616, %v4613
    %v4758 = vpack.c.b16 %v4617, %v4614
    %v4759 = vpack.c.b16 %v4621, %v4618
    %v4760 = vpack.c.b16 %v4622, %v4619
    %v4761 = vpack.c.b16 %v4623, %v4620
    %v4762 = vpack.c.b16 %v4627, %v4624
    %v4763 = vpack.c.b16 %v4628, %v4625
    %v4764 = vpack.c.b16 %v4629, %v4626
    %v4765 = vpack.c.b16 %v4633, %v4630
    %v4766 = vpack.c.b16 %v4634, %v4631
    %v4767 = vpack.c.b16 %v4635, %v4632
    %v4768 = vpack.c.b16 %v4639, %v4636
    %v4769 = vpack.c.b16 %v4640, %v4637
    %v4770 = vpack.c.b16 %v4641, %v4638
    %v4771 = vpack.c.b16 %v4645, %v4642
    %v4772 = vpack.c.b16 %v4646, %v4643
    %v4773 = vpack.c.b16 %v4647, %v4644
    %v4774 = vpack.c.b16 %v4651, %v4648
    %v4775 = vpack.c.b16 %v4652, %v4649
    %v4776 = vpack.c.b16 %v4653, %v4650
    %v4777 = vpack.c.b16 %v4657, %v4654
    %v4778 = vpack.c.b16 %v4658, %v4655
    %v4779 = vpack.c.b16 %v4659, %v4656
    %v4780 = vpack.c.b16 %v4663, %v4660
    %v4781 = vpack.c.b16 %v4664, %v4661
    %v4782 = vpack.c.b16 %v4665, %v4662
    %v4783 = vpack.c.b16 %v4669, %v4666
    %v4784 = vpack.c.b16 %v4670, %v4667
    %v4785 = vpack.c.b16 %v4671, %v4668
    %v4786 = vpack.c.b16 %v4675, %v4672
    %v4787 = vpack.c.b16 %v4676, %v4673
    %v4788 = vpack.c.b16 %v4677, %v4674
    %v4789 = vpack.c.b16 %v4681, %v4678
    %v4790 = vpack.c.b16 %v4682, %v4679
    %v4791 = vpack.c.b16 %v4683, %v4680
    %v4792 = vpack.c.b16 %v4687, %v4684
    %v4793 = vpack.c.b16 %v4688, %v4685
    %v4794 = vpack.c.b16 %v4689, %v4686
    %v4795 = vpack.c.b16 %v4693, %v4690
    %v4796 = vpack.c.b16 %v4694, %v4691
    %v4797 = vpack.c.b16 %v4695, %v4692
    %v4798 = vpack.c.b16 %v4699, %v4696
    %v4799 = vpack.c.b16 %v4700, %v4697
    %v4800 = vpack.c.b16 %v4701, %v4698
    %v4801 = vpack.c.b16 %v4705, %v4702
    %v4802 = vpack.c.b16 %v4706, %v4703
    %v4803 = vpack.c.b16 %v4707, %v4704
    %v4804 = vpack.c.b16 %v4711, %v4708
    %v4805 = vpack.c.b16 %v4712, %v4709
    %v4806 = vpack.c.b16 %v4713, %v4710
    %v4807 = vpack.c.b16 %v4717, %v4714
    %v4808 = vpack.c.b16 %v4718, %v4715
    %v4809 = vpack.c.b16 %v4719, %v4716
    %v4810 = vpack.c.b16 %v4723, %v4720
    %v4811 = vpack.c.b16 %v4724, %v4721
    %v4812 = vpack.c.b16 %v4725, %v4722
    %v4813 = vpack.c.b16 %v4729, %v4726
    %v4814 = vpack.c.b16 %v4730, %v4727
    %v4815 = vpack.c.b16 %v4731, %v4728
    %v4816 = vpack.c.b16 %v4735, %v4732
    %v4817 = vpack.c.b16 %v4736, %v4733
    %v4818 = vpack.c.b16 %v4737, %v4734
    %v4819 = vpack.c.b16 %v4741, %v4738
    %v4820 = vpack.c.b16 %v4742, %v4739
    %v4821 = vpack.c.b16 %v4743, %v4740
    %v4822 = vpack.c.b16 %v4747, %v4744
    %v4823 = vpack.c.b16 %v4748, %v4745
    %v4824 = vpack.c.b16 %v4749, %v4746
    %v4825 = vpack.c.b16 %v4753, %v4750
    %v4826 = vpack.c.b16 %v4754, %v4751
    %v4827 = vpack.c.b16 %v4755, %v4752
    %4900 = vmatprep.subr.bf16.mxu0 %v4757
    %4901 = vmatpush1.bf16.msra.mxu0 %v4756
    %4902 = vmatprep.subr.bf16.mxu0 %v4760
    %4903 = vmatpush1.bf16.msra.mxu0 %v4759
    %4904 = vmatprep.subr.bf16.mxu0 %v4763
    %4905 = vmatpush1.bf16.msra.mxu0 %v4762
    %4906 = vmatprep.subr.bf16.mxu0 %v4766
    %4907 = vmatpush1.bf16.msra.mxu0 %v4765
    %4908 = vmatprep.subr.bf16.mxu0 %v4769
    %4909 = vmatpush1.bf16.msra.mxu0 %v4768
    %4910 = vmatprep.subr.bf16.mxu0 %v4772
    %4911 = vmatpush1.bf16.msra.mxu0 %v4771
    %4912 = vmatprep.subr.bf16.mxu0 %v4775
    %4913 = vmatpush1.bf16.msra.mxu0 %v4774
    %4914 = vmatprep.subr.bf16.mxu0 %v4778
    %4915 = vmatpush1.bf16.msra.mxu0 %v4777
    %4916 = vmatprep.subr.bf16.mxu0 %v4781
    %4917 = vmatpush1.bf16.msra.mxu0 %v4780
    %4918 = vmatprep.subr.bf16.mxu0 %v4784
    %4919 = vmatpush1.bf16.msra.mxu0 %v4783
    %4920 = vmatprep.subr.bf16.mxu0 %v4787
    %4921 = vmatpush1.bf16.msra.mxu0 %v4786
    %4922 = vmatprep.subr.bf16.mxu0 %v4790
    %4923 = vmatpush1.bf16.msra.mxu0 %v4789
    %4924 = vmatprep.subr.bf16.mxu0 %v4793
    %4925 = vmatpush1.bf16.msra.mxu0 %v4792
    %4926 = vmatprep.subr.bf16.mxu0 %v4796
    %4927 = vmatpush1.bf16.msra.mxu0 %v4795
    %4928 = vmatprep.subr.bf16.mxu0 %v4799
    %4929 = vmatpush1.bf16.msra.mxu0 %v4798
    %4930 = vmatprep.subr.bf16.mxu0 %v4802
    %4931 = vmatpush1.bf16.msra.mxu0 %v4801
    %4932 = vmatprep.mubr.bf16.mxu0 %v4401
    %4933 = vmatmul.mubr.bf16.gmra.mrb[0].mxu0 %v4400
    %v4934 = vpop.f32.mrb[0].mxu0
    %v4935 = vadd.f32 %v4504, %v4934
    %v4936 = vpop.f32.mrb[0].mxu0
    %v4937 = vadd.f32 %v4508, %v4936
    %v4938 = vpop.f32.mrb[0].mxu0
    %v4939 = vadd.f32 %v4504, %v4938
    %v4940 = vpop.f32.mrb[0].mxu0
    %v4941 = vadd.f32 %v4508, %v4940
    %4942 = vdwg.mxu0
    %4943 = vmatprep.subr.bf16.mxu0 %v4805
    %4944 = vmatpush1.bf16.msra.mxu0 %v4804
    %4945 = vmatprep.subr.bf16.mxu0 %v4808
    %4946 = vmatpush1.bf16.msra.mxu0 %v4807
    %4947 = vmatprep.subr.bf16.mxu0 %v4811
    %4948 = vmatpush1.bf16.msra.mxu0 %v4810
    %4949 = vmatprep.subr.bf16.mxu0 %v4814
    %4950 = vmatpush1.bf16.msra.mxu0 %v4813
    %4951 = vmatprep.subr.bf16.mxu0 %v4817
    %4952 = vmatpush1.bf16.msra.mxu0 %v4816
    %4953 = vmatprep.subr.bf16.mxu0 %v4820
    %4954 = vmatpush1.bf16.msra.mxu0 %v4819
    %4955 = vmatprep.subr.bf16.mxu0 %v4823
    %4956 = vmatpush1.bf16.msra.mxu0 %v4822
    %4957 = vmatprep.subr.bf16.mxu0 %v4826
    %4958 = vmatpush1.bf16.msra.mxu0 %v4825
    %4959 = vmatprep.subr.bf16.mxu0 0
    %4960 = vmatpush1.bf16.msra.mxu0 0
    %4961 = vmatprep.subr.bf16.mxu0 0
    %4962 = vmatpush1.bf16.msra.mxu0 0
    %4963 = vmatprep.subr.bf16.mxu0 0
    %4964 = vmatpush1.bf16.msra.mxu0 0
    %4965 = vmatprep.subr.bf16.mxu0 0
    %4966 = vmatpush1.bf16.msra.mxu0 0
    %4967 = vmatprep.subr.bf16.mxu0 0
    %4968 = vmatpush1.bf16.msra.mxu0 0
    %4969 = vmatprep.subr.bf16.mxu0 0
    %4970 = vmatpush1.bf16.msra.mxu0 0
    %4971 = vmatprep.subr.bf16.mxu0 0
    %4972 = vmatpush1.bf16.msra.mxu0 0
    %4973 = vmatprep.subr.bf16.mxu0 0
    %4974 = vmatpush1.bf16.msra.mxu0 0
    %4975 = vmatprep.mubr.bf16.mxu0 0
    %4976 = vmatmul.mubr.bf16.gmra.mrb[0].mxu0 %v4402
    %v4977 = vpop.f32.mrb[0].mxu0
    %v4978 = vadd.f32 %v4935, %v4977
    %v4979 = vpop.f32.mrb[0].mxu0
    %v4980 = vadd.f32 %v4937, %v4979
    %v4981 = vpop.f32.mrb[0].mxu0
    %v4982 = vadd.f32 %v4939, %v4981
    %v4983 = vpop.f32.mrb[0].mxu0
    %v4984 = vadd.f32 %v4941, %v4983
    %4985 = vdwg.mxu0
    %4986 = vmatprep.subr.bf16.mxu0 0
    %4987 = vmatpush1.bf16.msra.mxu0 %v4758
    %4988 = vmatprep.subr.bf16.mxu0 0
    %4989 = vmatpush1.bf16.msra.mxu0 %v4761
    %4990 = vmatprep.subr.bf16.mxu0 0
    %4991 = vmatpush1.bf16.msra.mxu0 %v4764
    %4992 = vmatprep.subr.bf16.mxu0 0
    %4993 = vmatpush1.bf16.msra.mxu0 %v4767
    %4994 = vmatprep.subr.bf16.mxu0 0
    %4995 = vmatpush1.bf16.msra.mxu0 %v4770
    %4996 = vmatprep.subr.bf16.mxu0 0
    %4997 = vmatpush1.bf16.msra.mxu0 %v4773
    %4998 = vmatprep.subr.bf16.mxu0 0
    %4999 = vmatpush1.bf16.msra.mxu0 %v4776
    %5000 = vmatprep.subr.bf16.mxu0 0
    %5001 = vmatpush1.bf16.msra.mxu0 %v4779
    %5002 = vmatprep.subr.bf16.mxu0 0
    %5003 = vmatpush1.bf16.msra.mxu0 %v4782
    %5004 = vmatprep.subr.bf16.mxu0 0
    %5005 = vmatpush1.bf16.msra.mxu0 %v4785
    %5006 = vmatprep.subr.bf16.mxu0 0
    %5007 = vmatpush1.bf16.msra.mxu0 %v4788
    %5008 = vmatprep.subr.bf16.mxu0 0
    %5009 = vmatpush1.bf16.msra.mxu0 %v4791
    %5010 = vmatprep.subr.bf16.mxu0 0
    %5011 = vmatpush1.bf16.msra.mxu0 %v4794
    %5012 = vmatprep.subr.bf16.mxu0 0
    %5013 = vmatpush1.bf16.msra.mxu0 %v4797
    %5014 = vmatprep.subr.bf16.mxu0 0
    %5015 = vmatpush1.bf16.msra.mxu0 %v4800
    %5016 = vmatprep.subr.bf16.mxu0 0
    %5017 = vmatpush1.bf16.msra.mxu0 %v4803
    %5018 = vmatprep.mubr.bf16.mxu0 %v4401
    %5019 = vmatmul.mubr.bf16.gmra.mrb[0].mxu0 %v4400
    %v5020 = vpop.f32.mrb[0].mxu0
    %v5021 = vadd.f32 %v4512, %v5020
    %v5022 = vpop.f32.mrb[0].mxu0
    %v5023 = vpop.f32.mrb[0].mxu0
    %v5024 = vadd.f32 %v4512, %v5023
    %v5025 = vpop.f32.mrb[0].mxu0
    %5026 = vdwg.mxu0
    %5027 = vmatprep.subr.bf16.mxu0 0
    %5028 = vmatpush1.bf16.msra.mxu0 %v4806
    %5029 = vmatprep.subr.bf16.mxu0 0
    %5030 = vmatpush1.bf16.msra.mxu0 %v4809
    %5031 = vmatprep.subr.bf16.mxu0 0
    %5032 = vmatpush1.bf16.msra.mxu0 %v4812
    %5033 = vmatprep.subr.bf16.mxu0 0
    %5034 = vmatpush1.bf16.msra.mxu0 %v4815
    %5035 = vmatprep.subr.bf16.mxu0 0
    %5036 = vmatpush1.bf16.msra.mxu0 %v4818
    %5037 = vmatprep.subr.bf16.mxu0 0
    %5038 = vmatpush1.bf16.msra.mxu0 %v4821
    %5039 = vmatprep.subr.bf16.mxu0 0
    %5040 = vmatpush1.bf16.msra.mxu0 %v4824
    %5041 = vmatprep.subr.bf16.mxu0 0
    %5042 = vmatpush1.bf16.msra.mxu0 %v4827
    %5043 = vmatprep.subr.bf16.mxu0 0
    %5044 = vmatpush1.bf16.msra.mxu0 0
    %5045 = vmatprep.subr.bf16.mxu0 0
    %5046 = vmatpush1.bf16.msra.mxu0 0
    %5047 = vmatprep.subr.bf16.mxu0 0
    %5048 = vmatpush1.bf16.msra.mxu0 0
    %5049 = vmatprep.subr.bf16.mxu0 0
    %5050 = vmatpush1.bf16.msra.mxu0 0
    %5051 = vmatprep.subr.bf16.mxu0 0
    %5052 = vmatpush1.bf16.msra.mxu0 0
    %5053 = vmatprep.subr.bf16.mxu0 0
    %5054 = vmatpush1.bf16.msra.mxu0 0
    %5055 = vmatprep.subr.bf16.mxu0 0
    %5056 = vmatpush1.bf16.msra.mxu0 0
    %5057 = vmatprep.subr.bf16.mxu0 0
    %5058 = vmatpush1.bf16.msra.mxu0 0
    %5059 = vmatprep.mubr.bf16.mxu0 0
    %5060 = vmatmul.mubr.bf16.gmra.mrb[0].mxu0 %v4402
    %v5061 = vpop.f32.mrb[0].mxu0
    %v5062 = vadd.f32 %v5021, %v5061
    %v5063 = vpop.f32.mrb[0].mxu0
    %v5064 = vpop.f32.mrb[0].mxu0
    %v5065 = vadd.f32 %v5024, %v5064
    %v5066 = vpop.f32.mrb[0].mxu0
    %5067 = vdwg.mxu0
    %v5068 = vtanh.pop %v4978
    %v5069 = vtanh.pop %v4980
    %v5070 = vtanh.pop %v5062
    %v5071 = vtanh.pop %v4982
    %v5072 = vtanh.pop %v4984
    %v5073 = vtanh.pop %v5065
    %v5074 = vpack.c.bf16 %v5071, %v5068
    %v5075 = vpack.c.bf16 %v5072, %v5069
    %v5076 = vpack.c.bf16 %v5073, %v5070
    %v5077 = vld [vmem:[#allocation14] sm:$0xf]
    %v5078 = vld [vmem:[#allocation14 + $0x4] sm:$0xf]
    %v5079 = vld [vmem:[#allocation14 + $0x8] sm:$0xf]
    %v5080 = vld [vmem:[#allocation14 + $0xc] sm:$0xf]
    %v5081 = vld [vmem:[#allocation14 + $0x10] sm:$0xf]
    %v5082 = vld [vmem:[#allocation14 + $0x14] sm:$0xf]
    %v5083 = vld [vmem:[#allocation14 + $0x18] sm:$0xf]
    %v5084 = vld [vmem:[#allocation14 + $0x1c] sm:$0xf]
    %v5085 = vld [vmem:[#allocation14 + $0x20] sm:$0xf]
    %v5086 = vld [vmem:[#allocation14 + $0x24] sm:$0xf]
    %v5087 = vld [vmem:[#allocation14 + $0x28] sm:$0xf]
    %v5088 = vld [vmem:[#allocation14 + $0x2c] sm:$0xf]
    %v5089 = vld [vmem:[#allocation14 + $0x30] sm:$0xf]
    %v5090 = vld [vmem:[#allocation14 + $0x34] sm:$0xf]
    %v5091 = vld [vmem:[#allocation14 + $0x38] sm:$0xf]
    %v5092 = vld [vmem:[#allocation14 + $0x3c] sm:$0xf]
    %v5093 = vld [vmem:[#allocation14 + $0x40] sm:$0xf]
    %v5094 = vld [vmem:[#allocation14 + $0x44] sm:$0xf]
    %v5095 = vld [vmem:[#allocation14 + $0x48] sm:$0xf]
    %v5096 = vld [vmem:[#allocation14 + $0x4c] sm:$0xf]
    %v5097 = vld [vmem:[#allocation14 + $0x50] sm:$0xf]
    %v5098 = vld [vmem:[#allocation14 + $0x54] sm:$0xf]
    %v5099 = vld [vmem:[#allocation14 + $0x58] sm:$0xf]
    %v5100 = vld [vmem:[#allocation14 + $0x5c] sm:$0xf]
    %v5101 = vld [vmem:[#allocation14 + $0x60] sm:$0xf]
    %v5102 = vld [vmem:[#allocation14 + $0x64] sm:$0xf]
    %v5103 = vld [vmem:[#allocation14 + $0x68] sm:$0xf]
    %v5104 = vld [vmem:[#allocation14 + $0x6c] sm:$0xf]
    %v5105 = vld [vmem:[#allocation14 + $0x70] sm:$0xf]
    %v5106 = vld [vmem:[#allocation14 + $0x74] sm:$0xf]
    %v5107 = vld [vmem:[#allocation14 + $0x78] sm:$0xf]
    %v5108 = vld [vmem:[#allocation14 + $0x7c] sm:$0xf]
    %v5109 = vld [vmem:[#allocation14 + $0x80] sm:$0xf]
    %v5110 = vld [vmem:[#allocation14 + $0x84] sm:$0xf]
    %v5111 = vld [vmem:[#allocation14 + $0x88] sm:$0xf]
    %v5112 = vld [vmem:[#allocation14 + $0x8c] sm:$0xf]
    %v5113 = vld [vmem:[#allocation14 + $0x90] sm:$0xf]
    %v5114 = vld [vmem:[#allocation14 + $0x94] sm:$0xf]
    %v5115 = vld [vmem:[#allocation14 + $0x98] sm:$0xf]
    %v5116 = vld [vmem:[#allocation14 + $0x9c] sm:$0xf]
    %v5117 = vld [vmem:[#allocation14 + $0xa0] sm:$0xf]
    %v5118 = vld [vmem:[#allocation14 + $0xa4] sm:$0xf]
    %v5119 = vld [vmem:[#allocation14 + $0xa8] sm:$0xf]
    %v5120 = vld [vmem:[#allocation14 + $0xac] sm:$0xf]
    %v5121 = vld [vmem:[#allocation14 + $0xb0] sm:$0xf]
    %v5122 = vld [vmem:[#allocation14 + $0xb4] sm:$0xf]
    %v5123 = vld [vmem:[#allocation14 + $0xb8] sm:$0xf]
    %v5124 = vld [vmem:[#allocation14 + $0xbc] sm:$0xf]
    %v5125 = vld [vmem:[#allocation16] sm:$0x1]
    %v5127 = vlaneseq
    %v5128 = vshrl.u32 %v5127, 7
    %v5129 = vsub.s32 0, %v5128
    %v5130 = vrot.slane %v5125, %v5129
    %v5180 = vunpack.c.l.b16 %v5077
    %v5181 = vunpack.c.l.b16 %v5078
    %v5182 = vunpack.c.l.b16 %v5079
    %v5183 = vunpack.c.l.b16 %v5080
    %v5184 = vunpack.c.l.b16 %v5081
    %v5185 = vunpack.c.l.b16 %v5082
    %v5186 = vunpack.c.l.b16 %v5083
    %v5187 = vunpack.c.l.b16 %v5084
    %v5188 = vunpack.c.l.b16 %v5085
    %v5189 = vunpack.c.l.b16 %v5086
    %v5190 = vunpack.c.l.b16 %v5087
    %v5191 = vunpack.c.l.b16 %v5088
    %v5192 = vunpack.c.l.b16 %v5089
    %v5193 = vunpack.c.l.b16 %v5090
    %v5194 = vunpack.c.l.b16 %v5091
    %v5195 = vunpack.c.l.b16 %v5092
    %v5196 = vunpack.c.l.b16 %v5093
    %v5197 = vunpack.c.l.b16 %v5094
    %v5198 = vunpack.c.l.b16 %v5095
    %v5199 = vunpack.c.l.b16 %v5096
    %v5200 = vunpack.c.l.b16 %v5097
    %v5201 = vunpack.c.l.b16 %v5098
    %v5202 = vunpack.c.l.b16 %v5099
    %v5203 = vunpack.c.l.b16 %v5100
    %v5204 = vunpack.c.l.b16 %v5101
    %v5205 = vunpack.c.l.b16 %v5102
    %v5206 = vunpack.c.l.b16 %v5103
    %v5207 = vunpack.c.l.b16 %v5104
    %v5208 = vunpack.c.l.b16 %v5105
    %v5209 = vunpack.c.l.b16 %v5106
    %v5210 = vunpack.c.l.b16 %v5107
    %v5211 = vunpack.c.l.b16 %v5108
    %v5212 = vunpack.c.l.b16 %v5109
    %v5213 = vunpack.c.l.b16 %v5110
    %v5214 = vunpack.c.l.b16 %v5111
    %v5215 = vunpack.c.l.b16 %v5112
    %v5216 = vunpack.c.l.b16 %v5113
    %v5217 = vunpack.c.l.b16 %v5114
    %v5218 = vunpack.c.l.b16 %v5115
    %v5219 = vunpack.c.l.b16 %v5116
    %v5220 = vunpack.c.l.b16 %v5117
    %v5221 = vunpack.c.l.b16 %v5118
    %v5222 = vunpack.c.l.b16 %v5119
    %v5223 = vunpack.c.l.b16 %v5120
    %v5224 = vunpack.c.l.b16 %v5121
    %v5225 = vunpack.c.l.b16 %v5122
    %v5226 = vunpack.c.l.b16 %v5123
    %v5227 = vunpack.c.l.b16 %v5124
    %v5228 = vpack.c.b16 %v5181, %v5180
    %v5229 = vpack.c.b16 %v5183, %v5182
    %v5230 = vpack.c.b16 %v5185, %v5184
    %v5231 = vpack.c.b16 %v5187, %v5186
    %v5232 = vpack.c.b16 %v5189, %v5188
    %v5233 = vpack.c.b16 %v5191, %v5190
    %v5234 = vpack.c.b16 %v5193, %v5192
    %v5235 = vpack.c.b16 %v5195, %v5194
    %v5236 = vpack.c.b16 %v5197, %v5196
    %v5237 = vpack.c.b16 %v5199, %v5198
    %v5238 = vpack.c.b16 %v5201, %v5200
    %v5239 = vpack.c.b16 %v5203, %v5202
    %v5240 = vpack.c.b16 %v5205, %v5204
    %v5241 = vpack.c.b16 %v5207, %v5206
    %v5242 = vpack.c.b16 %v5209, %v5208
    %v5243 = vpack.c.b16 %v5211, %v5210
    %v5244 = vpack.c.b16 %v5213, %v5212
    %v5245 = vpack.c.b16 %v5215, %v5214
    %v5246 = vpack.c.b16 %v5217, %v5216
    %v5247 = vpack.c.b16 %v5219, %v5218
    %v5248 = vpack.c.b16 %v5221, %v5220
    %v5249 = vpack.c.b16 %v5223, %v5222
    %v5250 = vpack.c.b16 %v5225, %v5224
    %v5251 = vpack.c.b16 %v5227, %v5226
    %5276 = vmatprep.subr.bf16.mxu0 0
    %5277 = vmatpush1.bf16.msra.mxu0 %v5228
    %5278 = vmatprep.subr.bf16.mxu0 0
    %5279 = vmatpush1.bf16.msra.mxu0 %v5229
    %5280 = vmatprep.subr.bf16.mxu0 0
    %5281 = vmatpush1.bf16.msra.mxu0 %v5230
    %5282 = vmatprep.subr.bf16.mxu0 0
    %5283 = vmatpush1.bf16.msra.mxu0 %v5231
    %5284 = vmatprep.subr.bf16.mxu0 0
    %5285 = vmatpush1.bf16.msra.mxu0 %v5232
    %5286 = vmatprep.subr.bf16.mxu0 0
    %5287 = vmatpush1.bf16.msra.mxu0 %v5233
    %5288 = vmatprep.subr.bf16.mxu0 0
    %5289 = vmatpush1.bf16.msra.mxu0 %v5234
    %5290 = vmatprep.subr.bf16.mxu0 0
    %5291 = vmatpush1.bf16.msra.mxu0 %v5235
    %5292 = vmatprep.subr.bf16.mxu0 0
    %5293 = vmatpush1.bf16.msra.mxu0 %v5236
    %5294 = vmatprep.subr.bf16.mxu0 0
    %5295 = vmatpush1.bf16.msra.mxu0 %v5237
    %5296 = vmatprep.subr.bf16.mxu0 0
    %5297 = vmatpush1.bf16.msra.mxu0 %v5238
    %5298 = vmatprep.subr.bf16.mxu0 0
    %5299 = vmatpush1.bf16.msra.mxu0 %v5239
    %5300 = vmatprep.subr.bf16.mxu0 0
    %5301 = vmatpush1.bf16.msra.mxu0 %v5240
    %5302 = vmatprep.subr.bf16.mxu0 0
    %5303 = vmatpush1.bf16.msra.mxu0 %v5241
    %5304 = vmatprep.subr.bf16.mxu0 0
    %5305 = vmatpush1.bf16.msra.mxu0 %v5242
    %5306 = vmatprep.subr.bf16.mxu0 0
    %5307 = vmatpush1.bf16.msra.mxu0 %v5243
    %5308 = vmatprep.mubr.bf16.mxu0 %v5075
    %5309 = vmatmul.mubr.bf16.gmra.mrb[0].mxu0 %v5074
    %v5310 = vpop.f32.mrb[0].mxu0
    %v5311 = vadd.f32 %v5130, %v5310
    %v5312 = vpop.f32.mrb[0].mxu0
    %v5313 = vpop.f32.mrb[0].mxu0
    %v5314 = vadd.f32 %v5130, %v5313
    %v5315 = vpop.f32.mrb[0].mxu0
    %5316 = vdwg.mxu0
    %5317 = vmatprep.subr.bf16.mxu0 0
    %5318 = vmatpush1.bf16.msra.mxu0 %v5244
    %5319 = vmatprep.subr.bf16.mxu0 0
    %5320 = vmatpush1.bf16.msra.mxu0 %v5245
    %5321 = vmatprep.subr.bf16.mxu0 0
    %5322 = vmatpush1.bf16.msra.mxu0 %v5246
    %5323 = vmatprep.subr.bf16.mxu0 0
    %5324 = vmatpush1.bf16.msra.mxu0 %v5247
    %5325 = vmatprep.subr.bf16.mxu0 0
    %5326 = vmatpush1.bf16.msra.mxu0 %v5248
    %5327 = vmatprep.subr.bf16.mxu0 0
    %5328 = vmatpush1.bf16.msra.mxu0 %v5249
    %5329 = vmatprep.subr.bf16.mxu0 0
    %5330 = vmatpush1.bf16.msra.mxu0 %v5250
    %5331 = vmatprep.subr.bf16.mxu0 0
    %5332 = vmatpush1.bf16.msra.mxu0 %v5251
    %5333 = vmatprep.subr.bf16.mxu0 0
    %5334 = vmatpush1.bf16.msra.mxu0 0
    %5335 = vmatprep.subr.bf16.mxu0 0
    %5336 = vmatpush1.bf16.msra.mxu0 0
    %5337 = vmatprep.subr.bf16.mxu0 0
    %5338 = vmatpush1.bf16.msra.mxu0 0
    %5339 = vmatprep.subr.bf16.mxu0 0
    %5340 = vmatpush1.bf16.msra.mxu0 0
    %5341 = vmatprep.subr.bf16.mxu0 0
    %5342 = vmatpush1.bf16.msra.mxu0 0
    %5343 = vmatprep.subr.bf16.mxu0 0
    %5344 = vmatpush1.bf16.msra.mxu0 0
    %5345 = vmatprep.subr.bf16.mxu0 0
    %5346 = vmatpush1.bf16.msra.mxu0 0
    %5347 = vmatprep.subr.bf16.mxu0 0
    %5348 = vmatpush1.bf16.msra.mxu0 0
    %5349 = vmatprep.mubr.bf16.mxu0 0
    %5350 = vmatmul.mubr.bf16.gmra.mrb[0].mxu0 %v5076
    %v5351 = vpop.f32.mrb[0].mxu0
    %v5352 = vadd.f32 %v5311, %v5351
    %v5353 = vpop.f32.mrb[0].mxu0
    %v5354 = vpop.f32.mrb[0].mxu0
    %v5355 = vadd.f32 %v5314, %v5354
    %v5356 = vpop.f32.mrb[0].mxu0
    %5357 = vdwg.mxu0
    %v5361 = vcombine.low %v5074, %v5075
    %v5362 = vcombine.high %v5074, %v5075
    %v5363 = vcombine.high %v5076, %v5076
    %v5365 = vunpack.c.l.s4 1966171168
    %v5366 = vunpack.c.0.s8 %v5365
    %v5367 = vlaneseq
    %v5368 = vshrl.u32 %v5367, 7
    %v5369 = vsub.s32 %v5366, %v5368
    %v5370 = vrot.slane %v5361, %v5369
    %v5372 = vunpack.c.l.s4 1966171168
    %v5373 = vunpack.c.0.s8 %v5372
    %v5374 = vlaneseq
    %v5375 = vshrl.u32 %v5374, 7
    %v5376 = vsub.s32 %v5373, %v5375
    %v5377 = vrot.slane %v5362, %v5376
    %v5379 = vunpack.c.l.s4 1966171168
    %v5380 = vunpack.c.0.s8 %v5379
    %v5381 = vlaneseq
    %v5382 = vshrl.u32 %v5381, 7
    %v5383 = vsub.s32 %v5380, %v5382
    %v5384 = vrot.slane %v5076, %v5383
    %v5386 = vunpack.c.l.s4 1966171168
    %v5387 = vunpack.c.0.s8 %v5386
    %v5388 = vlaneseq
    %v5389 = vshrl.u32 %v5388, 7
    %v5390 = vsub.s32 %v5387, %v5389
    %v5391 = vrot.slane %v5363, %v5390
    %v5392 = vcombine.low %v5370, %v5384
    %v5393 = vcombine.high %v5370, %v5384
    %v5394 = vcombine.low %v5377, %v5391
    %v5395 = vcombine.high %v5377, %v5391
    %v5397 = vunpack.c.l.s4 1966171168
    %v5398 = vunpack.c.0.s8 %v5397
    %v5399 = vlaneseq
    %v5400 = vshrl.u32 %v5399, 7
    %v5401 = vsub.s32 %v5398, %v5400
    %v5402 = vrot.slane %v5392, %v5401
    %v5404 = vunpack.c.l.s4 1966171168
    %v5405 = vunpack.c.0.s8 %v5404
    %v5406 = vlaneseq
    %v5407 = vshrl.u32 %v5406, 7
    %v5408 = vsub.s32 %v5405, %v5407
    %v5409 = vrot.slane %v5394, %v5408
    %v5411 = vunpack.c.l.s4 1966171168
    %v5412 = vunpack.c.0.s8 %v5411
    %v5413 = vlaneseq
    %v5414 = vshrl.u32 %v5413, 7
    %v5415 = vsub.s32 %v5412, %v5414
    %v5416 = vrot.slane %v5393, %v5415
    %v5418 = vunpack.c.l.s4 1966171168
    %v5419 = vunpack.c.0.s8 %v5418
    %v5420 = vlaneseq
    %v5421 = vshrl.u32 %v5420, 7
    %v5422 = vsub.s32 %v5419, %v5421
    %v5423 = vrot.slane %v5395, %v5422
    %v5424 = vcombine.high %v5402, %v5402
    %v5425 = vcombine.high %v5409, %v5409
    %v5426 = vcombine.high %v5416, %v5416
    %v5427 = vcombine.high %v5423, %v5423
    %5436 = vst [vmem:[#allocation18] sm:$0x7] %v5402
    %5437 = vst [vmem:[#allocation18 + $0x3] sm:$0x7] %v5416
    %5438 = vst [vmem:[#allocation18 + $0x6] sm:$0x7] %v5424
    %5439 = vst [vmem:[#allocation18 + $0x9] sm:$0x7] %v5426
    %5440 = vst [vmem:[#allocation18 + $0xc] sm:$0x7] %v5409
    %5441 = vst [vmem:[#allocation18 + $0xf] sm:$0x7] %v5423
    %5442 = vst [vmem:[#allocation18 + $0x12] sm:$0x7] %v5425
    %5443 = vst [vmem:[#allocation18 + $0x15] sm:$0x7] %v5427
    %5444 = vst [vmem:[#allocation17] sm:$0xff] %v5352
    %5445 = vst [vmem:[#allocation17 + $0x8] sm:$0xff] %v5355
    // Predicated region
    $region74: #{tpu_custom_call.1} parent=1 // pred_check
      _
    $region75: #{tpu_custom_call.1} parent=1 // pred_check_branch
      %5447 = sbr.rel (0) target = $region77
    $region76: #{tpu_custom_call.1} parent=1 // pred_region
      %s5449 = ssub.s32 256, 32
      %5450 = vsyncadd [#allocation4], %s5449
      %s5451 = sshll.u32 [#allocation17], 4
      %s5452 = int_to_ptr.vmem [resolvable:$true] %s5451
      %5457 = dma.vmem_to_hbm [thread:$0]  %s5452, 32, %s9, [#allocation4], 32, 32, 2
    $region77: #{tpu_custom_call.1} parent=1 // pred_fallthru
      _
    // Predicated region
    $region78: #{tpu_custom_call.1} parent=1 // pred_check
      _
    $region79: #{tpu_custom_call.1} parent=1 // pred_check_branch
      %5459 = sbr.rel (0) target = $region81
    $region80: #{tpu_custom_call.1} parent=1 // pred_region
      %s5461 = ssub.s32 384, 48
      %5462 = vsyncadd [#allocation19], %s5461
      %s5463 = sshll.u32 [#allocation18], 4
      %s5464 = int_to_ptr.vmem [resolvable:$true] %s5463
      %5469 = dma.vmem_to_hbm [thread:$0]  %s5464, 48, %s10, [#allocation19], 48, 48, 3
    $region81: #{tpu_custom_call.1} parent=1 // pred_fallthru
      _
    // Predicated region
    $region82: #{tpu_custom_call.1} parent=1 // pred_check
      _
    $region83: #{tpu_custom_call.1} parent=1 // pred_check_branch
      %5471 = sbr.rel (0) target = $region85
    $region84: #{tpu_custom_call.1} parent=1 // pred_region
      %5472 = dma.done [#allocation4], 256
    $region85: #{tpu_custom_call.1} parent=1 // pred_fallthru
      _
    // Predicated region
    $region86: #{tpu_custom_call.1} parent=1 // pred_check
      _
    $region87: #{tpu_custom_call.1} parent=1 // pred_check_branch
      %5474 = sbr.rel (0) target = $region89
    $region88: #{tpu_custom_call.1} parent=1 // pred_region
      %5475 = dma.done [#allocation19], 384
    $region89: #{tpu_custom_call.1} parent=1 // pred_fallthru
      _
    %5476 = vsyncpa [#allocation3], 1
    %5477 = vsyncpa [#allocation6], 1
    %5478 = vsyncpa [#allocation9], 1
    %5479 = vsyncpa [#allocation12], 1
    %5480 = vsyncpa [#allocation15], 1
    %5481 = vsyncpa [#allocation4], 1
    %5482 = vsyncpa [#allocation19], 1

</llo_original>
